<compile_context>
chip_gen: v7x
topology: tpu7x:2x2x1
jax: 0.10.0
libtpu: 0.0.40
codegen_flags: <defaults>
</compile_context>

<pallas_src>
import functools

import jax
import jax.numpy as jnp
import numpy as np
from jax import lax
from jax.experimental import pallas as pl
from jax.experimental.pallas import tpu as pltpu

EPS = 1e-5


def _vmem_limit_bytes():
    """~3/4 of physical VMEM, capped at 96 MiB (96 MiB on v5e/v6e, 48 MiB on v7x)."""
    try:
        cap = pltpu.get_tpu_info().vmem_capacity_bytes
    except Exception:
        cap = 64 * 1024 * 1024
    return int(min(cap * 3 // 4, 96 * 1024 * 1024))


def _row_tiling(rows, target=512):
    """Return (block_rows, padded_rows) for tiling the flattened N*H*W dim.

    Prefers the largest multiple-of-8 divisor of `rows` that is <= target and
    leaves a grid of >= 2 steps (pipelining + even split across 2 TCs on v7x).
    If no friendly divisor exists and rows > target, pad up to a tile multiple
    (the padded tail is masked inside the kernel).
    """
    cap = min(target, max(8, rows // 2))
    start = cap - cap % 8
    for r in range(start, 7, -8):
        if rows % r == 0:
            return r, rows
    if rows <= target:
        return rows, rows                      # single full-extent block
    padded = ((rows + target - 1) // target) * target
    return target, padded


# ---------------------------------------------------------------------------
# Stage 1: BN1 (precomputed scale/shift) + ReLU + 1x1 conv, row-tiled.
# Also emits per-tile sum / sum-of-squares of the conv1 output so BN2 batch
# statistics can be finalized in the wrapper without another pass over y1.
# ---------------------------------------------------------------------------
def _stage1_kernel(x_ref, s1_ref, t1_ref, w1_ref, y1_ref, stats_ref,
                   *, valid_rows, block_rows):
    # x_ref: (R, Cin)   s1/t1: (1, Cin)   w1: (Cin, C4)
    # y1_ref: (R, C4)   stats_ref: (1, 2, C4)  [row0 = sum, row1 = sum of sq]
    x = x_ref[...]
    y = jnp.maximum(x * s1_ref[...] + t1_ref[...], 0.0)                # BN1+ReLU
    y1 = jnp.dot(y, w1_ref[...], preferred_element_type=jnp.float32)   # 1x1 conv

    if valid_rows is not None:
        # Padded tail rows: zero them so the BN2 partial stats stay exact
        # (and the padded y1 rows, sliced off in the wrapper, are harmless).
        gid = (pl.program_id(0) * block_rows
               + lax.broadcasted_iota(jnp.int32, y1.shape, 0))
        y1 = jnp.where(gid < valid_rows, y1, 0.0)

    y1_ref[...] = y1

    # Single-pass partial statistics for BN2 (finalized in the wrapper).
    stats_ref[:, 0:1, :] = jnp.sum(y1, axis=0, keepdims=True)[None]
    stats_ref[:, 1:2, :] = jnp.sum(y1 * y1, axis=0, keepdims=True)[None]


# ---------------------------------------------------------------------------
# Stage 2: BN2 (precomputed scale/shift) + ReLU + 3x3 conv (pad=1), per image.
# Zero halo lives in a VMEM scratch; the conv is a single im2col contraction
# (H*W, 9*C4) @ (9*C4, k); the result is stored lane-dense as (k, H*W).
# ---------------------------------------------------------------------------
def _stage2_kernel(y1_ref, s2_ref, t2_ref, w2f_ref, out_ref, ypad_ref, patch_ref):
    # y1_ref:  (1, H, W, C4)   s2/t2: (1, C4)   w2f: (9*C4, k)
    # out_ref: (1, k, H*W)     -- lane-dense: H*W on the lane axis
    # ypad_ref:  VMEM (H+2, W+2, C4)  zero-halo scratch
    # patch_ref: VMEM (H*W, 9*C4)     im2col scratch
    _, H, W, C4 = y1_ref.shape

    # Zero only the halo border.  Done every grid step (cheap slice stores) so
    # it stays correct when the grid axis is split across TensorCores.
    ypad_ref[0:1, :, :] = jnp.zeros((1, W + 2, C4), jnp.float32)
    ypad_ref[H + 1:H + 2, :, :] = jnp.zeros((1, W + 2, C4), jnp.float32)
    ypad_ref[:, 0:1, :] = jnp.zeros((H + 2, 1, C4), jnp.float32)
    ypad_ref[:, W + 1:W + 2, :] = jnp.zeros((H + 2, 1, C4), jnp.float32)

    # BN2 + ReLU, written straight into the interior of the padded scratch.
    y2 = jnp.maximum(y1_ref[0] * s2_ref[...] + t2_ref[...], 0.0)
    ypad_ref[1:H + 1, 1:W + 1, :] = y2

    # im2col: hoist the 3 dx-shifted (strided) slabs out of the dy loop; the
    # 9 dy row-slices of those slabs are contiguous and land in the patch
    # scratch at channel offset (dy*3+dx)*C4.
    for dx in range(3):
        slab = ypad_ref[:, dx:dx + W, :]                      # (H+2, W, C4)
        for dy in range(3):
            p = dy * 3 + dx
            patch_ref[:, p * C4:(p + 1) * C4] = (
                slab[dy:dy + H].reshape(H * W, C4))

    # One deep-K MXU contraction, then a lane-dense (k, H*W) store.
    # TODO(synk): widen the MXU N dim (k is narrow) by fusing taps into a 3k
    # RHS + pltpu.roll recombine once the conv is compute-bound.
    acc = jnp.dot(patch_ref[...], w2f_ref[...],
                  preferred_element_type=jnp.float32)          # (H*W, k)
    out_ref[0] = acc.T                                         # (k, H*W)


def bottleneck_block_dense(x_nchw, params):
    """x_nchw: (N, Cin, H, W) f32 -> (N, Cin + k, H, W) f32."""
    g1, b1, w1t, g2, b2, w2f = params
    N, Cin, H, W = x_nchw.shape
    C4 = w1t.shape[1]
    k = w2f.shape[1]
    vmem_limit = _vmem_limit_bytes()

    x_nhwc = jnp.transpose(x_nchw, (0, 2, 3, 1))               # NCHW -> NHWC
    rows = N * H * W
    x2 = x_nhwc.reshape(rows, Cin)
    cnt = jnp.float32(rows)

    # ---- BN1 batch stats: single traversal of x (sum + sum of squares) ----
    s1 = jnp.sum(x2, axis=0, keepdims=True)
    sq1 = jnp.sum(x2 * x2, axis=0, keepdims=True)
    mean1 = s1 / cnt
    var1 = sq1 / cnt - mean1 * mean1                           # biased variance
    scale1 = g1 * lax.rsqrt(var1 + EPS)
    shift1 = b1 - mean1 * scale1

    # ---- Stage 1: tiled over rows of the flattened spatial dim ----
    R, padded = _row_tiling(rows, target=512)
    G = padded // R
    x2p = x2 if padded == rows else jnp.pad(x2, ((0, padded - rows), (0, 0)))
    kern1 = functools.partial(
        _stage1_kernel,
        valid_rows=None if padded == rows else rows,
        block_rows=R)

    y1_flat, stats = pl.pallas_call(
        kern1,
        out_shape=(
            jax.ShapeDtypeStruct((padded, C4), jnp.float32),
            jax.ShapeDtypeStruct((G, 2, C4), jnp.float32),
        ),
        grid=(G,),
        in_specs=[
            pl.BlockSpec((R, Cin), lambda i: (i, 0)),
            pl.BlockSpec((1, Cin), lambda i: (0, 0)),
            pl.BlockSpec((1, Cin), lambda i: (0, 0)),
            pl.BlockSpec((Cin, C4), lambda i: (0, 0)),
        ],
        out_specs=(
            pl.BlockSpec((R, C4), lambda i: (i, 0)),
            pl.BlockSpec((1, 2, C4), lambda i: (i, 0, 0)),
        ),
        compiler_params=pltpu.CompilerParams(
            dimension_semantics=("parallel",),
            vmem_limit_bytes=vmem_limit),
    )(x2p, scale1, shift1, w1t)

    # ---- Finalize BN2 batch stats from per-tile partial sums ----
    tot = jnp.sum(stats, axis=0)                               # (2, C4)
    mean2 = (tot[0] / cnt)[None, :]                            # (1, C4)
    var2 = (tot[1] / cnt)[None, :] - mean2 * mean2             # biased variance
    scale2 = g2 * lax.rsqrt(var2 + EPS)
    shift2 = b2 - mean2 * scale2

    y1 = y1_flat[:rows].reshape(N, H, W, C4)

    # ---- Stage 2: per-image 3x3 conv, lane-dense (N, k, H*W) output ----
    conv_out = pl.pallas_call(
        _stage2_kernel,
        out_shape=jax.ShapeDtypeStruct((N, k, H * W), jnp.float32),
        grid=(N,),
        in_specs=[
            pl.BlockSpec((1, H, W, C4), lambda n: (n, 0, 0, 0)),
            pl.BlockSpec((1, C4), lambda n: (0, 0)),
            pl.BlockSpec((1, C4), lambda n: (0, 0)),
            pl.BlockSpec((9 * C4, k), lambda n: (0, 0)),
        ],
        out_specs=pl.BlockSpec((1, k, H * W), lambda n: (n, 0, 0)),
        scratch_shapes=[
            pltpu.VMEM((H + 2, W + 2, C4), jnp.float32),       # halo scratch
            pltpu.VMEM((H * W, 9 * C4), jnp.float32),          # im2col scratch
        ],
        compiler_params=pltpu.CompilerParams(
            dimension_semantics=("parallel",),
            vmem_limit_bytes=vmem_limit),
    )(y1, scale2, shift2, w2f)

    # Free reshape to NCHW (no transpose needed) + channel concat by XLA.
    out_new = conv_out.reshape(N, k, H, W)
    return jnp.concatenate([x_nchw, out_new], axis=1)


def init_params(key, in_features, k):
    C4 = 4 * k
    k1, k2 = jax.random.split(key)
    # BN params: PyTorch default init (gamma=1, beta=0).
    g1 = jnp.ones((1, in_features), jnp.float32)
    b1 = jnp.zeros((1, in_features), jnp.float32)
    g2 = jnp.ones((1, C4), jnp.float32)
    b2 = jnp.zeros((1, C4), jnp.float32)
    # Conv weights (deterministic synthetic init), PyTorch layouts.
    w1 = jax.random.normal(k1, (C4, in_features, 1, 1), jnp.float32) * 0.1
    w2 = jax.random.normal(k2, (k, C4, 3, 3), jnp.float32) * 0.1
    # Kernel-friendly layouts.
    w1t = jnp.transpose(w1.reshape(C4, in_features), (1, 0))        # (Cin, 4k)
    # (o, c, dy, dx) -> (dy, dx, c, o) -> ((dy*3+dx)*C4 + c, o): im2col order.
    w2f = jnp.transpose(w2, (2, 3, 1, 0)).reshape(9 * C4, k)
    return (g1, b1, w1t, g2, b2, w2f), (w1, w2)


def reference_forward(x, w1, w2):
    """Pure-JAX (lax.conv) reference of the PyTorch forward, NCHW."""
    def bn(z):
        m = jnp.mean(z, axis=(0, 2, 3), keepdims=True)
        v = jnp.mean((z - m) ** 2, axis=(0, 2, 3), keepdims=True)
        return (z - m) * lax.rsqrt(v + EPS)  # gamma=1, beta=0

    dn = ('NCHW', 'OIHW', 'NCHW')
    y = jnp.maximum(bn(x), 0.0)
    y = lax.conv_general_dilated(y, w1, (1, 1), 'VALID', dimension_numbers=dn)
    y = jnp.maximum(bn(y), 0.0)
    y = lax.conv_general_dilated(y, w2, (1, 1), ((1, 1), (1, 1)),
                                 dimension_numbers=dn)
    return jnp.concatenate([x, y], axis=1)


if __name__ == "__main__":
    N, in_features, H, W = 2, 4, 16, 16
    k = 4

    key = jax.random.PRNGKey(0)
    kx, kp = jax.random.split(key)
    x = jax.random.normal(kx, (N, in_features, H, W), jnp.float32)

    params, (w1, w2) = init_params(kp, in_features, k)

    fwd = jax.jit(bottleneck_block_dense)
    out = jax.block_until_ready(fwd(x, params))
    assert out.shape == (N, in_features + k, H, W), out.shape

    ref = jax.block_until_ready(reference_forward(x, w1, w2))
    np.testing.assert_allclose(np.asarray(out), np.asarray(ref),
                               rtol=1e-4, atol=1e-4)

    print("KERNEL_OK")
</pallas_src>

<mosaic_0001>
module attributes {stable_mosaic.version = 11 : i64} {
  func.func @_stage1_kernel(%arg0: i32, %arg1: memref<256x4xf32, #tpu.memory_space<vmem>>, %arg2: memref<1x4xf32, #tpu.memory_space<vmem>>, %arg3: memref<1x4xf32, #tpu.memory_space<vmem>>, %arg4: memref<4x16xf32, #tpu.memory_space<vmem>>, %arg5: memref<256x16xf32, #tpu.memory_space<vmem>>, %arg6: memref<1x2x16xf32, #tpu.memory_space<vmem>>) attributes {dimension_semantics = [#tpu.dimension_semantics<parallel>], iteration_bounds = array<i64: 2>, scalar_prefetch = 0 : i64, scratch_operands = 0 : i64, tpu.core_type = #tpu.core_type<tc>, window_params = [{transform_indices = @transform_0, window_bounds = array<i64: 256, 4>}, {pipeline_mode = #tpu.pipeline_mode<synchronous>, transform_indices = @transform_1, window_bounds = array<i64: 1, 4>}, {pipeline_mode = #tpu.pipeline_mode<synchronous>, transform_indices = @transform_2, window_bounds = array<i64: 1, 4>}, {pipeline_mode = #tpu.pipeline_mode<synchronous>, transform_indices = @transform_3, window_bounds = array<i64: 4, 16>}, {transform_indices = @transform_4, window_bounds = array<i64: 256, 16>}, {transform_indices = @transform_5, window_bounds = array<i64: 1, 2, 16>}]} {
    %c0 = arith.constant 0 : index
    %c0_0 = arith.constant 0 : index
    %0 = vector.load %arg1[%c0, %c0_0] : memref<256x4xf32, #tpu.memory_space<vmem>>, vector<256x4xf32>
    %c0_1 = arith.constant 0 : index
    %c0_2 = arith.constant 0 : index
    %1 = vector.load %arg2[%c0_1, %c0_2] : memref<1x4xf32, #tpu.memory_space<vmem>>, vector<1x4xf32>
    %2 = vector.broadcast %1 : vector<1x4xf32> to vector<256x4xf32>
    %3 = arith.mulf %0, %2 : vector<256x4xf32>
    %c0_3 = arith.constant 0 : index
    %c0_4 = arith.constant 0 : index
    %4 = vector.load %arg3[%c0_3, %c0_4] : memref<1x4xf32, #tpu.memory_space<vmem>>, vector<1x4xf32>
    %5 = vector.broadcast %4 : vector<1x4xf32> to vector<256x4xf32>
    %6 = arith.addf %3, %5 : vector<256x4xf32>
    %cst = arith.constant 0.000000e+00 : f32
    %7 = vector.broadcast %cst : f32 to vector<256x4xf32>
    %8 = arith.maximumf %6, %7 : vector<256x4xf32>
    %c0_5 = arith.constant 0 : index
    %c0_6 = arith.constant 0 : index
    %9 = vector.load %arg4[%c0_5, %c0_6] : memref<4x16xf32, #tpu.memory_space<vmem>>, vector<4x16xf32>
    %cst_7 = arith.constant dense<0.000000e+00> : vector<256x16xf32>
    %10 = tpu.matmul %8, %9, %cst_7 {dimension_numbers = #tpu.dot_dimension_numbers<[1], [0], [0], [1], [0, 0, 1, 1], [], []>} : vector<256x4xf32>, vector<4x16xf32>, vector<256x16xf32> -> vector<256x16xf32>
    %c0_8 = arith.constant 0 : index
    %c0_9 = arith.constant 0 : index
    %11 = vector.load %arg5[%c0_8, %c0_9] : memref<256x16xf32, #tpu.memory_space<vmem>>, vector<256x16xf32>
    tpu.vector_store %arg5[%c0_8, %c0_9], %10 {strides = array<i32>} : memref<256x16xf32, #tpu.memory_space<vmem>>, vector<256x16xf32>,
    %cst_10 = arith.constant dense<0.000000e+00> : vector<16xf32>
    %12 = vector.multi_reduction <add>, %10, %cst_10 [0] : vector<256x16xf32> to vector<16xf32>
    %13 = vector.shape_cast %12 : vector<16xf32> to vector<1x16xf32>
    %14 = vector.shape_cast %13 : vector<1x16xf32> to vector<1x1x16xf32>
    %c0_11 = arith.constant 0 : index
    %c0_12 = arith.constant 0 : index
    %c0_13 = arith.constant 0 : index
    %15 = vector.load %arg6[%c0_11, %c0_12, %c0_13] : memref<1x2x16xf32, #tpu.memory_space<vmem>>, vector<1x1x16xf32>
    tpu.vector_store %arg6[%c0_11, %c0_12, %c0_13], %14 {strides = array<i32>} : memref<1x2x16xf32, #tpu.memory_space<vmem>>, vector<1x1x16xf32>,
    %16 = arith.mulf %10, %10 : vector<256x16xf32>
    %cst_14 = arith.constant dense<0.000000e+00> : vector<16xf32>
    %17 = vector.multi_reduction <add>, %16, %cst_14 [0] : vector<256x16xf32> to vector<16xf32>
    %18 = vector.shape_cast %17 : vector<16xf32> to vector<1x16xf32>
    %19 = vector.shape_cast %18 : vector<1x16xf32> to vector<1x1x16xf32>
    %c0_15 = arith.constant 0 : index
    %c1 = arith.constant 1 : index
    %c0_16 = arith.constant 0 : index
    %20 = vector.load %arg6[%c0_15, %c1, %c0_16] : memref<1x2x16xf32, #tpu.memory_space<vmem>>, vector<1x1x16xf32>
    tpu.vector_store %arg6[%c0_15, %c1, %c0_16], %19 {strides = array<i32>} : memref<1x2x16xf32, #tpu.memory_space<vmem>>, vector<1x1x16xf32>,
    return
  }
  func.func @transform_0(%arg0: i32) -> (i32, i32) {
    %c0_i32 = arith.constant 0 : i32
    %c0_i32_0 = arith.constant 0 : i32
    return %arg0, %c0_i32 : i32, i32
  }
  func.func @transform_1(%arg0: i32) -> (i32, i32) {
    %c0_i32 = arith.constant 0 : i32
    %c0_i32_0 = arith.constant 0 : i32
    %c0_i32_1 = arith.constant 0 : i32
    return %c0_i32, %c0_i32_0 : i32, i32
  }
  func.func @transform_2(%arg0: i32) -> (i32, i32) {
    %c0_i32 = arith.constant 0 : i32
    %c0_i32_0 = arith.constant 0 : i32
    %c0_i32_1 = arith.constant 0 : i32
    return %c0_i32, %c0_i32_0 : i32, i32
  }
  func.func @transform_3(%arg0: i32) -> (i32, i32) {
    %c0_i32 = arith.constant 0 : i32
    %c0_i32_0 = arith.constant 0 : i32
    %c0_i32_1 = arith.constant 0 : i32
    return %c0_i32, %c0_i32_0 : i32, i32
  }
  func.func @transform_4(%arg0: i32) -> (i32, i32) {
    %c0_i32 = arith.constant 0 : i32
    %c0_i32_0 = arith.constant 0 : i32
    return %arg0, %c0_i32 : i32, i32
  }
  func.func @transform_5(%arg0: i32) -> (i32, i32, i32) {
    %c0_i32 = arith.constant 0 : i32
    %c0_i32_0 = arith.constant 0 : i32
    %c0_i32_1 = arith.constant 0 : i32
    return %arg0, %c0_i32, %c0_i32_0 : i32, i32, i32
  }
}

module attributes {stable_mosaic.version = 11 : i64} {
  func.func @_stage2_kernel(%arg0: i32, %arg1: memref<1x16x16x16xf32, #tpu.memory_space<vmem>>, %arg2: memref<1x16xf32, #tpu.memory_space<vmem>>, %arg3: memref<1x16xf32, #tpu.memory_space<vmem>>, %arg4: memref<144x4xf32, #tpu.memory_space<vmem>>, %arg5: memref<1x4x256xf32, #tpu.memory_space<vmem>>, %arg6: memref<18x18x16xf32, #tpu.memory_space<vmem>>, %arg7: memref<256x144xf32, #tpu.memory_space<vmem>>) attributes {dimension_semantics = [#tpu.dimension_semantics<parallel>], iteration_bounds = array<i64: 2>, scalar_prefetch = 0 : i64, scratch_operands = 2 : i64, tpu.core_type = #tpu.core_type<tc>, window_params = [{transform_indices = @transform_0, window_bounds = array<i64: 1, 16, 16, 16>}, {pipeline_mode = #tpu.pipeline_mode<synchronous>, transform_indices = @transform_1, window_bounds = array<i64: 1, 16>}, {pipeline_mode = #tpu.pipeline_mode<synchronous>, transform_indices = @transform_2, window_bounds = array<i64: 1, 16>}, {pipeline_mode = #tpu.pipeline_mode<synchronous>, transform_indices = @transform_3, window_bounds = array<i64: 144, 4>}, {transform_indices = @transform_4, window_bounds = array<i64: 1, 4, 256>}]} {
    %cst = arith.constant 0.000000e+00 : f32
    %0 = vector.broadcast %cst : f32 to vector<1x18x16xf32>
    %c0 = arith.constant 0 : index
    %c0_0 = arith.constant 0 : index
    %c0_1 = arith.constant 0 : index
    %1 = vector.load %arg6[%c0, %c0_0, %c0_1] : memref<18x18x16xf32, #tpu.memory_space<vmem>>, vector<1x18x16xf32>
    tpu.vector_store %arg6[%c0, %c0_0, %c0_1], %0 {strides = array<i32>} : memref<18x18x16xf32, #tpu.memory_space<vmem>>, vector<1x18x16xf32>,
    %cst_2 = arith.constant 0.000000e+00 : f32
    %2 = vector.broadcast %cst_2 : f32 to vector<1x18x16xf32>
    %c17 = arith.constant 17 : index
    %c0_3 = arith.constant 0 : index
    %c0_4 = arith.constant 0 : index
    %3 = vector.load %arg6[%c17, %c0_3, %c0_4] : memref<18x18x16xf32, #tpu.memory_space<vmem>>, vector<1x18x16xf32>
    tpu.vector_store %arg6[%c17, %c0_3, %c0_4], %2 {strides = array<i32>} : memref<18x18x16xf32, #tpu.memory_space<vmem>>, vector<1x18x16xf32>,
    %cst_5 = arith.constant 0.000000e+00 : f32
    %4 = vector.broadcast %cst_5 : f32 to vector<18x1x16xf32>
    %c0_6 = arith.constant 0 : index
    %c0_7 = arith.constant 0 : index
    %c0_8 = arith.constant 0 : index
    %5 = vector.load %arg6[%c0_6, %c0_7, %c0_8] : memref<18x18x16xf32, #tpu.memory_space<vmem>>, vector<18x1x16xf32>
    tpu.vector_store %arg6[%c0_6, %c0_7, %c0_8], %4 {strides = array<i32>} : memref<18x18x16xf32, #tpu.memory_space<vmem>>, vector<18x1x16xf32>,
    %cst_9 = arith.constant 0.000000e+00 : f32
    %6 = vector.broadcast %cst_9 : f32 to vector<18x1x16xf32>
    %c0_10 = arith.constant 0 : index
    %c17_11 = arith.constant 17 : index
    %c0_12 = arith.constant 0 : index
    %7 = vector.load %arg6[%c0_10, %c17_11, %c0_12] : memref<18x18x16xf32, #tpu.memory_space<vmem>>, vector<18x1x16xf32>
    tpu.vector_store %arg6[%c0_10, %c17_11, %c0_12], %6 {strides = array<i32>} : memref<18x18x16xf32, #tpu.memory_space<vmem>>, vector<18x1x16xf32>,
    %c0_13 = arith.constant 0 : index
    %c0_14 = arith.constant 0 : index
    %c0_15 = arith.constant 0 : index
    %c0_16 = arith.constant 0 : index
    %8 = vector.load %arg1[%c0_13, %c0_14, %c0_15, %c0_16] : memref<1x16x16x16xf32, #tpu.memory_space<vmem>>, vector<1x16x16x16xf32>
    %9 = vector.shape_cast %8 : vector<1x16x16x16xf32> to vector<16x16x16xf32>
    %c0_17 = arith.constant 0 : index
    %c0_18 = arith.constant 0 : index
    %10 = vector.load %arg2[%c0_17, %c0_18] : memref<1x16xf32, #tpu.memory_space<vmem>>, vector<1x16xf32>
    %11 = vector.shape_cast %10 : vector<1x16xf32> to vector<1x1x16xf32>
    %12 = vector.broadcast %11 : vector<1x1x16xf32> to vector<16x16x16xf32>
    %13 = arith.mulf %9, %12 : vector<16x16x16xf32>
    %c0_19 = arith.constant 0 : index
    %c0_20 = arith.constant 0 : index
    %14 = vector.load %arg3[%c0_19, %c0_20] : memref<1x16xf32, #tpu.memory_space<vmem>>, vector<1x16xf32>
    %15 = vector.shape_cast %14 : vector<1x16xf32> to vector<1x1x16xf32>
    %16 = vector.broadcast %15 : vector<1x1x16xf32> to vector<16x16x16xf32>
    %17 = arith.addf %13, %16 : vector<16x16x16xf32>
    %cst_21 = arith.constant 0.000000e+00 : f32
    %18 = vector.broadcast %cst_21 : f32 to vector<16x16x16xf32>
    %19 = arith.maximumf %17, %18 : vector<16x16x16xf32>
    %c1 = arith.constant 1 : index
    %c1_22 = arith.constant 1 : index
    %c0_23 = arith.constant 0 : index
    %20 = vector.load %arg6[%c1, %c1_22, %c0_23] : memref<18x18x16xf32, #tpu.memory_space<vmem>>, vector<16x16x16xf32>
    tpu.vector_store %arg6[%c1, %c1_22, %c0_23], %19 {strides = array<i32>} : memref<18x18x16xf32, #tpu.memory_space<vmem>>, vector<16x16x16xf32>,
    %c0_24 = arith.constant 0 : index
    %c0_25 = arith.constant 0 : index
    %c0_26 = arith.constant 0 : index
    %21 = vector.load %arg6[%c0_24, %c0_25, %c0_26] : memref<18x18x16xf32, #tpu.memory_space<vmem>>, vector<18x16x16xf32>
    %22 = vector.extract_strided_slice %21 {offsets = [0, 0, 0], sizes = [16, 16, 16], strides = [1, 1, 1]} : vector<18x16x16xf32> to vector<16x16x16xf32>
    %23 = vector.shape_cast %22 : vector<16x16x16xf32> to vector<256x16xf32>
    %c0_27 = arith.constant 0 : index
    %c0_28 = arith.constant 0 : index
    %24 = vector.load %arg7[%c0_27, %c0_28] : memref<256x144xf32, #tpu.memory_space<vmem>>, vector<256x16xf32>
    tpu.vector_store %arg7[%c0_27, %c0_28], %23 {strides = array<i32>} : memref<256x144xf32, #tpu.memory_space<vmem>>, vector<256x16xf32>,
    %25 = vector.extract_strided_slice %21 {offsets = [1, 0, 0], sizes = [16, 16, 16], strides = [1, 1, 1]} : vector<18x16x16xf32> to vector<16x16x16xf32>
    %26 = vector.shape_cast %25 : vector<16x16x16xf32> to vector<256x16xf32>
    %c0_29 = arith.constant 0 : index
    %c48 = arith.constant 48 : index
    %27 = vector.load %arg7[%c0_29, %c48] : memref<256x144xf32, #tpu.memory_space<vmem>>, vector<256x16xf32>
    tpu.vector_store %arg7[%c0_29, %c48], %26 {strides = array<i32>} : memref<256x144xf32, #tpu.memory_space<vmem>>, vector<256x16xf32>,
    %28 = vector.extract_strided_slice %21 {offsets = [2, 0, 0], sizes = [16, 16, 16], strides = [1, 1, 1]} : vector<18x16x16xf32> to vector<16x16x16xf32>
    %29 = vector.shape_cast %28 : vector<16x16x16xf32> to vector<256x16xf32>
    %c0_30 = arith.constant 0 : index
    %c96 = arith.constant 96 : index
    %30 = vector.load %arg7[%c0_30, %c96] : memref<256x144xf32, #tpu.memory_space<vmem>>, vector<256x16xf32>
    tpu.vector_store %arg7[%c0_30, %c96], %29 {strides = array<i32>} : memref<256x144xf32, #tpu.memory_space<vmem>>, vector<256x16xf32>,
    %c0_31 = arith.constant 0 : index
    %c1_32 = arith.constant 1 : index
    %c0_33 = arith.constant 0 : index
    %31 = vector.load %arg6[%c0_31, %c1_32, %c0_33] : memref<18x18x16xf32, #tpu.memory_space<vmem>>, vector<18x16x16xf32>
    %32 = vector.extract_strided_slice %31 {offsets = [0, 0, 0], sizes = [16, 16, 16], strides = [1, 1, 1]} : vector<18x16x16xf32> to vector<16x16x16xf32>
    %33 = vector.shape_cast %32 : vector<16x16x16xf32> to vector<256x16xf32>
    %c0_34 = arith.constant 0 : index
    %c16 = arith.constant 16 : index
    %34 = vector.load %arg7[%c0_34, %c16] : memref<256x144xf32, #tpu.memory_space<vmem>>, vector<256x16xf32>
    tpu.vector_store %arg7[%c0_34, %c16], %33 {strides = array<i32>} : memref<256x144xf32, #tpu.memory_space<vmem>>, vector<256x16xf32>,
    %35 = vector.extract_strided_slice %31 {offsets = [1, 0, 0], sizes = [16, 16, 16], strides = [1, 1, 1]} : vector<18x16x16xf32> to vector<16x16x16xf32>
    %36 = vector.shape_cast %35 : vector<16x16x16xf32> to vector<256x16xf32>
    %c0_35 = arith.constant 0 : index
    %c64 = arith.constant 64 : index
    %37 = vector.load %arg7[%c0_35, %c64] : memref<256x144xf32, #tpu.memory_space<vmem>>, vector<256x16xf32>
    tpu.vector_store %arg7[%c0_35, %c64], %36 {strides = array<i32>} : memref<256x144xf32, #tpu.memory_space<vmem>>, vector<256x16xf32>,
    %38 = vector.extract_strided_slice %31 {offsets = [2, 0, 0], sizes = [16, 16, 16], strides = [1, 1, 1]} : vector<18x16x16xf32> to vector<16x16x16xf32>
    %39 = vector.shape_cast %38 : vector<16x16x16xf32> to vector<256x16xf32>
    %c0_36 = arith.constant 0 : index
    %c112 = arith.constant 112 : index
    %40 = vector.load %arg7[%c0_36, %c112] : memref<256x144xf32, #tpu.memory_space<vmem>>, vector<256x16xf32>
    tpu.vector_store %arg7[%c0_36, %c112], %39 {strides = array<i32>} : memref<256x144xf32, #tpu.memory_space<vmem>>, vector<256x16xf32>,
    %c0_37 = arith.constant 0 : index
    %c2 = arith.constant 2 : index
    %c0_38 = arith.constant 0 : index
    %41 = vector.load %arg6[%c0_37, %c2, %c0_38] : memref<18x18x16xf32, #tpu.memory_space<vmem>>, vector<18x16x16xf32>
    %42 = vector.extract_strided_slice %41 {offsets = [0, 0, 0], sizes = [16, 16, 16], strides = [1, 1, 1]} : vector<18x16x16xf32> to vector<16x16x16xf32>
    %43 = vector.shape_cast %42 : vector<16x16x16xf32> to vector<256x16xf32>
    %c0_39 = arith.constant 0 : index
    %c32 = arith.constant 32 : index
    %44 = vector.load %arg7[%c0_39, %c32] : memref<256x144xf32, #tpu.memory_space<vmem>>, vector<256x16xf32>
    tpu.vector_store %arg7[%c0_39, %c32], %43 {strides = array<i32>} : memref<256x144xf32, #tpu.memory_space<vmem>>, vector<256x16xf32>,
    %45 = vector.extract_strided_slice %41 {offsets = [1, 0, 0], sizes = [16, 16, 16], strides = [1, 1, 1]} : vector<18x16x16xf32> to vector<16x16x16xf32>
    %46 = vector.shape_cast %45 : vector<16x16x16xf32> to vector<256x16xf32>
    %c0_40 = arith.constant 0 : index
    %c80 = arith.constant 80 : index
    %47 = vector.load %arg7[%c0_40, %c80] : memref<256x144xf32, #tpu.memory_space<vmem>>, vector<256x16xf32>
    tpu.vector_store %arg7[%c0_40, %c80], %46 {strides = array<i32>} : memref<256x144xf32, #tpu.memory_space<vmem>>, vector<256x16xf32>,
    %48 = vector.extract_strided_slice %41 {offsets = [2, 0, 0], sizes = [16, 16, 16], strides = [1, 1, 1]} : vector<18x16x16xf32> to vector<16x16x16xf32>
    %49 = vector.shape_cast %48 : vector<16x16x16xf32> to vector<256x16xf32>
    %c0_41 = arith.constant 0 : index
    %c128 = arith.constant 128 : index
    %50 = vector.load %arg7[%c0_41, %c128] : memref<256x144xf32, #tpu.memory_space<vmem>>, vector<256x16xf32>
    tpu.vector_store %arg7[%c0_41, %c128], %49 {strides = array<i32>} : memref<256x144xf32, #tpu.memory_space<vmem>>, vector<256x16xf32>,
    %c0_42 = arith.constant 0 : index
    %c0_43 = arith.constant 0 : index
    %51 = vector.load %arg7[%c0_42, %c0_43] : memref<256x144xf32, #tpu.memory_space<vmem>>, vector<256x144xf32>
    %c0_44 = arith.constant 0 : index
    %c0_45 = arith.constant 0 : index
    %52 = vector.load %arg4[%c0_44, %c0_45] : memref<144x4xf32, #tpu.memory_space<vmem>>, vector<144x4xf32>
    %cst_46 = arith.constant dense<0.000000e+00> : vector<256x4xf32>
    %53 = tpu.matmul %51, %52, %cst_46 {dimension_numbers = #tpu.dot_dimension_numbers<[1], [0], [0], [1], [0, 0, 1, 1], [], []>} : vector<256x144xf32>, vector<144x4xf32>, vector<256x4xf32> -> vector<256x4xf32>
    %54 = tpu.transpose %53, [1, 0] : vector<256x4xf32> -> vector<4x256xf32>
    %c0_47 = arith.constant 0 : index
    %c0_48 = arith.constant 0 : index
    %c0_49 = arith.constant 0 : index
    %55 = vector.load %arg5[%c0_47, %c0_48, %c0_49] : memref<1x4x256xf32, #tpu.memory_space<vmem>>, vector<1x4x256xf32>
    %56 = vector.shape_cast %55 : vector<1x4x256xf32> to vector<4x256xf32>
    %57 = vector.shape_cast %54 : vector<4x256xf32> to vector<1x4x256xf32>
    tpu.vector_store %arg5[%c0_47, %c0_48, %c0_49], %57 {strides = array<i32>} : memref<1x4x256xf32, #tpu.memory_space<vmem>>, vector<1x4x256xf32>,
    return
  }
  func.func @transform_0(%arg0: i32) -> (i32, i32, i32, i32) {
    %c0_i32 = arith.constant 0 : i32
    %c0_i32_0 = arith.constant 0 : i32
    %c0_i32_1 = arith.constant 0 : i32
    %c0_i32_2 = arith.constant 0 : i32
    return %arg0, %c0_i32, %c0_i32_0, %c0_i32_1 : i32, i32, i32, i32
  }
  func.func @transform_1(%arg0: i32) -> (i32, i32) {
    %c0_i32 = arith.constant 0 : i32
    %c0_i32_0 = arith.constant 0 : i32
    %c0_i32_1 = arith.constant 0 : i32
    return %c0_i32, %c0_i32_0 : i32, i32
  }
  func.func @transform_2(%arg0: i32) -> (i32, i32) {
    %c0_i32 = arith.constant 0 : i32
    %c0_i32_0 = arith.constant 0 : i32
    %c0_i32_1 = arith.constant 0 : i32
    return %c0_i32, %c0_i32_0 : i32, i32
  }
  func.func @transform_3(%arg0: i32) -> (i32, i32) {
    %c0_i32 = arith.constant 0 : i32
    %c0_i32_0 = arith.constant 0 : i32
    %c0_i32_1 = arith.constant 0 : i32
    return %c0_i32, %c0_i32_0 : i32, i32
  }
  func.func @transform_4(%arg0: i32) -> (i32, i32, i32) {
    %c0_i32 = arith.constant 0 : i32
    %c0_i32_0 = arith.constant 0 : i32
    %c0_i32_1 = arith.constant 0 : i32
    return %arg0, %c0_i32, %c0_i32_0 : i32, i32, i32
  }
}

</mosaic_0001>

<llo_original>
// kernel: bottleneck_block_dense.2
$region0: #{bottleneck_block_dense.2}
  #allocation0 [shape = 'u32[]', space=smem, size = 0x4, offset = 0x4, fixed_abs, tag = 'smem constant byte address 0x4 - core index']
  #allocation1 [shape = 'u32[144,128]{1,0:T(1,128)}', space=vmem, size = 0x12000, scoped, tag = 'internal scratch']
  %s0 = inlined_call_operand.vmem [shape: f32[512,4], index: 0, kind: input, shape index: {}]
  %s1 = inlined_call_operand.vmem [shape: f32[1,4], index: 1, kind: input, shape index: {}]
  %s2 = inlined_call_operand.vmem [shape: f32[1,4], index: 2, kind: input, shape index: {}]
  %s3 = inlined_call_operand.vmem [shape: f32[4,16], index: 3, kind: input, shape index: {}]
  %s4 = inlined_call_operand.vmem [shape: f32[512,16], index: 4, kind: output, shape index: {0}]
  %s5 = inlined_call_operand.vmem [shape: f32[2,2,16], index: 5, kind: output, shape index: {1}]
  %6 = xla_tuple %s4, %s5
  %s7 = sld [smem:[#allocation0]]
  $region57: #{bottleneck_block_dense.2} parent=0
    _
  %s9 = ssub.s32 1, %s7
  %s10 = scalar_select 0, %s9, %s7
  loop: start=0, step=1, limit=4
  $region2: #{bottleneck_block_dense.2} parent=0 // loop_pre_header
    _
  $region3: #{bottleneck_block_dense.2} parent=0 // loop_header
    %s12 = sphi 0, %s16
    %p13 = scmp.ge.s32.totalorder %s12, 4
    %s22 = sphi 0, %s24
    %s25 = sphi 0, %s22
    %s26 = sphi 0, %s25
    %s42 = sphi 0, %s26
    %s46 = sphi 0, %s46
    %s48 = sphi 0, %s46
    %s49 = sphi 0, %s48
    %s63 = sphi 0, %s49
    %s67 = sphi 0, %s67
    %s69 = sphi 0, %s67
    %s70 = sphi 0, %s69
    %s84 = sphi 0, %s70
    %s88 = sphi 0, %s88
    %s90 = sphi 0, %s88
    %s91 = sphi 0, %s90
    %s105 = sphi 0, %s91
    %s111 = sphi 0, %s113
    %s114 = sphi 0, %s111
    %s115 = sphi 0, %s114
    %s131 = sphi 0, %s115
    %s137 = sphi 0, %s139
    %s140 = sphi 0, %s137
    %s141 = sphi 0, %s140
    %s157 = sphi 0, %s141
  $region4: #{bottleneck_block_dense.2} parent=0 // loop_header_branch
    %15 = sbr.rel (%p13) target = $region8
  $region5: #{bottleneck_block_dense.2} parent=0 // loop_body
    %s17 = ssub.s32 %s12, 1
    %s18 = ssub.s32 %s12, 2
    %s19 = sadd.s32 %s12, 1
    %s20 = ssub.s32 %s12, %s19
    %p21 = scmp.eq.s32.totalorder %s20, 0
    %s23 = sadd.s32 %s22, 1
    %s24 = scalar_select %p21, %s22, %s23
    %p27 = pneg %p21
    %p28 = scmp.eq.s32.totalorder %s12, 1
    %p29 = por %p27, %p28
    %p30 = scmp.ne.s32.totalorder %s22, %s25
    %p31 = scmp.eq.s32.totalorder %s12, 0
    %p32 = por %p30, %p31
    %p33 = scmp.ne.s32.totalorder %s22, %s25
    %p34 = scmp.eq.s32.totalorder %s17, 1
    %p35 = por %p33, %p34
    %p36 = scmp.ne.s32.totalorder %s25, %s26
    %p37 = scmp.eq.s32.totalorder %s17, 0
    %p38 = por %p36, %p37
    %p39 = scmp.ne.s32.totalorder %s25, %s26
    %p40 = scmp.eq.s32.totalorder %s18, 1
    %p41 = por %p39, %p40
    %p43 = scmp.ne.s32.totalorder %s26, %s42
    %p44 = scmp.eq.s32.totalorder %s18, 0
    %p45 = por %p43, %p44
    %s47 = sadd.s32 %s46, 1
    %p50 = scmp.eq.s32.totalorder %s12, 1
    %p51 = scmp.ne.s32.totalorder %s46, %s48
    %p52 = scmp.eq.s32.totalorder %s12, 0
    %p53 = por %p51, %p52
    %p54 = scmp.ne.s32.totalorder %s46, %s48
    %p55 = scmp.eq.s32.totalorder %s17, 1
    %p56 = por %p54, %p55
    %p57 = scmp.ne.s32.totalorder %s48, %s49
    %p58 = scmp.eq.s32.totalorder %s17, 0
    %p59 = por %p57, %p58
    %p60 = scmp.ne.s32.totalorder %s48, %s49
    %p61 = scmp.eq.s32.totalorder %s18, 1
    %p62 = por %p60, %p61
    %p64 = scmp.ne.s32.totalorder %s49, %s63
    %p65 = scmp.eq.s32.totalorder %s18, 0
    %p66 = por %p64, %p65
    %s68 = sadd.s32 %s67, 1
    %p71 = scmp.eq.s32.totalorder %s12, 1
    %p72 = scmp.ne.s32.totalorder %s67, %s69
    %p73 = scmp.eq.s32.totalorder %s12, 0
    %p74 = por %p72, %p73
    %p75 = scmp.ne.s32.totalorder %s67, %s69
    %p76 = scmp.eq.s32.totalorder %s17, 1
    %p77 = por %p75, %p76
    %p78 = scmp.ne.s32.totalorder %s69, %s70
    %p79 = scmp.eq.s32.totalorder %s17, 0
    %p80 = por %p78, %p79
    %p81 = scmp.ne.s32.totalorder %s69, %s70
    %p82 = scmp.eq.s32.totalorder %s18, 1
    %p83 = por %p81, %p82
    %p85 = scmp.ne.s32.totalorder %s70, %s84
    %p86 = scmp.eq.s32.totalorder %s18, 0
    %p87 = por %p85, %p86
    %s89 = sadd.s32 %s88, 1
    %p92 = scmp.eq.s32.totalorder %s12, 1
    %p93 = scmp.ne.s32.totalorder %s88, %s90
    %p94 = scmp.eq.s32.totalorder %s12, 0
    %p95 = por %p93, %p94
    %p96 = scmp.ne.s32.totalorder %s88, %s90
    %p97 = scmp.eq.s32.totalorder %s17, 1
    %p98 = por %p96, %p97
    %p99 = scmp.ne.s32.totalorder %s90, %s91
    %p100 = scmp.eq.s32.totalorder %s17, 0
    %p101 = por %p99, %p100
    %p102 = scmp.ne.s32.totalorder %s90, %s91
    %p103 = scmp.eq.s32.totalorder %s18, 1
    %p104 = por %p102, %p103
    %p106 = scmp.ne.s32.totalorder %s91, %s105
    %p107 = scmp.eq.s32.totalorder %s18, 0
    %p108 = por %p106, %p107
    %s109 = ssub.s32 %s12, %s19
    %p110 = scmp.eq.s32.totalorder %s109, 0
    %s112 = sadd.s32 %s111, 1
    %s113 = scalar_select %p110, %s111, %s112
    %p116 = pneg %p110
    %p117 = scmp.eq.s32.totalorder %s12, 1
    %p118 = por %p116, %p117
    %p119 = scmp.ne.s32.totalorder %s111, %s114
    %p120 = scmp.eq.s32.totalorder %s12, 0
    %p121 = por %p119, %p120
    %p122 = scmp.ne.s32.totalorder %s111, %s114
    %p123 = scmp.eq.s32.totalorder %s17, 1
    %p124 = por %p122, %p123
    %p125 = scmp.ne.s32.totalorder %s114, %s115
    %p126 = scmp.eq.s32.totalorder %s17, 0
    %p127 = por %p125, %p126
    %p128 = scmp.ne.s32.totalorder %s114, %s115
    %p129 = scmp.eq.s32.totalorder %s18, 1
    %p130 = por %p128, %p129
    %p132 = scmp.ne.s32.totalorder %s115, %s131
    %p133 = scmp.eq.s32.totalorder %s18, 0
    %p134 = por %p132, %p133
    %s135 = ssub.s32 %s12, %s19
    %p136 = scmp.eq.s32.totalorder %s135, 0
    %s138 = sadd.s32 %s137, 1
    %s139 = scalar_select %p136, %s137, %s138
    %p142 = pneg %p136
    %p143 = scmp.eq.s32.totalorder %s12, 1
    %p144 = por %p142, %p143
    %p145 = scmp.ne.s32.totalorder %s137, %s140
    %p146 = scmp.eq.s32.totalorder %s12, 0
    %p147 = por %p145, %p146
    %p148 = scmp.ne.s32.totalorder %s137, %s140
    %p149 = scmp.eq.s32.totalorder %s17, 1
    %p150 = por %p148, %p149
    %p151 = scmp.ne.s32.totalorder %s140, %s141
    %p152 = scmp.eq.s32.totalorder %s17, 0
    %p153 = por %p151, %p152
    %p154 = scmp.ne.s32.totalorder %s140, %s141
    %p155 = scmp.eq.s32.totalorder %s18, 1
    %p156 = por %p154, %p155
    %p158 = scmp.ne.s32.totalorder %s141, %s157
    %p159 = scmp.eq.s32.totalorder %s18, 0
    %p160 = por %p158, %p159
    %p161 = scmp.le.s32.totalorder 1, %s12
    %p162 = scmp.lt.s32.totalorder %s12, 3
    %p163 = pnand %p161, %p162
    %p164 = pneg %p163
    // Predicated region
    $region9: #{bottleneck_block_dense.2} parent=5 // pred_check
      _
    $region10: #{bottleneck_block_dense.2} parent=5 // pred_check_branch
      %166 = sbr.rel (%p163) target = $region12
    $region11: #{bottleneck_block_dense.2} parent=5 // pred_region
      %s167 = ssub.s32 %s12, 1
      // Predicated region
      $region13: #{bottleneck_block_dense.2} parent=11 // pred_check
        %p168 = pneg %p59
      $region14: #{bottleneck_block_dense.2} parent=11 // pred_check_branch
        %170 = sbr.rel (%p168) target = $region16
      $region15: #{bottleneck_block_dense.2} parent=11 // pred_region
        _
      $region16: #{bottleneck_block_dense.2} parent=11 // pred_fallthru
        _
      // Predicated region
      $region17: #{bottleneck_block_dense.2} parent=11 // pred_check
        %p171 = pneg %p80
      $region18: #{bottleneck_block_dense.2} parent=11 // pred_check_branch
        %173 = sbr.rel (%p171) target = $region20
      $region19: #{bottleneck_block_dense.2} parent=11 // pred_region
        _
      $region20: #{bottleneck_block_dense.2} parent=11 // pred_fallthru
        _
      // Predicated region
      $region21: #{bottleneck_block_dense.2} parent=11 // pred_check
        %p174 = pneg %p101
      $region22: #{bottleneck_block_dense.2} parent=11 // pred_check_branch
        %176 = sbr.rel (%p174) target = $region24
      $region23: #{bottleneck_block_dense.2} parent=11 // pred_region
        _
      $region24: #{bottleneck_block_dense.2} parent=11 // pred_fallthru
        _
    $region12: #{bottleneck_block_dense.2} parent=5 // pred_fallthru
      _
    %p177 = scmp.lt.s32.totalorder %s12, 2
    // Predicated region
    $region25: #{bottleneck_block_dense.2} parent=5 // pred_check
      %p178 = pneg %p177
    $region26: #{bottleneck_block_dense.2} parent=5 // pred_check_branch
      %180 = sbr.rel (%p178) target = $region28
    $region27: #{bottleneck_block_dense.2} parent=5 // pred_region
      // Predicated region
      $region29: #{bottleneck_block_dense.2} parent=27 // pred_check
        %p181 = pneg %p32
      $region30: #{bottleneck_block_dense.2} parent=27 // pred_check_branch
        %183 = sbr.rel (%p181) target = $region32
      $region31: #{bottleneck_block_dense.2} parent=27 // pred_region
        %s184 = smul.u32 32, %s12
        %p185 = scmp.lt.s32.totalorder %s184, 63
        %s186 = scalar_select %p185, %s184, 63
        %s187 = smul.addr %s186, 8
        %s188 = scalar_lea.vmem %s0, %s187
        %s189 = smul.u32 32, %s12
      $region32: #{bottleneck_block_dense.2} parent=27 // pred_fallthru
        _
    $region28: #{bottleneck_block_dense.2} parent=5 // pred_fallthru
      _
    %p190 = scmp.le.s32.totalorder 1, %s12
    %p191 = scmp.lt.s32.totalorder %s12, 3
    %p192 = pnand %p190, %p191
    %p193 = pneg %p192
    // Predicated region
    $region33: #{bottleneck_block_dense.2} parent=5 // pred_check
      _
    $region34: #{bottleneck_block_dense.2} parent=5 // pred_check_branch
      %195 = sbr.rel (%p192) target = $region36
    $region35: #{bottleneck_block_dense.2} parent=5 // pred_region
      %s196 = ssub.s32 %s12, 1
      %s197 = smul.u32 32, %s17
      %p198 = scmp.lt.s32.totalorder %s197, 63
      %s199 = scalar_select %p198, %s197, 63
      %s200 = smul.addr %s199, 8
      %s201 = scalar_lea.vmem %s0, %s200
      %p202 = pneg %p38
      %p203 = pneg %p35
      %p204 = pneg %p59
      %p205 = pneg %p56
      %p206 = pneg %p80
      %p207 = pneg %p77
      %p208 = pneg %p101
      %p209 = pneg %p98
      %p210 = pneg %p127
      %p211 = pneg %p124
      %s212 = smul.u32 32, %s17
      %p213 = scmp.lt.s32.totalorder %s212, 63
      %s214 = scalar_select %p213, %s212, 63
      %s215 = smul.addr %s214, 8
      %s216 = scalar_lea.vmem %s4, %s215
      %p217 = pneg %p153
      %p218 = pneg %p150
      %p219 = scmp.lt.s32.totalorder %s17, 1
      %s220 = scalar_select %p219, %s17, 1
      %s221 = smul.addr %s220, 2
      %s222 = scalar_lea.vmem %s5, %s221
      %s223 = smul.u32 32, %s17
      %p224 = scmp.lt.s32.totalorder %s223, 63
      %s225 = scalar_select %p224, %s223, 63
      %s226 = smul.addr %s225, 8
      %s227 = scalar_lea.vmem %s0, %s226
      %s228 = smul.u32 32, %s17
      %s229 = smul.u32 32, %s17
      %p230 = scmp.lt.s32.totalorder %s229, 63
      %s231 = scalar_select %p230, %s229, 63
      %s232 = smul.addr %s231, 8
      %s233 = scalar_lea.vmem %s4, %s232
      %s234 = smul.u32 32, %s17
      %p235 = scmp.lt.s32.totalorder %s17, 1
      %s236 = scalar_select %p235, %s17, 1
      %s237 = smul.addr %s236, 2
      %s238 = scalar_lea.vmem %s5, %s237
      %v239 = vld [vmem:[%s227] sm:$0xff]
      %v240 = vld [vmem:[%s227 + $0x8] sm:$0xff]
      %v241 = vld [vmem:[%s227 + $0x10] sm:$0xff]
      %v242 = vld [vmem:[%s227 + $0x18] sm:$0xff]
      %v243 = vld [vmem:[%s227 + $0x20] sm:$0xff]
      %v244 = vld [vmem:[%s227 + $0x28] sm:$0xff]
      %v245 = vld [vmem:[%s227 + $0x30] sm:$0xff]
      %v246 = vld [vmem:[%s227 + $0x38] sm:$0xff]
      %v247 = vld [vmem:[%s227 + $0x40] sm:$0xff]
      %v248 = vld [vmem:[%s227 + $0x48] sm:$0xff]
      %v249 = vld [vmem:[%s227 + $0x50] sm:$0xff]
      %v250 = vld [vmem:[%s227 + $0x58] sm:$0xff]
      %v251 = vld [vmem:[%s227 + $0x60] sm:$0xff]
      %v252 = vld [vmem:[%s227 + $0x68] sm:$0xff]
      %v253 = vld [vmem:[%s227 + $0x70] sm:$0xff]
      %v254 = vld [vmem:[%s227 + $0x78] sm:$0xff]
      %v255 = vld [vmem:[%s227 + $0x80] sm:$0xff]
      %v256 = vld [vmem:[%s227 + $0x88] sm:$0xff]
      %v257 = vld [vmem:[%s227 + $0x90] sm:$0xff]
      %v258 = vld [vmem:[%s227 + $0x98] sm:$0xff]
      %v259 = vld [vmem:[%s227 + $0xa0] sm:$0xff]
      %v260 = vld [vmem:[%s227 + $0xa8] sm:$0xff]
      %v261 = vld [vmem:[%s227 + $0xb0] sm:$0xff]
      %v262 = vld [vmem:[%s227 + $0xb8] sm:$0xff]
      %v263 = vld [vmem:[%s227 + $0xc0] sm:$0xff]
      %v264 = vld [vmem:[%s227 + $0xc8] sm:$0xff]
      %v265 = vld [vmem:[%s227 + $0xd0] sm:$0xff]
      %v266 = vld [vmem:[%s227 + $0xd8] sm:$0xff]
      %v267 = vld [vmem:[%s227 + $0xe0] sm:$0xff]
      %v268 = vld [vmem:[%s227 + $0xe8] sm:$0xff]
      %v269 = vld [vmem:[%s227 + $0xf0] sm:$0xff]
      %v270 = vld [vmem:[%s227 + $0xf8] sm:$0xff]
      %v271 = vld [vmem:[%s1] sm:$0x1]
      %v273 = vlaneseq
      %v274 = vshrl.u32 %v273, 7
      %v275 = vsub.s32 0, %v274
      %v276 = vrot.slane %v271, %v275
      %v278 = vmul.f32 %v239, %v276
      %v279 = vmul.f32 %v240, %v276
      %v280 = vmul.f32 %v241, %v276
      %v281 = vmul.f32 %v242, %v276
      %v282 = vmul.f32 %v243, %v276
      %v283 = vmul.f32 %v244, %v276
      %v284 = vmul.f32 %v245, %v276
      %v285 = vmul.f32 %v246, %v276
      %v286 = vmul.f32 %v247, %v276
      %v287 = vmul.f32 %v248, %v276
      %v288 = vmul.f32 %v249, %v276
      %v289 = vmul.f32 %v250, %v276
      %v290 = vmul.f32 %v251, %v276
      %v291 = vmul.f32 %v252, %v276
      %v292 = vmul.f32 %v253, %v276
      %v293 = vmul.f32 %v254, %v276
      %v294 = vmul.f32 %v255, %v276
      %v295 = vmul.f32 %v256, %v276
      %v296 = vmul.f32 %v257, %v276
      %v297 = vmul.f32 %v258, %v276
      %v298 = vmul.f32 %v259, %v276
      %v299 = vmul.f32 %v260, %v276
      %v300 = vmul.f32 %v261, %v276
      %v301 = vmul.f32 %v262, %v276
      %v302 = vmul.f32 %v263, %v276
      %v303 = vmul.f32 %v264, %v276
      %v304 = vmul.f32 %v265, %v276
      %v305 = vmul.f32 %v266, %v276
      %v306 = vmul.f32 %v267, %v276
      %v307 = vmul.f32 %v268, %v276
      %v308 = vmul.f32 %v269, %v276
      %v309 = vmul.f32 %v270, %v276
      %v310 = vld [vmem:[%s2] sm:$0x1]
      %v312 = vlaneseq
      %v313 = vshrl.u32 %v312, 7
      %v314 = vsub.s32 0, %v313
      %v315 = vrot.slane %v310, %v314
      %v317 = vadd.f32 %v278, %v315
      %v318 = vadd.f32 %v279, %v315
      %v319 = vadd.f32 %v280, %v315
      %v320 = vadd.f32 %v281, %v315
      %v321 = vadd.f32 %v282, %v315
      %v322 = vadd.f32 %v283, %v315
      %v323 = vadd.f32 %v284, %v315
      %v324 = vadd.f32 %v285, %v315
      %v325 = vadd.f32 %v286, %v315
      %v326 = vadd.f32 %v287, %v315
      %v327 = vadd.f32 %v288, %v315
      %v328 = vadd.f32 %v289, %v315
      %v329 = vadd.f32 %v290, %v315
      %v330 = vadd.f32 %v291, %v315
      %v331 = vadd.f32 %v292, %v315
      %v332 = vadd.f32 %v293, %v315
      %v333 = vadd.f32 %v294, %v315
      %v334 = vadd.f32 %v295, %v315
      %v335 = vadd.f32 %v296, %v315
      %v336 = vadd.f32 %v297, %v315
      %v337 = vadd.f32 %v298, %v315
      %v338 = vadd.f32 %v299, %v315
      %v339 = vadd.f32 %v300, %v315
      %v340 = vadd.f32 %v301, %v315
      %v341 = vadd.f32 %v302, %v315
      %v342 = vadd.f32 %v303, %v315
      %v343 = vadd.f32 %v304, %v315
      %v344 = vadd.f32 %v305, %v315
      %v345 = vadd.f32 %v306, %v315
      %v346 = vadd.f32 %v307, %v315
      %v347 = vadd.f32 %v308, %v315
      %v348 = vadd.f32 %v309, %v315
      %v349 = vmax.f32 %v317, 0.0
      %v350 = vmax.f32 %v318, 0.0
      %v351 = vmax.f32 %v319, 0.0
      %v352 = vmax.f32 %v320, 0.0
      %v353 = vmax.f32 %v321, 0.0
      %v354 = vmax.f32 %v322, 0.0
      %v355 = vmax.f32 %v323, 0.0
      %v356 = vmax.f32 %v324, 0.0
      %v357 = vmax.f32 %v325, 0.0
      %v358 = vmax.f32 %v326, 0.0
      %v359 = vmax.f32 %v327, 0.0
      %v360 = vmax.f32 %v328, 0.0
      %v361 = vmax.f32 %v329, 0.0
      %v362 = vmax.f32 %v330, 0.0
      %v363 = vmax.f32 %v331, 0.0
      %v364 = vmax.f32 %v332, 0.0
      %v365 = vmax.f32 %v333, 0.0
      %v366 = vmax.f32 %v334, 0.0
      %v367 = vmax.f32 %v335, 0.0
      %v368 = vmax.f32 %v336, 0.0
      %v369 = vmax.f32 %v337, 0.0
      %v370 = vmax.f32 %v338, 0.0
      %v371 = vmax.f32 %v339, 0.0
      %v372 = vmax.f32 %v340, 0.0
      %v373 = vmax.f32 %v341, 0.0
      %v374 = vmax.f32 %v342, 0.0
      %v375 = vmax.f32 %v343, 0.0
      %v376 = vmax.f32 %v344, 0.0
      %v377 = vmax.f32 %v345, 0.0
      %v378 = vmax.f32 %v346, 0.0
      %v379 = vmax.f32 %v347, 0.0
      %v380 = vmax.f32 %v348, 0.0
      %v381 = vld [vmem:[%s3] sm:$0xf]
      %vm382 = vcmask 31744
      %v384 = vsel %vm382, %v349, 0
      %v387 = vsel %vm382, %v350, 0
      %v390 = vsel %vm382, %v351, 0
      %v393 = vsel %vm382, %v352, 0
      %v396 = vsel %vm382, %v353, 0
      %v399 = vsel %vm382, %v354, 0
      %v402 = vsel %vm382, %v355, 0
      %v405 = vsel %vm382, %v356, 0
      %v408 = vsel %vm382, %v357, 0
      %v411 = vsel %vm382, %v358, 0
      %v414 = vsel %vm382, %v359, 0
      %v417 = vsel %vm382, %v360, 0
      %v420 = vsel %vm382, %v361, 0
      %v423 = vsel %vm382, %v362, 0
      %v426 = vsel %vm382, %v363, 0
      %v429 = vsel %vm382, %v364, 0
      %v432 = vsel %vm382, %v365, 0
      %v435 = vsel %vm382, %v366, 0
      %v438 = vsel %vm382, %v367, 0
      %v441 = vsel %vm382, %v368, 0
      %v444 = vsel %vm382, %v369, 0
      %v447 = vsel %vm382, %v370, 0
      %v450 = vsel %vm382, %v371, 0
      %v453 = vsel %vm382, %v372, 0
      %v456 = vsel %vm382, %v373, 0
      %v459 = vsel %vm382, %v374, 0
      %v462 = vsel %vm382, %v375, 0
      %v465 = vsel %vm382, %v376, 0
      %v468 = vsel %vm382, %v377, 0
      %v471 = vsel %vm382, %v378, 0
      %v474 = vsel %vm382, %v379, 0
      %v477 = vsel %vm382, %v380, 0
      %vm479 = vcmask 1043456
      %v481 = vsel %vm479, %v381, 0
      %483 = vmatprep.subr.mxu0 0.0
      %484 = vmatpush1.msra.mxu0 %v481
      %485 = vmatprep.subr.mxu0 0.0
      %486 = vmatpush1.msra.mxu0 0.0
      %487 = vmatprep.subr.mxu0 0.0
      %488 = vmatpush1.msra.mxu0 0.0
      %489 = vmatprep.subr.mxu0 0.0
      %490 = vmatpush1.msra.mxu0 0.0
      %491 = vmatprep.subr.mxu0 0.0
      %492 = vmatpush1.msra.mxu0 0.0
      %493 = vmatprep.subr.mxu0 0.0
      %494 = vmatpush1.msra.mxu0 0.0
      %495 = vmatprep.subr.mxu0 0.0
      %496 = vmatpush1.msra.mxu0 0.0
      %497 = vmatprep.subr.mxu0 0.0
      %498 = vmatpush1.msra.mxu0 0.0
      %499 = vmatprep.subr.mxu0 0.0
      %500 = vmatpush1.msra.mxu0 0.0
      %501 = vmatprep.subr.mxu0 0.0
      %502 = vmatpush1.msra.mxu0 0.0
      %503 = vmatprep.subr.mxu0 0.0
      %504 = vmatpush1.msra.mxu0 0.0
      %505 = vmatprep.subr.mxu0 0.0
      %506 = vmatpush1.msra.mxu0 0.0
      %507 = vmatprep.subr.mxu0 0.0
      %508 = vmatpush1.msra.mxu0 0.0
      %509 = vmatprep.subr.mxu0 0.0
      %510 = vmatpush1.msra.mxu0 0.0
      %511 = vmatprep.subr.mxu0 0.0
      %512 = vmatpush1.msra.mxu0 0.0
      %513 = vmatprep.subr.mxu0 0.0
      %514 = vmatpush1.msra.mxu0 0.0
      %515 = vmatprep.subr.mxu0 0.0
      %516 = vmatpush1.msra.mxu0 0.0
      %517 = vmatprep.subr.mxu0 0.0
      %518 = vmatpush1.msra.mxu0 0.0
      %519 = vmatprep.subr.mxu0 0.0
      %520 = vmatpush1.msra.mxu0 0.0
      %521 = vmatprep.subr.mxu0 0.0
      %522 = vmatpush1.msra.mxu0 0.0
      %523 = vmatprep.subr.mxu0 0.0
      %524 = vmatpush1.msra.mxu0 0.0
      %525 = vmatprep.subr.mxu0 0.0
      %526 = vmatpush1.msra.mxu0 0.0
      %527 = vmatprep.subr.mxu0 0.0
      %528 = vmatpush1.msra.mxu0 0.0
      %529 = vmatprep.subr.mxu0 0.0
      %530 = vmatpush1.msra.mxu0 0.0
      %531 = vmatprep.subr.mxu0 0.0
      %532 = vmatpush1.msra.mxu0 0.0
      %533 = vmatprep.subr.mxu0 0.0
      %534 = vmatpush1.msra.mxu0 0.0
      %535 = vmatprep.subr.mxu0 0.0
      %536 = vmatpush1.msra.mxu0 0.0
      %537 = vmatprep.subr.mxu0 0.0
      %538 = vmatpush1.msra.mxu0 0.0
      %539 = vmatprep.subr.mxu0 0.0
      %540 = vmatpush1.msra.mxu0 0.0
      %541 = vmatprep.subr.mxu0 0.0
      %542 = vmatpush1.msra.mxu0 0.0
      %543 = vmatprep.subr.mxu0 0.0
      %544 = vmatpush1.msra.mxu0 0.0
      %545 = vmatprep.subr.mxu0 0.0
      %546 = vmatpush1.msra.mxu0 0.0
      %547 = vmatprep.mubr.f32.mxu0 0.0
      %548 = vmatmul.mubr.f32.gmra.mrb[0].mxu0 %v384
      %v549 = vpop.f32.mrb[0].mxu0
      %v550 = vadd.f32 0.0, %v549
      %v551 = vpop.f32.mrb[0].mxu0
      %552 = vmatprep.mubr.f32.mxu0 0.0
      %553 = vmatmul.mubr.f32.gmra.mrb[0].mxu0 %v387
      %v554 = vpop.f32.mrb[0].mxu0
      %v555 = vadd.f32 0.0, %v554
      %v556 = vpop.f32.mrb[0].mxu0
      %557 = vmatprep.mubr.f32.mxu0 0.0
      %558 = vmatmul.mubr.f32.gmra.mrb[0].mxu0 %v390
      %v559 = vpop.f32.mrb[0].mxu0
      %v560 = vadd.f32 0.0, %v559
      %v561 = vpop.f32.mrb[0].mxu0
      %562 = vmatprep.mubr.f32.mxu0 0.0
      %563 = vmatmul.mubr.f32.gmra.mrb[0].mxu0 %v393
      %v564 = vpop.f32.mrb[0].mxu0
      %v565 = vadd.f32 0.0, %v564
      %v566 = vpop.f32.mrb[0].mxu0
      %567 = vmatprep.mubr.f32.mxu0 0.0
      %568 = vmatmul.mubr.f32.gmra.mrb[0].mxu0 %v396
      %v569 = vpop.f32.mrb[0].mxu0
      %v570 = vadd.f32 0.0, %v569
      %v571 = vpop.f32.mrb[0].mxu0
      %572 = vmatprep.mubr.f32.mxu0 0.0
      %573 = vmatmul.mubr.f32.gmra.mrb[0].mxu0 %v399
      %v574 = vpop.f32.mrb[0].mxu0
      %v575 = vadd.f32 0.0, %v574
      %v576 = vpop.f32.mrb[0].mxu0
      %577 = vmatprep.mubr.f32.mxu0 0.0
      %578 = vmatmul.mubr.f32.gmra.mrb[0].mxu0 %v402
      %v579 = vpop.f32.mrb[0].mxu0
      %v580 = vadd.f32 0.0, %v579
      %v581 = vpop.f32.mrb[0].mxu0
      %582 = vmatprep.mubr.f32.mxu0 0.0
      %583 = vmatmul.mubr.f32.gmra.mrb[0].mxu0 %v405
      %v584 = vpop.f32.mrb[0].mxu0
      %v585 = vadd.f32 0.0, %v584
      %v586 = vpop.f32.mrb[0].mxu0
      %587 = vmatprep.mubr.f32.mxu0 0.0
      %588 = vmatmul.mubr.f32.gmra.mrb[0].mxu0 %v408
      %v589 = vpop.f32.mrb[0].mxu0
      %v590 = vadd.f32 0.0, %v589
      %v591 = vpop.f32.mrb[0].mxu0
      %592 = vmatprep.mubr.f32.mxu0 0.0
      %593 = vmatmul.mubr.f32.gmra.mrb[0].mxu0 %v411
      %v594 = vpop.f32.mrb[0].mxu0
      %v595 = vadd.f32 0.0, %v594
      %v596 = vpop.f32.mrb[0].mxu0
      %597 = vmatprep.mubr.f32.mxu0 0.0
      %598 = vmatmul.mubr.f32.gmra.mrb[0].mxu0 %v414
      %v599 = vpop.f32.mrb[0].mxu0
      %v600 = vadd.f32 0.0, %v599
      %v601 = vpop.f32.mrb[0].mxu0
      %602 = vmatprep.mubr.f32.mxu0 0.0
      %603 = vmatmul.mubr.f32.gmra.mrb[0].mxu0 %v417
      %v604 = vpop.f32.mrb[0].mxu0
      %v605 = vadd.f32 0.0, %v604
      %v606 = vpop.f32.mrb[0].mxu0
      %607 = vmatprep.mubr.f32.mxu0 0.0
      %608 = vmatmul.mubr.f32.gmra.mrb[0].mxu0 %v420
      %v609 = vpop.f32.mrb[0].mxu0
      %v610 = vadd.f32 0.0, %v609
      %v611 = vpop.f32.mrb[0].mxu0
      %612 = vmatprep.mubr.f32.mxu0 0.0
      %613 = vmatmul.mubr.f32.gmra.mrb[0].mxu0 %v423
      %v614 = vpop.f32.mrb[0].mxu0
      %v615 = vadd.f32 0.0, %v614
      %v616 = vpop.f32.mrb[0].mxu0
      %617 = vmatprep.mubr.f32.mxu0 0.0
      %618 = vmatmul.mubr.f32.gmra.mrb[0].mxu0 %v426
      %v619 = vpop.f32.mrb[0].mxu0
      %v620 = vadd.f32 0.0, %v619
      %v621 = vpop.f32.mrb[0].mxu0
      %622 = vmatprep.mubr.f32.mxu0 0.0
      %623 = vmatmul.mubr.f32.gmra.mrb[0].mxu0 %v429
      %v624 = vpop.f32.mrb[0].mxu0
      %v625 = vadd.f32 0.0, %v624
      %v626 = vpop.f32.mrb[0].mxu0
      %627 = vmatprep.mubr.f32.mxu0 0.0
      %628 = vmatmul.mubr.f32.gmra.mrb[0].mxu0 %v432
      %v629 = vpop.f32.mrb[0].mxu0
      %v630 = vadd.f32 0.0, %v629
      %v631 = vpop.f32.mrb[0].mxu0
      %632 = vmatprep.mubr.f32.mxu0 0.0
      %633 = vmatmul.mubr.f32.gmra.mrb[0].mxu0 %v435
      %v634 = vpop.f32.mrb[0].mxu0
      %v635 = vadd.f32 0.0, %v634
      %v636 = vpop.f32.mrb[0].mxu0
      %637 = vmatprep.mubr.f32.mxu0 0.0
      %638 = vmatmul.mubr.f32.gmra.mrb[0].mxu0 %v438
      %v639 = vpop.f32.mrb[0].mxu0
      %v640 = vadd.f32 0.0, %v639
      %v641 = vpop.f32.mrb[0].mxu0
      %642 = vmatprep.mubr.f32.mxu0 0.0
      %643 = vmatmul.mubr.f32.gmra.mrb[0].mxu0 %v441
      %v644 = vpop.f32.mrb[0].mxu0
      %v645 = vadd.f32 0.0, %v644
      %v646 = vpop.f32.mrb[0].mxu0
      %647 = vmatprep.mubr.f32.mxu0 0.0
      %648 = vmatmul.mubr.f32.gmra.mrb[0].mxu0 %v444
      %v649 = vpop.f32.mrb[0].mxu0
      %v650 = vadd.f32 0.0, %v649
      %v651 = vpop.f32.mrb[0].mxu0
      %652 = vmatprep.mubr.f32.mxu0 0.0
      %653 = vmatmul.mubr.f32.gmra.mrb[0].mxu0 %v447
      %v654 = vpop.f32.mrb[0].mxu0
      %v655 = vadd.f32 0.0, %v654
      %v656 = vpop.f32.mrb[0].mxu0
      %657 = vmatprep.mubr.f32.mxu0 0.0
      %658 = vmatmul.mubr.f32.gmra.mrb[0].mxu0 %v450
      %v659 = vpop.f32.mrb[0].mxu0
      %v660 = vadd.f32 0.0, %v659
      %v661 = vpop.f32.mrb[0].mxu0
      %662 = vmatprep.mubr.f32.mxu0 0.0
      %663 = vmatmul.mubr.f32.gmra.mrb[0].mxu0 %v453
      %v664 = vpop.f32.mrb[0].mxu0
      %v665 = vadd.f32 0.0, %v664
      %v666 = vpop.f32.mrb[0].mxu0
      %667 = vmatprep.mubr.f32.mxu0 0.0
      %668 = vmatmul.mubr.f32.gmra.mrb[0].mxu0 %v456
      %v669 = vpop.f32.mrb[0].mxu0
      %v670 = vadd.f32 0.0, %v669
      %v671 = vpop.f32.mrb[0].mxu0
      %672 = vmatprep.mubr.f32.mxu0 0.0
      %673 = vmatmul.mubr.f32.gmra.mrb[0].mxu0 %v459
      %v674 = vpop.f32.mrb[0].mxu0
      %v675 = vadd.f32 0.0, %v674
      %v676 = vpop.f32.mrb[0].mxu0
      %677 = vmatprep.mubr.f32.mxu0 0.0
      %678 = vmatmul.mubr.f32.gmra.mrb[0].mxu0 %v462
      %v679 = vpop.f32.mrb[0].mxu0
      %v680 = vadd.f32 0.0, %v679
      %v681 = vpop.f32.mrb[0].mxu0
      %682 = vmatprep.mubr.f32.mxu0 0.0
      %683 = vmatmul.mubr.f32.gmra.mrb[0].mxu0 %v465
      %v684 = vpop.f32.mrb[0].mxu0
      %v685 = vadd.f32 0.0, %v684
      %v686 = vpop.f32.mrb[0].mxu0
      %687 = vmatprep.mubr.f32.mxu0 0.0
      %688 = vmatmul.mubr.f32.gmra.mrb[0].mxu0 %v468
      %v689 = vpop.f32.mrb[0].mxu0
      %v690 = vadd.f32 0.0, %v689
      %v691 = vpop.f32.mrb[0].mxu0
      %692 = vmatprep.mubr.f32.mxu0 0.0
      %693 = vmatmul.mubr.f32.gmra.mrb[0].mxu0 %v471
      %v694 = vpop.f32.mrb[0].mxu0
      %v695 = vadd.f32 0.0, %v694
      %v696 = vpop.f32.mrb[0].mxu0
      %697 = vmatprep.mubr.f32.mxu0 0.0
      %698 = vmatmul.mubr.f32.gmra.mrb[0].mxu0 %v474
      %v699 = vpop.f32.mrb[0].mxu0
      %v700 = vadd.f32 0.0, %v699
      %v701 = vpop.f32.mrb[0].mxu0
      %702 = vmatprep.mubr.f32.mxu0 0.0
      %703 = vmatmul.mubr.f32.gmra.mrb[0].mxu0 %v477
      %v704 = vpop.f32.mrb[0].mxu0
      %v705 = vadd.f32 0.0, %v704
      %v706 = vpop.f32.mrb[0].mxu0
      %707 = vdwg.mxu0
      %vm708 = vcmask 130048
      %709 = vst.msk [vmem:[%s233] sm:$0xff] %vm708, %v550
      %710 = vst.msk [vmem:[%s233 + $0x8] sm:$0xff] %vm708, %v555
      %711 = vst.msk [vmem:[%s233 + $0x10] sm:$0xff] %vm708, %v560
      %712 = vst.msk [vmem:[%s233 + $0x18] sm:$0xff] %vm708, %v565
      %713 = vst.msk [vmem:[%s233 + $0x20] sm:$0xff] %vm708, %v570
      %714 = vst.msk [vmem:[%s233 + $0x28] sm:$0xff] %vm708, %v575
      %715 = vst.msk [vmem:[%s233 + $0x30] sm:$0xff] %vm708, %v580
      %716 = vst.msk [vmem:[%s233 + $0x38] sm:$0xff] %vm708, %v585
      %717 = vst.msk [vmem:[%s233 + $0x40] sm:$0xff] %vm708, %v590
      %718 = vst.msk [vmem:[%s233 + $0x48] sm:$0xff] %vm708, %v595
      %719 = vst.msk [vmem:[%s233 + $0x50] sm:$0xff] %vm708, %v600
      %720 = vst.msk [vmem:[%s233 + $0x58] sm:$0xff] %vm708, %v605
      %721 = vst.msk [vmem:[%s233 + $0x60] sm:$0xff] %vm708, %v610
      %722 = vst.msk [vmem:[%s233 + $0x68] sm:$0xff] %vm708, %v615
      %723 = vst.msk [vmem:[%s233 + $0x70] sm:$0xff] %vm708, %v620
      %724 = vst.msk [vmem:[%s233 + $0x78] sm:$0xff] %vm708, %v625
      %725 = vst.msk [vmem:[%s233 + $0x80] sm:$0xff] %vm708, %v630
      %726 = vst.msk [vmem:[%s233 + $0x88] sm:$0xff] %vm708, %v635
      %727 = vst.msk [vmem:[%s233 + $0x90] sm:$0xff] %vm708, %v640
      %728 = vst.msk [vmem:[%s233 + $0x98] sm:$0xff] %vm708, %v645
      %729 = vst.msk [vmem:[%s233 + $0xa0] sm:$0xff] %vm708, %v650
      %730 = vst.msk [vmem:[%s233 + $0xa8] sm:$0xff] %vm708, %v655
      %731 = vst.msk [vmem:[%s233 + $0xb0] sm:$0xff] %vm708, %v660
      %732 = vst.msk [vmem:[%s233 + $0xb8] sm:$0xff] %vm708, %v665
      %733 = vst.msk [vmem:[%s233 + $0xc0] sm:$0xff] %vm708, %v670
      %734 = vst.msk [vmem:[%s233 + $0xc8] sm:$0xff] %vm708, %v675
      %735 = vst.msk [vmem:[%s233 + $0xd0] sm:$0xff] %vm708, %v680
      %736 = vst.msk [vmem:[%s233 + $0xd8] sm:$0xff] %vm708, %v685
      %737 = vst.msk [vmem:[%s233 + $0xe0] sm:$0xff] %vm708, %v690
      %738 = vst.msk [vmem:[%s233 + $0xe8] sm:$0xff] %vm708, %v695
      %739 = vst.msk [vmem:[%s233 + $0xf0] sm:$0xff] %vm708, %v700
      %740 = vst.msk [vmem:[%s233 + $0xf8] sm:$0xff] %vm708, %v705
      %v741 = vsel %vm708, %v550, 0.0
      %v742 = vsel %vm708, %v555, 0.0
      %v743 = vadd.f32 %v741, %v742
      %v744 = vsel %vm708, %v560, 0.0
      %v745 = vadd.f32 %v743, %v744
      %v746 = vsel %vm708, %v565, 0.0
      %v747 = vadd.f32 %v745, %v746
      %v748 = vsel %vm708, %v570, 0.0
      %v749 = vadd.f32 %v747, %v748
      %v750 = vsel %vm708, %v575, 0.0
      %v751 = vadd.f32 %v749, %v750
      %v752 = vsel %vm708, %v580, 0.0
      %v753 = vadd.f32 %v751, %v752
      %v754 = vsel %vm708, %v585, 0.0
      %v755 = vadd.f32 %v753, %v754
      %v756 = vsel %vm708, %v590, 0.0
      %v757 = vadd.f32 %v755, %v756
      %v758 = vsel %vm708, %v595, 0.0
      %v759 = vadd.f32 %v757, %v758
      %v760 = vsel %vm708, %v600, 0.0
      %v761 = vadd.f32 %v759, %v760
      %v762 = vsel %vm708, %v605, 0.0
      %v763 = vadd.f32 %v761, %v762
      %v764 = vsel %vm708, %v610, 0.0
      %v765 = vadd.f32 %v763, %v764
      %v766 = vsel %vm708, %v615, 0.0
      %v767 = vadd.f32 %v765, %v766
      %v768 = vsel %vm708, %v620, 0.0
      %v769 = vadd.f32 %v767, %v768
      %v770 = vsel %vm708, %v625, 0.0
      %v771 = vadd.f32 %v769, %v770
      %v772 = vsel %vm708, %v630, 0.0
      %v773 = vadd.f32 %v771, %v772
      %v774 = vsel %vm708, %v635, 0.0
      %v775 = vadd.f32 %v773, %v774
      %v776 = vsel %vm708, %v640, 0.0
      %v777 = vadd.f32 %v775, %v776
      %v778 = vsel %vm708, %v645, 0.0
      %v779 = vadd.f32 %v777, %v778
      %v780 = vsel %vm708, %v650, 0.0
      %v781 = vadd.f32 %v779, %v780
      %v782 = vsel %vm708, %v655, 0.0
      %v783 = vadd.f32 %v781, %v782
      %v784 = vsel %vm708, %v660, 0.0
      %v785 = vadd.f32 %v783, %v784
      %v786 = vsel %vm708, %v665, 0.0
      %v787 = vadd.f32 %v785, %v786
      %v788 = vsel %vm708, %v670, 0.0
      %v789 = vadd.f32 %v787, %v788
      %v790 = vsel %vm708, %v675, 0.0
      %v791 = vadd.f32 %v789, %v790
      %v792 = vsel %vm708, %v680, 0.0
      %v793 = vadd.f32 %v791, %v792
      %v794 = vsel %vm708, %v685, 0.0
      %v795 = vadd.f32 %v793, %v794
      %v796 = vsel %vm708, %v690, 0.0
      %v797 = vadd.f32 %v795, %v796
      %v798 = vsel %vm708, %v695, 0.0
      %v799 = vadd.f32 %v797, %v798
      %v800 = vsel %vm708, %v700, 0.0
      %v801 = vadd.f32 %v799, %v800
      %v802 = vsel %vm708, %v705, 0.0
      %v803 = vadd.f32 %v801, %v802
      %v804 = vrot.slane %v803, 4
      %v805 = vadd.f32 %v803, %v804
      %v806 = vrot.slane %v805, 2
      %v807 = vadd.f32 %v805, %v806
      %v808 = vrot.slane %v807, 1
      %v809 = vadd.f32 %v807, %v808
      %vm810 = vcmask 122880
      %811 = vst.msk [vmem:[%s238] sm:$0x1] %vm810, %v809
      %v812 = vmul.f32 %v550, %v550
      %v813 = vmul.f32 %v555, %v555
      %v814 = vmul.f32 %v560, %v560
      %v815 = vmul.f32 %v565, %v565
      %v816 = vmul.f32 %v570, %v570
      %v817 = vmul.f32 %v575, %v575
      %v818 = vmul.f32 %v580, %v580
      %v819 = vmul.f32 %v585, %v585
      %v820 = vmul.f32 %v590, %v590
      %v821 = vmul.f32 %v595, %v595
      %v822 = vmul.f32 %v600, %v600
      %v823 = vmul.f32 %v605, %v605
      %v824 = vmul.f32 %v610, %v610
      %v825 = vmul.f32 %v615, %v615
      %v826 = vmul.f32 %v620, %v620
      %v827 = vmul.f32 %v625, %v625
      %v828 = vmul.f32 %v630, %v630
      %v829 = vmul.f32 %v635, %v635
      %v830 = vmul.f32 %v640, %v640
      %v831 = vmul.f32 %v645, %v645
      %v832 = vmul.f32 %v650, %v650
      %v833 = vmul.f32 %v655, %v655
      %v834 = vmul.f32 %v660, %v660
      %v835 = vmul.f32 %v665, %v665
      %v836 = vmul.f32 %v670, %v670
      %v837 = vmul.f32 %v675, %v675
      %v838 = vmul.f32 %v680, %v680
      %v839 = vmul.f32 %v685, %v685
      %v840 = vmul.f32 %v690, %v690
      %v841 = vmul.f32 %v695, %v695
      %v842 = vmul.f32 %v700, %v700
      %v843 = vmul.f32 %v705, %v705
      %v844 = vsel %vm708, %v812, 0.0
      %v845 = vsel %vm708, %v813, 0.0
      %v846 = vadd.f32 %v844, %v845
      %v847 = vsel %vm708, %v814, 0.0
      %v848 = vadd.f32 %v846, %v847
      %v849 = vsel %vm708, %v815, 0.0
      %v850 = vadd.f32 %v848, %v849
      %v851 = vsel %vm708, %v816, 0.0
      %v852 = vadd.f32 %v850, %v851
      %v853 = vsel %vm708, %v817, 0.0
      %v854 = vadd.f32 %v852, %v853
      %v855 = vsel %vm708, %v818, 0.0
      %v856 = vadd.f32 %v854, %v855
      %v857 = vsel %vm708, %v819, 0.0
      %v858 = vadd.f32 %v856, %v857
      %v859 = vsel %vm708, %v820, 0.0
      %v860 = vadd.f32 %v858, %v859
      %v861 = vsel %vm708, %v821, 0.0
      %v862 = vadd.f32 %v860, %v861
      %v863 = vsel %vm708, %v822, 0.0
      %v864 = vadd.f32 %v862, %v863
      %v865 = vsel %vm708, %v823, 0.0
      %v866 = vadd.f32 %v864, %v865
      %v867 = vsel %vm708, %v824, 0.0
      %v868 = vadd.f32 %v866, %v867
      %v869 = vsel %vm708, %v825, 0.0
      %v870 = vadd.f32 %v868, %v869
      %v871 = vsel %vm708, %v826, 0.0
      %v872 = vadd.f32 %v870, %v871
      %v873 = vsel %vm708, %v827, 0.0
      %v874 = vadd.f32 %v872, %v873
      %v875 = vsel %vm708, %v828, 0.0
      %v876 = vadd.f32 %v874, %v875
      %v877 = vsel %vm708, %v829, 0.0
      %v878 = vadd.f32 %v876, %v877
      %v879 = vsel %vm708, %v830, 0.0
      %v880 = vadd.f32 %v878, %v879
      %v881 = vsel %vm708, %v831, 0.0
      %v882 = vadd.f32 %v880, %v881
      %v883 = vsel %vm708, %v832, 0.0
      %v884 = vadd.f32 %v882, %v883
      %v885 = vsel %vm708, %v833, 0.0
      %v886 = vadd.f32 %v884, %v885
      %v887 = vsel %vm708, %v834, 0.0
      %v888 = vadd.f32 %v886, %v887
      %v889 = vsel %vm708, %v835, 0.0
      %v890 = vadd.f32 %v888, %v889
      %v891 = vsel %vm708, %v836, 0.0
      %v892 = vadd.f32 %v890, %v891
      %v893 = vsel %vm708, %v837, 0.0
      %v894 = vadd.f32 %v892, %v893
      %v895 = vsel %vm708, %v838, 0.0
      %v896 = vadd.f32 %v894, %v895
      %v897 = vsel %vm708, %v839, 0.0
      %v898 = vadd.f32 %v896, %v897
      %v899 = vsel %vm708, %v840, 0.0
      %v900 = vadd.f32 %v898, %v899
      %v901 = vsel %vm708, %v841, 0.0
      %v902 = vadd.f32 %v900, %v901
      %v903 = vsel %vm708, %v842, 0.0
      %v904 = vadd.f32 %v902, %v903
      %v905 = vsel %vm708, %v843, 0.0
      %v906 = vadd.f32 %v904, %v905
      %v907 = vrot.slane %v906, 4
      %v908 = vadd.f32 %v906, %v907
      %v909 = vrot.slane %v908, 2
      %v910 = vadd.f32 %v908, %v909
      %v911 = vrot.slane %v910, 1
      %v912 = vadd.f32 %v910, %v911
      %913 = vst.msk [vmem:[%s238 + $0x1] sm:$0x1] %vm810, %v912
      %s914 = smul.u32 32, %s17
      %p915 = scmp.lt.s32.totalorder %s914, 63
      %s916 = scalar_select %p915, %s914, 63
      %s917 = smul.addr %s916, 8
      %s918 = scalar_lea.vmem %s4, %s917
      %p919 = scmp.lt.s32.totalorder %s17, 1
      %s920 = scalar_select %p919, %s17, 1
      %s921 = smul.addr %s920, 2
      %s922 = scalar_lea.vmem %s5, %s921
      // Predicated region
      $region37: #{bottleneck_block_dense.2} parent=35 // pred_check
        %p923 = pneg %p124
      $region38: #{bottleneck_block_dense.2} parent=35 // pred_check_branch
        %925 = sbr.rel (%p923) target = $region40
      $region39: #{bottleneck_block_dense.2} parent=35 // pred_region
        %s926 = smul.u32 32, %s17
      $region40: #{bottleneck_block_dense.2} parent=35 // pred_fallthru
        _
      // Predicated region
      $region41: #{bottleneck_block_dense.2} parent=35 // pred_check
        %p927 = pneg %p150
      $region42: #{bottleneck_block_dense.2} parent=35 // pred_check_branch
        %929 = sbr.rel (%p927) target = $region44
      $region43: #{bottleneck_block_dense.2} parent=35 // pred_region
        _
      $region44: #{bottleneck_block_dense.2} parent=35 // pred_fallthru
        _
    $region36: #{bottleneck_block_dense.2} parent=5 // pred_fallthru
      _
    %p930 = scmp.le.s32.totalorder 2, %s12
    // Predicated region
    $region45: #{bottleneck_block_dense.2} parent=5 // pred_check
      %p931 = pneg %p930
    $region46: #{bottleneck_block_dense.2} parent=5 // pred_check_branch
      %933 = sbr.rel (%p931) target = $region48
    $region47: #{bottleneck_block_dense.2} parent=5 // pred_region
      %s934 = ssub.s32 %s12, 2
      // Predicated region
      $region49: #{bottleneck_block_dense.2} parent=47 // pred_check
        %p935 = pneg %p130
      $region50: #{bottleneck_block_dense.2} parent=47 // pred_check_branch
        %937 = sbr.rel (%p935) target = $region52
      $region51: #{bottleneck_block_dense.2} parent=47 // pred_region
        %s938 = smul.u32 32, %s18
        %p939 = scmp.lt.s32.totalorder %s938, 63
        %s940 = scalar_select %p939, %s938, 63
        %s941 = smul.addr %s940, 8
        %s942 = scalar_lea.vmem %s4, %s941
      $region52: #{bottleneck_block_dense.2} parent=47 // pred_fallthru
        _
      // Predicated region
      $region53: #{bottleneck_block_dense.2} parent=47 // pred_check
        %p943 = pneg %p156
      $region54: #{bottleneck_block_dense.2} parent=47 // pred_check_branch
        %945 = sbr.rel (%p943) target = $region56
      $region55: #{bottleneck_block_dense.2} parent=47 // pred_region
        %p946 = scmp.lt.s32.totalorder %s18, 1
        %s947 = scalar_select %p946, %s18, 1
        %s948 = smul.addr %s947, 2
        %s949 = scalar_lea.vmem %s5, %s948
      $region56: #{bottleneck_block_dense.2} parent=47 // pred_fallthru
        _
    $region48: #{bottleneck_block_dense.2} parent=5 // pred_fallthru
      _
  $region6: #{bottleneck_block_dense.2} parent=0 // loop_footer
    %s16 = sadd.s32 1, %s12
  $region7: #{bottleneck_block_dense.2} parent=0 // loop_footer_branch
    %11 = sbr.rel target = $region3
  $region8: #{bottleneck_block_dense.2} parent=0 // loop_exit
    _

// kernel: bottleneck_block_dense.3
$region0: #{bottleneck_block_dense.3}
  #allocation0 [shape = 'u32[]', space=smem, size = 0x4, offset = 0x4, fixed_abs, tag = 'smem constant byte address 0x4 - core index']
  #allocation1 [shape = 'u32[144,128]{1,0:T(1,128)}', space=vmem, size = 0x12000, scoped, tag = 'internal scratch']
  #allocation2 [shape = 'f32[18,18,16]{2,1,0:T(8,128)}', space=vmem, size = 0x36000, scoped, tag = 'scratch operand']
  #allocation3 [shape = 'f32[256,144]{1,0:T(8,128)}', space=vmem, size = 0x40000, scoped, tag = 'scratch operand']
  %s0 = inlined_call_operand.vmem [shape: f32[2,16,16,16], index: 0, kind: input, shape index: {}]
  %s1 = inlined_call_operand.vmem [shape: f32[1,16], index: 1, kind: input, shape index: {}]
  %s2 = inlined_call_operand.vmem [shape: f32[1,16], index: 2, kind: input, shape index: {}]
  %s3 = inlined_call_operand.vmem [shape: f32[144,4], index: 3, kind: input, shape index: {}]
  %s4 = inlined_call_operand.vmem [shape: f32[2,4,256], index: 4, kind: output, shape index: {}]
  %s5 = sld [smem:[#allocation0]]
  $region49: #{bottleneck_block_dense.3} parent=0
    _
  %s7 = ssub.s32 1, %s5
  %s8 = scalar_select 0, %s7, %s5
  loop: start=0, step=1, limit=4
  $region2: #{bottleneck_block_dense.3} parent=0 // loop_pre_header
    _
  $region3: #{bottleneck_block_dense.3} parent=0 // loop_header
    %s10 = sphi 0, %s14
    %p11 = scmp.ge.s32.totalorder %s10, 4
    %s20 = sphi 0, %s22
    %s23 = sphi 0, %s20
    %s24 = sphi 0, %s23
    %s40 = sphi 0, %s24
    %s44 = sphi 0, %s44
    %s46 = sphi 0, %s44
    %s47 = sphi 0, %s46
    %s61 = sphi 0, %s47
    %s65 = sphi 0, %s65
    %s67 = sphi 0, %s65
    %s68 = sphi 0, %s67
    %s82 = sphi 0, %s68
    %s86 = sphi 0, %s86
    %s88 = sphi 0, %s86
    %s89 = sphi 0, %s88
    %s103 = sphi 0, %s89
    %s109 = sphi 0, %s111
    %s112 = sphi 0, %s109
    %s113 = sphi 0, %s112
    %s129 = sphi 0, %s113
  $region4: #{bottleneck_block_dense.3} parent=0 // loop_header_branch
    %13 = sbr.rel (%p11) target = $region8
  $region5: #{bottleneck_block_dense.3} parent=0 // loop_body
    %s15 = ssub.s32 %s10, 1
    %s16 = ssub.s32 %s10, 2
    %s17 = sadd.s32 %s10, 1
    %s18 = ssub.s32 %s10, %s17
    %p19 = scmp.eq.s32.totalorder %s18, 0
    %s21 = sadd.s32 %s20, 1
    %s22 = scalar_select %p19, %s20, %s21
    %p25 = pneg %p19
    %p26 = scmp.eq.s32.totalorder %s10, 1
    %p27 = por %p25, %p26
    %p28 = scmp.ne.s32.totalorder %s20, %s23
    %p29 = scmp.eq.s32.totalorder %s10, 0
    %p30 = por %p28, %p29
    %p31 = scmp.ne.s32.totalorder %s20, %s23
    %p32 = scmp.eq.s32.totalorder %s15, 1
    %p33 = por %p31, %p32
    %p34 = scmp.ne.s32.totalorder %s23, %s24
    %p35 = scmp.eq.s32.totalorder %s15, 0
    %p36 = por %p34, %p35
    %p37 = scmp.ne.s32.totalorder %s23, %s24
    %p38 = scmp.eq.s32.totalorder %s16, 1
    %p39 = por %p37, %p38
    %p41 = scmp.ne.s32.totalorder %s24, %s40
    %p42 = scmp.eq.s32.totalorder %s16, 0
    %p43 = por %p41, %p42
    %s45 = sadd.s32 %s44, 1
    %p48 = scmp.eq.s32.totalorder %s10, 1
    %p49 = scmp.ne.s32.totalorder %s44, %s46
    %p50 = scmp.eq.s32.totalorder %s10, 0
    %p51 = por %p49, %p50
    %p52 = scmp.ne.s32.totalorder %s44, %s46
    %p53 = scmp.eq.s32.totalorder %s15, 1
    %p54 = por %p52, %p53
    %p55 = scmp.ne.s32.totalorder %s46, %s47
    %p56 = scmp.eq.s32.totalorder %s15, 0
    %p57 = por %p55, %p56
    %p58 = scmp.ne.s32.totalorder %s46, %s47
    %p59 = scmp.eq.s32.totalorder %s16, 1
    %p60 = por %p58, %p59
    %p62 = scmp.ne.s32.totalorder %s47, %s61
    %p63 = scmp.eq.s32.totalorder %s16, 0
    %p64 = por %p62, %p63
    %s66 = sadd.s32 %s65, 1
    %p69 = scmp.eq.s32.totalorder %s10, 1
    %p70 = scmp.ne.s32.totalorder %s65, %s67
    %p71 = scmp.eq.s32.totalorder %s10, 0
    %p72 = por %p70, %p71
    %p73 = scmp.ne.s32.totalorder %s65, %s67
    %p74 = scmp.eq.s32.totalorder %s15, 1
    %p75 = por %p73, %p74
    %p76 = scmp.ne.s32.totalorder %s67, %s68
    %p77 = scmp.eq.s32.totalorder %s15, 0
    %p78 = por %p76, %p77
    %p79 = scmp.ne.s32.totalorder %s67, %s68
    %p80 = scmp.eq.s32.totalorder %s16, 1
    %p81 = por %p79, %p80
    %p83 = scmp.ne.s32.totalorder %s68, %s82
    %p84 = scmp.eq.s32.totalorder %s16, 0
    %p85 = por %p83, %p84
    %s87 = sadd.s32 %s86, 1
    %p90 = scmp.eq.s32.totalorder %s10, 1
    %p91 = scmp.ne.s32.totalorder %s86, %s88
    %p92 = scmp.eq.s32.totalorder %s10, 0
    %p93 = por %p91, %p92
    %p94 = scmp.ne.s32.totalorder %s86, %s88
    %p95 = scmp.eq.s32.totalorder %s15, 1
    %p96 = por %p94, %p95
    %p97 = scmp.ne.s32.totalorder %s88, %s89
    %p98 = scmp.eq.s32.totalorder %s15, 0
    %p99 = por %p97, %p98
    %p100 = scmp.ne.s32.totalorder %s88, %s89
    %p101 = scmp.eq.s32.totalorder %s16, 1
    %p102 = por %p100, %p101
    %p104 = scmp.ne.s32.totalorder %s89, %s103
    %p105 = scmp.eq.s32.totalorder %s16, 0
    %p106 = por %p104, %p105
    %s107 = ssub.s32 %s10, %s17
    %p108 = scmp.eq.s32.totalorder %s107, 0
    %s110 = sadd.s32 %s109, 1
    %s111 = scalar_select %p108, %s109, %s110
    %p114 = pneg %p108
    %p115 = scmp.eq.s32.totalorder %s10, 1
    %p116 = por %p114, %p115
    %p117 = scmp.ne.s32.totalorder %s109, %s112
    %p118 = scmp.eq.s32.totalorder %s10, 0
    %p119 = por %p117, %p118
    %p120 = scmp.ne.s32.totalorder %s109, %s112
    %p121 = scmp.eq.s32.totalorder %s15, 1
    %p122 = por %p120, %p121
    %p123 = scmp.ne.s32.totalorder %s112, %s113
    %p124 = scmp.eq.s32.totalorder %s15, 0
    %p125 = por %p123, %p124
    %p126 = scmp.ne.s32.totalorder %s112, %s113
    %p127 = scmp.eq.s32.totalorder %s16, 1
    %p128 = por %p126, %p127
    %p130 = scmp.ne.s32.totalorder %s113, %s129
    %p131 = scmp.eq.s32.totalorder %s16, 0
    %p132 = por %p130, %p131
    %p133 = scmp.le.s32.totalorder 1, %s10
    %p134 = scmp.lt.s32.totalorder %s10, 3
    %p135 = pnand %p133, %p134
    %p136 = pneg %p135
    // Predicated region
    $region9: #{bottleneck_block_dense.3} parent=5 // pred_check
      _
    $region10: #{bottleneck_block_dense.3} parent=5 // pred_check_branch
      %138 = sbr.rel (%p135) target = $region12
    $region11: #{bottleneck_block_dense.3} parent=5 // pred_region
      %s139 = ssub.s32 %s10, 1
      // Predicated region
      $region13: #{bottleneck_block_dense.3} parent=11 // pred_check
        %p140 = pneg %p57
      $region14: #{bottleneck_block_dense.3} parent=11 // pred_check_branch
        %142 = sbr.rel (%p140) target = $region16
      $region15: #{bottleneck_block_dense.3} parent=11 // pred_region
        _
      $region16: #{bottleneck_block_dense.3} parent=11 // pred_fallthru
        _
      // Predicated region
      $region17: #{bottleneck_block_dense.3} parent=11 // pred_check
        %p143 = pneg %p78
      $region18: #{bottleneck_block_dense.3} parent=11 // pred_check_branch
        %145 = sbr.rel (%p143) target = $region20
      $region19: #{bottleneck_block_dense.3} parent=11 // pred_region
        _
      $region20: #{bottleneck_block_dense.3} parent=11 // pred_fallthru
        _
      // Predicated region
      $region21: #{bottleneck_block_dense.3} parent=11 // pred_check
        %p146 = pneg %p99
      $region22: #{bottleneck_block_dense.3} parent=11 // pred_check_branch
        %148 = sbr.rel (%p146) target = $region24
      $region23: #{bottleneck_block_dense.3} parent=11 // pred_region
        _
      $region24: #{bottleneck_block_dense.3} parent=11 // pred_fallthru
        _
    $region12: #{bottleneck_block_dense.3} parent=5 // pred_fallthru
      _
    %p149 = scmp.lt.s32.totalorder %s10, 2
    // Predicated region
    $region25: #{bottleneck_block_dense.3} parent=5 // pred_check
      %p150 = pneg %p149
    $region26: #{bottleneck_block_dense.3} parent=5 // pred_check_branch
      %152 = sbr.rel (%p150) target = $region28
    $region27: #{bottleneck_block_dense.3} parent=5 // pred_region
      // Predicated region
      $region29: #{bottleneck_block_dense.3} parent=27 // pred_check
        %p153 = pneg %p30
      $region30: #{bottleneck_block_dense.3} parent=27 // pred_check_branch
        %155 = sbr.rel (%p153) target = $region32
      $region31: #{bottleneck_block_dense.3} parent=27 // pred_region
        %p156 = scmp.lt.s32.totalorder %s10, 1
        %s157 = scalar_select %p156, %s10, 1
        %s158 = smul.addr %s157, 32
        %s159 = smul.addr %s158, 8
        %s160 = scalar_lea.vmem %s0, %s159
      $region32: #{bottleneck_block_dense.3} parent=27 // pred_fallthru
        _
    $region28: #{bottleneck_block_dense.3} parent=5 // pred_fallthru
      _
    %p161 = scmp.le.s32.totalorder 1, %s10
    %p162 = scmp.lt.s32.totalorder %s10, 3
    %p163 = pnand %p161, %p162
    %p164 = pneg %p163
    // Predicated region
    $region33: #{bottleneck_block_dense.3} parent=5 // pred_check
      _
    $region34: #{bottleneck_block_dense.3} parent=5 // pred_check_branch
      %166 = sbr.rel (%p163) target = $region36
    $region35: #{bottleneck_block_dense.3} parent=5 // pred_region
      %s167 = ssub.s32 %s10, 1
      %p168 = scmp.lt.s32.totalorder %s15, 1
      %s169 = scalar_select %p168, %s15, 1
      %s170 = smul.addr %s169, 32
      %s171 = smul.addr %s170, 8
      %s172 = scalar_lea.vmem %s0, %s171
      %p173 = pneg %p36
      %p174 = pneg %p33
      %p175 = pneg %p57
      %p176 = pneg %p54
      %p177 = pneg %p78
      %p178 = pneg %p75
      %p179 = pneg %p99
      %p180 = pneg %p96
      %p181 = pneg %p125
      %p182 = pneg %p122
      %p183 = scmp.lt.s32.totalorder %s15, 1
      %s184 = scalar_select %p183, %s15, 1
      %s185 = smul.addr %s184, 2
      %s186 = smul.addr %s185, 4
      %s187 = scalar_lea.vmem %s4, %s186
      %p188 = scmp.lt.s32.totalorder %s15, 1
      %s189 = scalar_select %p188, %s15, 1
      %s190 = smul.addr %s189, 32
      %s191 = smul.addr %s190, 8
      %s192 = scalar_lea.vmem %s0, %s191
      %p193 = scmp.lt.s32.totalorder %s15, 1
      %s194 = scalar_select %p193, %s15, 1
      %s195 = smul.addr %s194, 2
      %s196 = smul.addr %s195, 4
      %s197 = scalar_lea.vmem %s4, %s196
      %vm198 = vcmask 130048
      %199 = vst.msk [vmem:[#allocation2] sm:$0xff] %vm198, 0.0
      %200 = vst.msk [vmem:[#allocation2 + $0x8] sm:$0xff] %vm198, 0.0
      %vm201 = vcmask 123904
      %202 = vst.msk [vmem:[#allocation2 + $0x10] sm:$0x3] %vm201, 0.0
      %s203 = scalar_lea.vmem [#allocation2], 408
      %204 = vst.msk [vmem:[%s203] sm:$0xff] %vm198, 0.0
      %205 = vst.msk [vmem:[%s203 + $0x8] sm:$0xff] %vm198, 0.0
      %206 = vst.msk [vmem:[%s203 + $0x10] sm:$0x3] %vm201, 0.0
      %vm207 = vcmask 122880
      %208 = vst.msk [vmem:[#allocation2] sm:$0x1] %vm207, 0.0
      %209 = vst.msk [vmem:[#allocation2 + $0x18] sm:$0x1] %vm207, 0.0
      %210 = vst.msk [vmem:[#allocation2 + $0x30] sm:$0x1] %vm207, 0.0
      %211 = vst.msk [vmem:[#allocation2 + $0x48] sm:$0x1] %vm207, 0.0
      %212 = vst.msk [vmem:[#allocation2 + $0x60] sm:$0x1] %vm207, 0.0
      %213 = vst.msk [vmem:[#allocation2 + $0x78] sm:$0x1] %vm207, 0.0
      %214 = vst.msk [vmem:[#allocation2 + $0x90] sm:$0x1] %vm207, 0.0
      %215 = vst.msk [vmem:[#allocation2 + $0xa8] sm:$0x1] %vm207, 0.0
      %216 = vst.msk [vmem:[#allocation2 + $0xc0] sm:$0x1] %vm207, 0.0
      %217 = vst.msk [vmem:[#allocation2 + $0xd8] sm:$0x1] %vm207, 0.0
      %218 = vst.msk [vmem:[#allocation2 + $0xf0] sm:$0x1] %vm207, 0.0
      %219 = vst.msk [vmem:[#allocation2 + $0x108] sm:$0x1] %vm207, 0.0
      %220 = vst.msk [vmem:[#allocation2 + $0x120] sm:$0x1] %vm207, 0.0
      %221 = vst.msk [vmem:[#allocation2 + $0x138] sm:$0x1] %vm207, 0.0
      %222 = vst.msk [vmem:[#allocation2 + $0x150] sm:$0x1] %vm207, 0.0
      %223 = vst.msk [vmem:[#allocation2 + $0x168] sm:$0x1] %vm207, 0.0
      %224 = vst.msk [vmem:[#allocation2 + $0x180] sm:$0x1] %vm207, 0.0
      %225 = vst.msk [vmem:[#allocation2 + $0x198] sm:$0x1] %vm207, 0.0
      %226 = vst.msk [vmem:[#allocation2 + $0x11] sm:$0x1] %vm207, 0.0
      %227 = vst.msk [vmem:[#allocation2 + $0x29] sm:$0x1] %vm207, 0.0
      %228 = vst.msk [vmem:[#allocation2 + $0x41] sm:$0x1] %vm207, 0.0
      %229 = vst.msk [vmem:[#allocation2 + $0x59] sm:$0x1] %vm207, 0.0
      %230 = vst.msk [vmem:[#allocation2 + $0x71] sm:$0x1] %vm207, 0.0
      %231 = vst.msk [vmem:[#allocation2 + $0x89] sm:$0x1] %vm207, 0.0
      %232 = vst.msk [vmem:[#allocation2 + $0xa1] sm:$0x1] %vm207, 0.0
      %233 = vst.msk [vmem:[#allocation2 + $0xb9] sm:$0x1] %vm207, 0.0
      %234 = vst.msk [vmem:[#allocation2 + $0xd1] sm:$0x1] %vm207, 0.0
      %235 = vst.msk [vmem:[#allocation2 + $0xe9] sm:$0x1] %vm207, 0.0
      %236 = vst.msk [vmem:[#allocation2 + $0x101] sm:$0x1] %vm207, 0.0
      %237 = vst.msk [vmem:[#allocation2 + $0x119] sm:$0x1] %vm207, 0.0
      %238 = vst.msk [vmem:[#allocation2 + $0x131] sm:$0x1] %vm207, 0.0
      %239 = vst.msk [vmem:[#allocation2 + $0x149] sm:$0x1] %vm207, 0.0
      %240 = vst.msk [vmem:[#allocation2 + $0x161] sm:$0x1] %vm207, 0.0
      %241 = vst.msk [vmem:[#allocation2 + $0x179] sm:$0x1] %vm207, 0.0
      %242 = vst.msk [vmem:[#allocation2 + $0x191] sm:$0x1] %vm207, 0.0
      %243 = vst.msk [vmem:[#allocation2 + $0x1a9] sm:$0x1] %vm207, 0.0
      %v244 = vld [vmem:[%s192] sm:$0xff]
      %v245 = vld [vmem:[%s192 + $0x8] sm:$0xff]
      %v246 = vld [vmem:[%s192 + $0x10] sm:$0xff]
      %v247 = vld [vmem:[%s192 + $0x18] sm:$0xff]
      %v248 = vld [vmem:[%s192 + $0x20] sm:$0xff]
      %v249 = vld [vmem:[%s192 + $0x28] sm:$0xff]
      %v250 = vld [vmem:[%s192 + $0x30] sm:$0xff]
      %v251 = vld [vmem:[%s192 + $0x38] sm:$0xff]
      %v252 = vld [vmem:[%s192 + $0x40] sm:$0xff]
      %v253 = vld [vmem:[%s192 + $0x48] sm:$0xff]
      %v254 = vld [vmem:[%s192 + $0x50] sm:$0xff]
      %v255 = vld [vmem:[%s192 + $0x58] sm:$0xff]
      %v256 = vld [vmem:[%s192 + $0x60] sm:$0xff]
      %v257 = vld [vmem:[%s192 + $0x68] sm:$0xff]
      %v258 = vld [vmem:[%s192 + $0x70] sm:$0xff]
      %v259 = vld [vmem:[%s192 + $0x78] sm:$0xff]
      %v260 = vld [vmem:[%s192 + $0x80] sm:$0xff]
      %v261 = vld [vmem:[%s192 + $0x88] sm:$0xff]
      %v262 = vld [vmem:[%s192 + $0x90] sm:$0xff]
      %v263 = vld [vmem:[%s192 + $0x98] sm:$0xff]
      %v264 = vld [vmem:[%s192 + $0xa0] sm:$0xff]
      %v265 = vld [vmem:[%s192 + $0xa8] sm:$0xff]
      %v266 = vld [vmem:[%s192 + $0xb0] sm:$0xff]
      %v267 = vld [vmem:[%s192 + $0xb8] sm:$0xff]
      %v268 = vld [vmem:[%s192 + $0xc0] sm:$0xff]
      %v269 = vld [vmem:[%s192 + $0xc8] sm:$0xff]
      %v270 = vld [vmem:[%s192 + $0xd0] sm:$0xff]
      %v271 = vld [vmem:[%s192 + $0xd8] sm:$0xff]
      %v272 = vld [vmem:[%s192 + $0xe0] sm:$0xff]
      %v273 = vld [vmem:[%s192 + $0xe8] sm:$0xff]
      %v274 = vld [vmem:[%s192 + $0xf0] sm:$0xff]
      %v275 = vld [vmem:[%s192 + $0xf8] sm:$0xff]
      %v276 = vld [vmem:[%s1] sm:$0x1]
      %v278 = vlaneseq
      %v279 = vshrl.u32 %v278, 7
      %v280 = vsub.s32 0, %v279
      %v281 = vrot.slane %v276, %v280
      %v283 = vmul.f32 %v244, %v281
      %v284 = vmul.f32 %v245, %v281
      %v285 = vmul.f32 %v246, %v281
      %v286 = vmul.f32 %v247, %v281
      %v287 = vmul.f32 %v248, %v281
      %v288 = vmul.f32 %v249, %v281
      %v289 = vmul.f32 %v250, %v281
      %v290 = vmul.f32 %v251, %v281
      %v291 = vmul.f32 %v252, %v281
      %v292 = vmul.f32 %v253, %v281
      %v293 = vmul.f32 %v254, %v281
      %v294 = vmul.f32 %v255, %v281
      %v295 = vmul.f32 %v256, %v281
      %v296 = vmul.f32 %v257, %v281
      %v297 = vmul.f32 %v258, %v281
      %v298 = vmul.f32 %v259, %v281
      %v299 = vmul.f32 %v260, %v281
      %v300 = vmul.f32 %v261, %v281
      %v301 = vmul.f32 %v262, %v281
      %v302 = vmul.f32 %v263, %v281
      %v303 = vmul.f32 %v264, %v281
      %v304 = vmul.f32 %v265, %v281
      %v305 = vmul.f32 %v266, %v281
      %v306 = vmul.f32 %v267, %v281
      %v307 = vmul.f32 %v268, %v281
      %v308 = vmul.f32 %v269, %v281
      %v309 = vmul.f32 %v270, %v281
      %v310 = vmul.f32 %v271, %v281
      %v311 = vmul.f32 %v272, %v281
      %v312 = vmul.f32 %v273, %v281
      %v313 = vmul.f32 %v274, %v281
      %v314 = vmul.f32 %v275, %v281
      %v315 = vld [vmem:[%s2] sm:$0x1]
      %v317 = vlaneseq
      %v318 = vshrl.u32 %v317, 7
      %v319 = vsub.s32 0, %v318
      %v320 = vrot.slane %v315, %v319
      %v322 = vadd.f32 %v283, %v320
      %v323 = vadd.f32 %v284, %v320
      %v324 = vadd.f32 %v285, %v320
      %v325 = vadd.f32 %v286, %v320
      %v326 = vadd.f32 %v287, %v320
      %v327 = vadd.f32 %v288, %v320
      %v328 = vadd.f32 %v289, %v320
      %v329 = vadd.f32 %v290, %v320
      %v330 = vadd.f32 %v291, %v320
      %v331 = vadd.f32 %v292, %v320
      %v332 = vadd.f32 %v293, %v320
      %v333 = vadd.f32 %v294, %v320
      %v334 = vadd.f32 %v295, %v320
      %v335 = vadd.f32 %v296, %v320
      %v336 = vadd.f32 %v297, %v320
      %v337 = vadd.f32 %v298, %v320
      %v338 = vadd.f32 %v299, %v320
      %v339 = vadd.f32 %v300, %v320
      %v340 = vadd.f32 %v301, %v320
      %v341 = vadd.f32 %v302, %v320
      %v342 = vadd.f32 %v303, %v320
      %v343 = vadd.f32 %v304, %v320
      %v344 = vadd.f32 %v305, %v320
      %v345 = vadd.f32 %v306, %v320
      %v346 = vadd.f32 %v307, %v320
      %v347 = vadd.f32 %v308, %v320
      %v348 = vadd.f32 %v309, %v320
      %v349 = vadd.f32 %v310, %v320
      %v350 = vadd.f32 %v311, %v320
      %v351 = vadd.f32 %v312, %v320
      %v352 = vadd.f32 %v313, %v320
      %v353 = vadd.f32 %v314, %v320
      %v354 = vmax.f32 %v322, 0.0
      %v355 = vmax.f32 %v323, 0.0
      %v356 = vmax.f32 %v324, 0.0
      %v357 = vmax.f32 %v325, 0.0
      %v358 = vmax.f32 %v326, 0.0
      %v359 = vmax.f32 %v327, 0.0
      %v360 = vmax.f32 %v328, 0.0
      %v361 = vmax.f32 %v329, 0.0
      %v362 = vmax.f32 %v330, 0.0
      %v363 = vmax.f32 %v331, 0.0
      %v364 = vmax.f32 %v332, 0.0
      %v365 = vmax.f32 %v333, 0.0
      %v366 = vmax.f32 %v334, 0.0
      %v367 = vmax.f32 %v335, 0.0
      %v368 = vmax.f32 %v336, 0.0
      %v369 = vmax.f32 %v337, 0.0
      %v370 = vmax.f32 %v338, 0.0
      %v371 = vmax.f32 %v339, 0.0
      %v372 = vmax.f32 %v340, 0.0
      %v373 = vmax.f32 %v341, 0.0
      %v374 = vmax.f32 %v342, 0.0
      %v375 = vmax.f32 %v343, 0.0
      %v376 = vmax.f32 %v344, 0.0
      %v377 = vmax.f32 %v345, 0.0
      %v378 = vmax.f32 %v346, 0.0
      %v379 = vmax.f32 %v347, 0.0
      %v380 = vmax.f32 %v348, 0.0
      %v381 = vmax.f32 %v349, 0.0
      %v382 = vmax.f32 %v350, 0.0
      %v383 = vmax.f32 %v351, 0.0
      %v384 = vmax.f32 %v352, 0.0
      %v385 = vmax.f32 %v353, 0.0
      %s386 = scalar_lea.vmem [#allocation2], 24
      %387 = vst.msk [vmem:[%s386 + $0x1] sm:$0xff] %vm198, %v354
      %388 = vst.msk [vmem:[%s386 + $0x9] sm:$0xff] %vm198, %v355
      %389 = vst.msk [vmem:[%s386 + $0x19] sm:$0xff] %vm198, %v356
      %390 = vst.msk [vmem:[%s386 + $0x21] sm:$0xff] %vm198, %v357
      %391 = vst.msk [vmem:[%s386 + $0x31] sm:$0xff] %vm198, %v358
      %392 = vst.msk [vmem:[%s386 + $0x39] sm:$0xff] %vm198, %v359
      %393 = vst.msk [vmem:[%s386 + $0x49] sm:$0xff] %vm198, %v360
      %394 = vst.msk [vmem:[%s386 + $0x51] sm:$0xff] %vm198, %v361
      %395 = vst.msk [vmem:[%s386 + $0x61] sm:$0xff] %vm198, %v362
      %396 = vst.msk [vmem:[%s386 + $0x69] sm:$0xff] %vm198, %v363
      %397 = vst.msk [vmem:[%s386 + $0x79] sm:$0xff] %vm198, %v364
      %398 = vst.msk [vmem:[%s386 + $0x81] sm:$0xff] %vm198, %v365
      %399 = vst.msk [vmem:[%s386 + $0x91] sm:$0xff] %vm198, %v366
      %400 = vst.msk [vmem:[%s386 + $0x99] sm:$0xff] %vm198, %v367
      %401 = vst.msk [vmem:[%s386 + $0xa9] sm:$0xff] %vm198, %v368
      %402 = vst.msk [vmem:[%s386 + $0xb1] sm:$0xff] %vm198, %v369
      %403 = vst.msk [vmem:[%s386 + $0xc1] sm:$0xff] %vm198, %v370
      %404 = vst.msk [vmem:[%s386 + $0xc9] sm:$0xff] %vm198, %v371
      %405 = vst.msk [vmem:[%s386 + $0xd9] sm:$0xff] %vm198, %v372
      %406 = vst.msk [vmem:[%s386 + $0xe1] sm:$0xff] %vm198, %v373
      %407 = vst.msk [vmem:[%s386 + $0xf1] sm:$0xff] %vm198, %v374
      %408 = vst.msk [vmem:[%s386 + $0xf9] sm:$0xff] %vm198, %v375
      %409 = vst.msk [vmem:[%s386 + $0x109] sm:$0xff] %vm198, %v376
      %410 = vst.msk [vmem:[%s386 + $0x111] sm:$0xff] %vm198, %v377
      %411 = vst.msk [vmem:[%s386 + $0x121] sm:$0xff] %vm198, %v378
      %412 = vst.msk [vmem:[%s386 + $0x129] sm:$0xff] %vm198, %v379
      %413 = vst.msk [vmem:[%s386 + $0x139] sm:$0xff] %vm198, %v380
      %414 = vst.msk [vmem:[%s386 + $0x141] sm:$0xff] %vm198, %v381
      %415 = vst.msk [vmem:[%s386 + $0x151] sm:$0xff] %vm198, %v382
      %416 = vst.msk [vmem:[%s386 + $0x159] sm:$0xff] %vm198, %v383
      %417 = vst.msk [vmem:[%s386 + $0x169] sm:$0xff] %vm198, %v384
      %418 = vst.msk [vmem:[%s386 + $0x171] sm:$0xff] %vm198, %v385
      %v419 = vld [vmem:[#allocation2] sm:$0xff]
      %v420 = vld [vmem:[#allocation2 + $0x8] sm:$0xff]
      %v421 = vld [vmem:[#allocation2 + $0x18] sm:$0xff]
      %v422 = vld [vmem:[#allocation2 + $0x20] sm:$0xff]
      %v423 = vld [vmem:[#allocation2 + $0x30] sm:$0xff]
      %v424 = vld [vmem:[#allocation2 + $0x38] sm:$0xff]
      %v425 = vld [vmem:[#allocation2 + $0x48] sm:$0xff]
      %v426 = vld [vmem:[#allocation2 + $0x50] sm:$0xff]
      %v427 = vld [vmem:[#allocation2 + $0x60] sm:$0xff]
      %v428 = vld [vmem:[#allocation2 + $0x68] sm:$0xff]
      %v429 = vld [vmem:[#allocation2 + $0x78] sm:$0xff]
      %v430 = vld [vmem:[#allocation2 + $0x80] sm:$0xff]
      %v431 = vld [vmem:[#allocation2 + $0x90] sm:$0xff]
      %v432 = vld [vmem:[#allocation2 + $0x98] sm:$0xff]
      %v433 = vld [vmem:[#allocation2 + $0xa8] sm:$0xff]
      %v434 = vld [vmem:[#allocation2 + $0xb0] sm:$0xff]
      %v435 = vld [vmem:[#allocation2 + $0xc0] sm:$0xff]
      %v436 = vld [vmem:[#allocation2 + $0xc8] sm:$0xff]
      %v437 = vld [vmem:[#allocation2 + $0xd8] sm:$0xff]
      %v438 = vld [vmem:[#allocation2 + $0xe0] sm:$0xff]
      %v439 = vld [vmem:[#allocation2 + $0xf0] sm:$0xff]
      %v440 = vld [vmem:[#allocation2 + $0xf8] sm:$0xff]
      %v441 = vld [vmem:[#allocation2 + $0x108] sm:$0xff]
      %v442 = vld [vmem:[#allocation2 + $0x110] sm:$0xff]
      %v443 = vld [vmem:[#allocation2 + $0x120] sm:$0xff]
      %v444 = vld [vmem:[#allocation2 + $0x128] sm:$0xff]
      %v445 = vld [vmem:[#allocation2 + $0x138] sm:$0xff]
      %v446 = vld [vmem:[#allocation2 + $0x140] sm:$0xff]
      %v447 = vld [vmem:[#allocation2 + $0x150] sm:$0xff]
      %v448 = vld [vmem:[#allocation2 + $0x158] sm:$0xff]
      %v449 = vld [vmem:[#allocation2 + $0x168] sm:$0xff]
      %v450 = vld [vmem:[#allocation2 + $0x170] sm:$0xff]
      %v451 = vld [vmem:[#allocation2 + $0x180] sm:$0xff]
      %v452 = vld [vmem:[#allocation2 + $0x188] sm:$0xff]
      %v453 = vld [vmem:[#allocation2 + $0x198] sm:$0xff]
      %v454 = vld [vmem:[#allocation2 + $0x1a0] sm:$0xff]
      %455 = vst.msk [vmem:[#allocation3] sm:$0xff] %vm198, %v419
      %456 = vst.msk [vmem:[#allocation3 + $0x10] sm:$0xff] %vm198, %v420
      %457 = vst.msk [vmem:[#allocation3 + $0x20] sm:$0xff] %vm198, %v421
      %458 = vst.msk [vmem:[#allocation3 + $0x30] sm:$0xff] %vm198, %v422
      %459 = vst.msk [vmem:[#allocation3 + $0x40] sm:$0xff] %vm198, %v423
      %460 = vst.msk [vmem:[#allocation3 + $0x50] sm:$0xff] %vm198, %v424
      %461 = vst.msk [vmem:[#allocation3 + $0x60] sm:$0xff] %vm198, %v425
      %462 = vst.msk [vmem:[#allocation3 + $0x70] sm:$0xff] %vm198, %v426
      %463 = vst.msk [vmem:[#allocation3 + $0x80] sm:$0xff] %vm198, %v427
      %464 = vst.msk [vmem:[#allocation3 + $0x90] sm:$0xff] %vm198, %v428
      %465 = vst.msk [vmem:[#allocation3 + $0xa0] sm:$0xff] %vm198, %v429
      %466 = vst.msk [vmem:[#allocation3 + $0xb0] sm:$0xff] %vm198, %v430
      %467 = vst.msk [vmem:[#allocation3 + $0xc0] sm:$0xff] %vm198, %v431
      %468 = vst.msk [vmem:[#allocation3 + $0xd0] sm:$0xff] %vm198, %v432
      %469 = vst.msk [vmem:[#allocation3 + $0xe0] sm:$0xff] %vm198, %v433
      %470 = vst.msk [vmem:[#allocation3 + $0xf0] sm:$0xff] %vm198, %v434
      %471 = vst.msk [vmem:[#allocation3 + $0x100] sm:$0xff] %vm198, %v435
      %472 = vst.msk [vmem:[#allocation3 + $0x110] sm:$0xff] %vm198, %v436
      %473 = vst.msk [vmem:[#allocation3 + $0x120] sm:$0xff] %vm198, %v437
      %474 = vst.msk [vmem:[#allocation3 + $0x130] sm:$0xff] %vm198, %v438
      %475 = vst.msk [vmem:[#allocation3 + $0x140] sm:$0xff] %vm198, %v439
      %476 = vst.msk [vmem:[#allocation3 + $0x150] sm:$0xff] %vm198, %v440
      %477 = vst.msk [vmem:[#allocation3 + $0x160] sm:$0xff] %vm198, %v441
      %478 = vst.msk [vmem:[#allocation3 + $0x170] sm:$0xff] %vm198, %v442
      %479 = vst.msk [vmem:[#allocation3 + $0x180] sm:$0xff] %vm198, %v443
      %480 = vst.msk [vmem:[#allocation3 + $0x190] sm:$0xff] %vm198, %v444
      %481 = vst.msk [vmem:[#allocation3 + $0x1a0] sm:$0xff] %vm198, %v445
      %482 = vst.msk [vmem:[#allocation3 + $0x1b0] sm:$0xff] %vm198, %v446
      %483 = vst.msk [vmem:[#allocation3 + $0x1c0] sm:$0xff] %vm198, %v447
      %484 = vst.msk [vmem:[#allocation3 + $0x1d0] sm:$0xff] %vm198, %v448
      %485 = vst.msk [vmem:[#allocation3 + $0x1e0] sm:$0xff] %vm198, %v449
      %486 = vst.msk [vmem:[#allocation3 + $0x1f0] sm:$0xff] %vm198, %v450
      %519 = vrot.lane.b32.xlu0 %v421, 48
      %v520 = vpop.permute.xlu0 %519
      %521 = vrot.lane.b32.xlu0 %v422, 48
      %v522 = vpop.permute.xlu0 %521
      %523 = vrot.lane.b32.xlu0 %v423, 48
      %v524 = vpop.permute.xlu0 %523
      %525 = vrot.lane.b32.xlu0 %v424, 48
      %v526 = vpop.permute.xlu0 %525
      %527 = vrot.lane.b32.xlu0 %v425, 48
      %v528 = vpop.permute.xlu0 %527
      %529 = vrot.lane.b32.xlu0 %v426, 48
      %v530 = vpop.permute.xlu0 %529
      %531 = vrot.lane.b32.xlu0 %v427, 48
      %v532 = vpop.permute.xlu0 %531
      %533 = vrot.lane.b32.xlu0 %v428, 48
      %v534 = vpop.permute.xlu0 %533
      %535 = vrot.lane.b32.xlu0 %v429, 48
      %v536 = vpop.permute.xlu0 %535
      %537 = vrot.lane.b32.xlu0 %v430, 48
      %v538 = vpop.permute.xlu0 %537
      %539 = vrot.lane.b32.xlu0 %v431, 48
      %v540 = vpop.permute.xlu0 %539
      %541 = vrot.lane.b32.xlu0 %v432, 48
      %v542 = vpop.permute.xlu0 %541
      %543 = vrot.lane.b32.xlu0 %v433, 48
      %v544 = vpop.permute.xlu0 %543
      %545 = vrot.lane.b32.xlu0 %v434, 48
      %v546 = vpop.permute.xlu0 %545
      %547 = vrot.lane.b32.xlu0 %v435, 48
      %v548 = vpop.permute.xlu0 %547
      %549 = vrot.lane.b32.xlu0 %v436, 48
      %v550 = vpop.permute.xlu0 %549
      %551 = vrot.lane.b32.xlu0 %v437, 48
      %v552 = vpop.permute.xlu0 %551
      %553 = vrot.lane.b32.xlu0 %v438, 48
      %v554 = vpop.permute.xlu0 %553
      %555 = vrot.lane.b32.xlu0 %v439, 48
      %v556 = vpop.permute.xlu0 %555
      %557 = vrot.lane.b32.xlu0 %v440, 48
      %v558 = vpop.permute.xlu0 %557
      %559 = vrot.lane.b32.xlu0 %v441, 48
      %v560 = vpop.permute.xlu0 %559
      %561 = vrot.lane.b32.xlu0 %v442, 48
      %v562 = vpop.permute.xlu0 %561
      %563 = vrot.lane.b32.xlu0 %v443, 48
      %v564 = vpop.permute.xlu0 %563
      %565 = vrot.lane.b32.xlu0 %v444, 48
      %v566 = vpop.permute.xlu0 %565
      %567 = vrot.lane.b32.xlu0 %v445, 48
      %v568 = vpop.permute.xlu0 %567
      %569 = vrot.lane.b32.xlu0 %v446, 48
      %v570 = vpop.permute.xlu0 %569
      %571 = vrot.lane.b32.xlu0 %v447, 48
      %v572 = vpop.permute.xlu0 %571
      %573 = vrot.lane.b32.xlu0 %v448, 48
      %v574 = vpop.permute.xlu0 %573
      %575 = vrot.lane.b32.xlu0 %v449, 48
      %v576 = vpop.permute.xlu0 %575
      %577 = vrot.lane.b32.xlu0 %v450, 48
      %v578 = vpop.permute.xlu0 %577
      %579 = vrot.lane.b32.xlu0 %v451, 48
      %v580 = vpop.permute.xlu0 %579
      %581 = vrot.lane.b32.xlu0 %v452, 48
      %v582 = vpop.permute.xlu0 %581
      %vm615 = vcmask 523648
      %616 = vst.msk [vmem:[#allocation3] sm:$0xff] %vm615, %v520
      %617 = vst.msk [vmem:[#allocation3 + $0x10] sm:$0xff] %vm615, %v522
      %618 = vst.msk [vmem:[#allocation3 + $0x20] sm:$0xff] %vm615, %v524
      %619 = vst.msk [vmem:[#allocation3 + $0x30] sm:$0xff] %vm615, %v526
      %620 = vst.msk [vmem:[#allocation3 + $0x40] sm:$0xff] %vm615, %v528
      %621 = vst.msk [vmem:[#allocation3 + $0x50] sm:$0xff] %vm615, %v530
      %622 = vst.msk [vmem:[#allocation3 + $0x60] sm:$0xff] %vm615, %v532
      %623 = vst.msk [vmem:[#allocation3 + $0x70] sm:$0xff] %vm615, %v534
      %624 = vst.msk [vmem:[#allocation3 + $0x80] sm:$0xff] %vm615, %v536
      %625 = vst.msk [vmem:[#allocation3 + $0x90] sm:$0xff] %vm615, %v538
      %626 = vst.msk [vmem:[#allocation3 + $0xa0] sm:$0xff] %vm615, %v540
      %627 = vst.msk [vmem:[#allocation3 + $0xb0] sm:$0xff] %vm615, %v542
      %628 = vst.msk [vmem:[#allocation3 + $0xc0] sm:$0xff] %vm615, %v544
      %629 = vst.msk [vmem:[#allocation3 + $0xd0] sm:$0xff] %vm615, %v546
      %630 = vst.msk [vmem:[#allocation3 + $0xe0] sm:$0xff] %vm615, %v548
      %631 = vst.msk [vmem:[#allocation3 + $0xf0] sm:$0xff] %vm615, %v550
      %632 = vst.msk [vmem:[#allocation3 + $0x100] sm:$0xff] %vm615, %v552
      %633 = vst.msk [vmem:[#allocation3 + $0x110] sm:$0xff] %vm615, %v554
      %634 = vst.msk [vmem:[#allocation3 + $0x120] sm:$0xff] %vm615, %v556
      %635 = vst.msk [vmem:[#allocation3 + $0x130] sm:$0xff] %vm615, %v558
      %636 = vst.msk [vmem:[#allocation3 + $0x140] sm:$0xff] %vm615, %v560
      %637 = vst.msk [vmem:[#allocation3 + $0x150] sm:$0xff] %vm615, %v562
      %638 = vst.msk [vmem:[#allocation3 + $0x160] sm:$0xff] %vm615, %v564
      %639 = vst.msk [vmem:[#allocation3 + $0x170] sm:$0xff] %vm615, %v566
      %640 = vst.msk [vmem:[#allocation3 + $0x180] sm:$0xff] %vm615, %v568
      %641 = vst.msk [vmem:[#allocation3 + $0x190] sm:$0xff] %vm615, %v570
      %642 = vst.msk [vmem:[#allocation3 + $0x1a0] sm:$0xff] %vm615, %v572
      %643 = vst.msk [vmem:[#allocation3 + $0x1b0] sm:$0xff] %vm615, %v574
      %644 = vst.msk [vmem:[#allocation3 + $0x1c0] sm:$0xff] %vm615, %v576
      %645 = vst.msk [vmem:[#allocation3 + $0x1d0] sm:$0xff] %vm615, %v578
      %646 = vst.msk [vmem:[#allocation3 + $0x1e0] sm:$0xff] %vm615, %v580
      %647 = vst.msk [vmem:[#allocation3 + $0x1f0] sm:$0xff] %vm615, %v582
      %650 = vrot.lane.b32.xlu0 %v423, 96
      %v651 = vpop.permute.xlu0 %650
      %652 = vrot.lane.b32.xlu0 %v424, 96
      %v653 = vpop.permute.xlu0 %652
      %654 = vrot.lane.b32.xlu0 %v425, 96
      %v655 = vpop.permute.xlu0 %654
      %656 = vrot.lane.b32.xlu0 %v426, 96
      %v657 = vpop.permute.xlu0 %656
      %658 = vrot.lane.b32.xlu0 %v427, 96
      %v659 = vpop.permute.xlu0 %658
      %660 = vrot.lane.b32.xlu0 %v428, 96
      %v661 = vpop.permute.xlu0 %660
      %662 = vrot.lane.b32.xlu0 %v429, 96
      %v663 = vpop.permute.xlu0 %662
      %664 = vrot.lane.b32.xlu0 %v430, 96
      %v665 = vpop.permute.xlu0 %664
      %666 = vrot.lane.b32.xlu0 %v431, 96
      %v667 = vpop.permute.xlu0 %666
      %668 = vrot.lane.b32.xlu0 %v432, 96
      %v669 = vpop.permute.xlu0 %668
      %670 = vrot.lane.b32.xlu0 %v433, 96
      %v671 = vpop.permute.xlu0 %670
      %672 = vrot.lane.b32.xlu0 %v434, 96
      %v673 = vpop.permute.xlu0 %672
      %674 = vrot.lane.b32.xlu0 %v435, 96
      %v675 = vpop.permute.xlu0 %674
      %676 = vrot.lane.b32.xlu0 %v436, 96
      %v677 = vpop.permute.xlu0 %676
      %678 = vrot.lane.b32.xlu0 %v437, 96
      %v679 = vpop.permute.xlu0 %678
      %680 = vrot.lane.b32.xlu0 %v438, 96
      %v681 = vpop.permute.xlu0 %680
      %682 = vrot.lane.b32.xlu0 %v439, 96
      %v683 = vpop.permute.xlu0 %682
      %684 = vrot.lane.b32.xlu0 %v440, 96
      %v685 = vpop.permute.xlu0 %684
      %686 = vrot.lane.b32.xlu0 %v441, 96
      %v687 = vpop.permute.xlu0 %686
      %688 = vrot.lane.b32.xlu0 %v442, 96
      %v689 = vpop.permute.xlu0 %688
      %690 = vrot.lane.b32.xlu0 %v443, 96
      %v691 = vpop.permute.xlu0 %690
      %692 = vrot.lane.b32.xlu0 %v444, 96
      %v693 = vpop.permute.xlu0 %692
      %694 = vrot.lane.b32.xlu0 %v445, 96
      %v695 = vpop.permute.xlu0 %694
      %696 = vrot.lane.b32.xlu0 %v446, 96
      %v697 = vpop.permute.xlu0 %696
      %698 = vrot.lane.b32.xlu0 %v447, 96
      %v699 = vpop.permute.xlu0 %698
      %700 = vrot.lane.b32.xlu0 %v448, 96
      %v701 = vpop.permute.xlu0 %700
      %702 = vrot.lane.b32.xlu0 %v449, 96
      %v703 = vpop.permute.xlu0 %702
      %704 = vrot.lane.b32.xlu0 %v450, 96
      %v705 = vpop.permute.xlu0 %704
      %706 = vrot.lane.b32.xlu0 %v451, 96
      %v707 = vpop.permute.xlu0 %706
      %708 = vrot.lane.b32.xlu0 %v452, 96
      %v709 = vpop.permute.xlu0 %708
      %710 = vrot.lane.b32.xlu0 %v453, 96
      %v711 = vpop.permute.xlu0 %710
      %712 = vrot.lane.b32.xlu0 %v454, 96
      %v713 = vpop.permute.xlu0 %712
      %vm746 = vcmask 917248
      %747 = vst.msk [vmem:[#allocation3] sm:$0xff] %vm746, %v651
      %748 = vst.msk [vmem:[#allocation3 + $0x10] sm:$0xff] %vm746, %v653
      %749 = vst.msk [vmem:[#allocation3 + $0x20] sm:$0xff] %vm746, %v655
      %750 = vst.msk [vmem:[#allocation3 + $0x30] sm:$0xff] %vm746, %v657
      %751 = vst.msk [vmem:[#allocation3 + $0x40] sm:$0xff] %vm746, %v659
      %752 = vst.msk [vmem:[#allocation3 + $0x50] sm:$0xff] %vm746, %v661
      %753 = vst.msk [vmem:[#allocation3 + $0x60] sm:$0xff] %vm746, %v663
      %754 = vst.msk [vmem:[#allocation3 + $0x70] sm:$0xff] %vm746, %v665
      %755 = vst.msk [vmem:[#allocation3 + $0x80] sm:$0xff] %vm746, %v667
      %756 = vst.msk [vmem:[#allocation3 + $0x90] sm:$0xff] %vm746, %v669
      %757 = vst.msk [vmem:[#allocation3 + $0xa0] sm:$0xff] %vm746, %v671
      %758 = vst.msk [vmem:[#allocation3 + $0xb0] sm:$0xff] %vm746, %v673
      %759 = vst.msk [vmem:[#allocation3 + $0xc0] sm:$0xff] %vm746, %v675
      %760 = vst.msk [vmem:[#allocation3 + $0xd0] sm:$0xff] %vm746, %v677
      %761 = vst.msk [vmem:[#allocation3 + $0xe0] sm:$0xff] %vm746, %v679
      %762 = vst.msk [vmem:[#allocation3 + $0xf0] sm:$0xff] %vm746, %v681
      %763 = vst.msk [vmem:[#allocation3 + $0x100] sm:$0xff] %vm746, %v683
      %764 = vst.msk [vmem:[#allocation3 + $0x110] sm:$0xff] %vm746, %v685
      %765 = vst.msk [vmem:[#allocation3 + $0x120] sm:$0xff] %vm746, %v687
      %766 = vst.msk [vmem:[#allocation3 + $0x130] sm:$0xff] %vm746, %v689
      %767 = vst.msk [vmem:[#allocation3 + $0x140] sm:$0xff] %vm746, %v691
      %768 = vst.msk [vmem:[#allocation3 + $0x150] sm:$0xff] %vm746, %v693
      %769 = vst.msk [vmem:[#allocation3 + $0x160] sm:$0xff] %vm746, %v695
      %770 = vst.msk [vmem:[#allocation3 + $0x170] sm:$0xff] %vm746, %v697
      %771 = vst.msk [vmem:[#allocation3 + $0x180] sm:$0xff] %vm746, %v699
      %772 = vst.msk [vmem:[#allocation3 + $0x190] sm:$0xff] %vm746, %v701
      %773 = vst.msk [vmem:[#allocation3 + $0x1a0] sm:$0xff] %vm746, %v703
      %774 = vst.msk [vmem:[#allocation3 + $0x1b0] sm:$0xff] %vm746, %v705
      %775 = vst.msk [vmem:[#allocation3 + $0x1c0] sm:$0xff] %vm746, %v707
      %776 = vst.msk [vmem:[#allocation3 + $0x1d0] sm:$0xff] %vm746, %v709
      %777 = vst.msk [vmem:[#allocation3 + $0x1e0] sm:$0xff] %vm746, %v711
      %778 = vst.msk [vmem:[#allocation3 + $0x1f0] sm:$0xff] %vm746, %v713
      %v779 = vld [vmem:[#allocation2 + $0x1] sm:$0xff]
      %v780 = vld [vmem:[#allocation2 + $0x9] sm:$0xff]
      %v781 = vld [vmem:[#allocation2 + $0x19] sm:$0xff]
      %v782 = vld [vmem:[#allocation2 + $0x21] sm:$0xff]
      %v783 = vld [vmem:[#allocation2 + $0x31] sm:$0xff]
      %v784 = vld [vmem:[#allocation2 + $0x39] sm:$0xff]
      %v785 = vld [vmem:[#allocation2 + $0x49] sm:$0xff]
      %v786 = vld [vmem:[#allocation2 + $0x51] sm:$0xff]
      %v787 = vld [vmem:[#allocation2 + $0x61] sm:$0xff]
      %v788 = vld [vmem:[#allocation2 + $0x69] sm:$0xff]
      %v789 = vld [vmem:[#allocation2 + $0x79] sm:$0xff]
      %v790 = vld [vmem:[#allocation2 + $0x81] sm:$0xff]
      %v791 = vld [vmem:[#allocation2 + $0x91] sm:$0xff]
      %v792 = vld [vmem:[#allocation2 + $0x99] sm:$0xff]
      %v793 = vld [vmem:[#allocation2 + $0xa9] sm:$0xff]
      %v794 = vld [vmem:[#allocation2 + $0xb1] sm:$0xff]
      %v795 = vld [vmem:[#allocation2 + $0xc1] sm:$0xff]
      %v796 = vld [vmem:[#allocation2 + $0xc9] sm:$0xff]
      %v797 = vld [vmem:[#allocation2 + $0xd9] sm:$0xff]
      %v798 = vld [vmem:[#allocation2 + $0xe1] sm:$0xff]
      %v799 = vld [vmem:[#allocation2 + $0xf1] sm:$0xff]
      %v800 = vld [vmem:[#allocation2 + $0xf9] sm:$0xff]
      %v801 = vld [vmem:[#allocation2 + $0x109] sm:$0xff]
      %v802 = vld [vmem:[#allocation2 + $0x111] sm:$0xff]
      %v803 = vld [vmem:[#allocation2 + $0x121] sm:$0xff]
      %v804 = vld [vmem:[#allocation2 + $0x129] sm:$0xff]
      %v805 = vld [vmem:[#allocation2 + $0x139] sm:$0xff]
      %v806 = vld [vmem:[#allocation2 + $0x141] sm:$0xff]
      %v807 = vld [vmem:[#allocation2 + $0x151] sm:$0xff]
      %v808 = vld [vmem:[#allocation2 + $0x159] sm:$0xff]
      %v809 = vld [vmem:[#allocation2 + $0x169] sm:$0xff]
      %v810 = vld [vmem:[#allocation2 + $0x171] sm:$0xff]
      %v811 = vld [vmem:[#allocation2 + $0x181] sm:$0xff]
      %v812 = vld [vmem:[#allocation2 + $0x189] sm:$0xff]
      %v813 = vld [vmem:[#allocation2 + $0x199] sm:$0xff]
      %v814 = vld [vmem:[#allocation2 + $0x1a1] sm:$0xff]
      %847 = vrot.lane.b32.xlu0 %v779, 16
      %v848 = vpop.permute.xlu0 %847
      %849 = vrot.lane.b32.xlu0 %v780, 16
      %v850 = vpop.permute.xlu0 %849
      %851 = vrot.lane.b32.xlu0 %v781, 16
      %v852 = vpop.permute.xlu0 %851
      %853 = vrot.lane.b32.xlu0 %v782, 16
      %v854 = vpop.permute.xlu0 %853
      %855 = vrot.lane.b32.xlu0 %v783, 16
      %v856 = vpop.permute.xlu0 %855
      %857 = vrot.lane.b32.xlu0 %v784, 16
      %v858 = vpop.permute.xlu0 %857
      %859 = vrot.lane.b32.xlu0 %v785, 16
      %v860 = vpop.permute.xlu0 %859
      %861 = vrot.lane.b32.xlu0 %v786, 16
      %v862 = vpop.permute.xlu0 %861
      %863 = vrot.lane.b32.xlu0 %v787, 16
      %v864 = vpop.permute.xlu0 %863
      %865 = vrot.lane.b32.xlu0 %v788, 16
      %v866 = vpop.permute.xlu0 %865
      %867 = vrot.lane.b32.xlu0 %v789, 16
      %v868 = vpop.permute.xlu0 %867
      %869 = vrot.lane.b32.xlu0 %v790, 16
      %v870 = vpop.permute.xlu0 %869
      %871 = vrot.lane.b32.xlu0 %v791, 16
      %v872 = vpop.permute.xlu0 %871
      %873 = vrot.lane.b32.xlu0 %v792, 16
      %v874 = vpop.permute.xlu0 %873
      %875 = vrot.lane.b32.xlu0 %v793, 16
      %v876 = vpop.permute.xlu0 %875
      %877 = vrot.lane.b32.xlu0 %v794, 16
      %v878 = vpop.permute.xlu0 %877
      %879 = vrot.lane.b32.xlu0 %v795, 16
      %v880 = vpop.permute.xlu0 %879
      %881 = vrot.lane.b32.xlu0 %v796, 16
      %v882 = vpop.permute.xlu0 %881
      %883 = vrot.lane.b32.xlu0 %v797, 16
      %v884 = vpop.permute.xlu0 %883
      %885 = vrot.lane.b32.xlu0 %v798, 16
      %v886 = vpop.permute.xlu0 %885
      %887 = vrot.lane.b32.xlu0 %v799, 16
      %v888 = vpop.permute.xlu0 %887
      %889 = vrot.lane.b32.xlu0 %v800, 16
      %v890 = vpop.permute.xlu0 %889
      %891 = vrot.lane.b32.xlu0 %v801, 16
      %v892 = vpop.permute.xlu0 %891
      %893 = vrot.lane.b32.xlu0 %v802, 16
      %v894 = vpop.permute.xlu0 %893
      %895 = vrot.lane.b32.xlu0 %v803, 16
      %v896 = vpop.permute.xlu0 %895
      %897 = vrot.lane.b32.xlu0 %v804, 16
      %v898 = vpop.permute.xlu0 %897
      %899 = vrot.lane.b32.xlu0 %v805, 16
      %v900 = vpop.permute.xlu0 %899
      %901 = vrot.lane.b32.xlu0 %v806, 16
      %v902 = vpop.permute.xlu0 %901
      %903 = vrot.lane.b32.xlu0 %v807, 16
      %v904 = vpop.permute.xlu0 %903
      %905 = vrot.lane.b32.xlu0 %v808, 16
      %v906 = vpop.permute.xlu0 %905
      %907 = vrot.lane.b32.xlu0 %v809, 16
      %v908 = vpop.permute.xlu0 %907
      %909 = vrot.lane.b32.xlu0 %v810, 16
      %v910 = vpop.permute.xlu0 %909
      %vm943 = vcmask 261248
      %944 = vst.msk [vmem:[#allocation3] sm:$0xff] %vm943, %v848
      %945 = vst.msk [vmem:[#allocation3 + $0x10] sm:$0xff] %vm943, %v850
      %946 = vst.msk [vmem:[#allocation3 + $0x20] sm:$0xff] %vm943, %v852
      %947 = vst.msk [vmem:[#allocation3 + $0x30] sm:$0xff] %vm943, %v854
      %948 = vst.msk [vmem:[#allocation3 + $0x40] sm:$0xff] %vm943, %v856
      %949 = vst.msk [vmem:[#allocation3 + $0x50] sm:$0xff] %vm943, %v858
      %950 = vst.msk [vmem:[#allocation3 + $0x60] sm:$0xff] %vm943, %v860
      %951 = vst.msk [vmem:[#allocation3 + $0x70] sm:$0xff] %vm943, %v862
      %952 = vst.msk [vmem:[#allocation3 + $0x80] sm:$0xff] %vm943, %v864
      %953 = vst.msk [vmem:[#allocation3 + $0x90] sm:$0xff] %vm943, %v866
      %954 = vst.msk [vmem:[#allocation3 + $0xa0] sm:$0xff] %vm943, %v868
      %955 = vst.msk [vmem:[#allocation3 + $0xb0] sm:$0xff] %vm943, %v870
      %956 = vst.msk [vmem:[#allocation3 + $0xc0] sm:$0xff] %vm943, %v872
      %957 = vst.msk [vmem:[#allocation3 + $0xd0] sm:$0xff] %vm943, %v874
      %958 = vst.msk [vmem:[#allocation3 + $0xe0] sm:$0xff] %vm943, %v876
      %959 = vst.msk [vmem:[#allocation3 + $0xf0] sm:$0xff] %vm943, %v878
      %960 = vst.msk [vmem:[#allocation3 + $0x100] sm:$0xff] %vm943, %v880
      %961 = vst.msk [vmem:[#allocation3 + $0x110] sm:$0xff] %vm943, %v882
      %962 = vst.msk [vmem:[#allocation3 + $0x120] sm:$0xff] %vm943, %v884
      %963 = vst.msk [vmem:[#allocation3 + $0x130] sm:$0xff] %vm943, %v886
      %964 = vst.msk [vmem:[#allocation3 + $0x140] sm:$0xff] %vm943, %v888
      %965 = vst.msk [vmem:[#allocation3 + $0x150] sm:$0xff] %vm943, %v890
      %966 = vst.msk [vmem:[#allocation3 + $0x160] sm:$0xff] %vm943, %v892
      %967 = vst.msk [vmem:[#allocation3 + $0x170] sm:$0xff] %vm943, %v894
      %968 = vst.msk [vmem:[#allocation3 + $0x180] sm:$0xff] %vm943, %v896
      %969 = vst.msk [vmem:[#allocation3 + $0x190] sm:$0xff] %vm943, %v898
      %970 = vst.msk [vmem:[#allocation3 + $0x1a0] sm:$0xff] %vm943, %v900
      %971 = vst.msk [vmem:[#allocation3 + $0x1b0] sm:$0xff] %vm943, %v902
      %972 = vst.msk [vmem:[#allocation3 + $0x1c0] sm:$0xff] %vm943, %v904
      %973 = vst.msk [vmem:[#allocation3 + $0x1d0] sm:$0xff] %vm943, %v906
      %974 = vst.msk [vmem:[#allocation3 + $0x1e0] sm:$0xff] %vm943, %v908
      %975 = vst.msk [vmem:[#allocation3 + $0x1f0] sm:$0xff] %vm943, %v910
      %978 = vrot.lane.b32.xlu0 %v781, 64
      %v979 = vpop.permute.xlu0 %978
      %980 = vrot.lane.b32.xlu0 %v782, 64
      %v981 = vpop.permute.xlu0 %980
      %982 = vrot.lane.b32.xlu0 %v783, 64
      %v983 = vpop.permute.xlu0 %982
      %984 = vrot.lane.b32.xlu0 %v784, 64
      %v985 = vpop.permute.xlu0 %984
      %986 = vrot.lane.b32.xlu0 %v785, 64
      %v987 = vpop.permute.xlu0 %986
      %988 = vrot.lane.b32.xlu0 %v786, 64
      %v989 = vpop.permute.xlu0 %988
      %990 = vrot.lane.b32.xlu0 %v787, 64
      %v991 = vpop.permute.xlu0 %990
      %992 = vrot.lane.b32.xlu0 %v788, 64
      %v993 = vpop.permute.xlu0 %992
      %994 = vrot.lane.b32.xlu0 %v789, 64
      %v995 = vpop.permute.xlu0 %994
      %996 = vrot.lane.b32.xlu0 %v790, 64
      %v997 = vpop.permute.xlu0 %996
      %998 = vrot.lane.b32.xlu0 %v791, 64
      %v999 = vpop.permute.xlu0 %998
      %1000 = vrot.lane.b32.xlu0 %v792, 64
      %v1001 = vpop.permute.xlu0 %1000
      %1002 = vrot.lane.b32.xlu0 %v793, 64
      %v1003 = vpop.permute.xlu0 %1002
      %1004 = vrot.lane.b32.xlu0 %v794, 64
      %v1005 = vpop.permute.xlu0 %1004
      %1006 = vrot.lane.b32.xlu0 %v795, 64
      %v1007 = vpop.permute.xlu0 %1006
      %1008 = vrot.lane.b32.xlu0 %v796, 64
      %v1009 = vpop.permute.xlu0 %1008
      %1010 = vrot.lane.b32.xlu0 %v797, 64
      %v1011 = vpop.permute.xlu0 %1010
      %1012 = vrot.lane.b32.xlu0 %v798, 64
      %v1013 = vpop.permute.xlu0 %1012
      %1014 = vrot.lane.b32.xlu0 %v799, 64
      %v1015 = vpop.permute.xlu0 %1014
      %1016 = vrot.lane.b32.xlu0 %v800, 64
      %v1017 = vpop.permute.xlu0 %1016
      %1018 = vrot.lane.b32.xlu0 %v801, 64
      %v1019 = vpop.permute.xlu0 %1018
      %1020 = vrot.lane.b32.xlu0 %v802, 64
      %v1021 = vpop.permute.xlu0 %1020
      %1022 = vrot.lane.b32.xlu0 %v803, 64
      %v1023 = vpop.permute.xlu0 %1022
      %1024 = vrot.lane.b32.xlu0 %v804, 64
      %v1025 = vpop.permute.xlu0 %1024
      %1026 = vrot.lane.b32.xlu0 %v805, 64
      %v1027 = vpop.permute.xlu0 %1026
      %1028 = vrot.lane.b32.xlu0 %v806, 64
      %v1029 = vpop.permute.xlu0 %1028
      %1030 = vrot.lane.b32.xlu0 %v807, 64
      %v1031 = vpop.permute.xlu0 %1030
      %1032 = vrot.lane.b32.xlu0 %v808, 64
      %v1033 = vpop.permute.xlu0 %1032
      %1034 = vrot.lane.b32.xlu0 %v809, 64
      %v1035 = vpop.permute.xlu0 %1034
      %1036 = vrot.lane.b32.xlu0 %v810, 64
      %v1037 = vpop.permute.xlu0 %1036
      %1038 = vrot.lane.b32.xlu0 %v811, 64
      %v1039 = vpop.permute.xlu0 %1038
      %1040 = vrot.lane.b32.xlu0 %v812, 64
      %v1041 = vpop.permute.xlu0 %1040
      %vm1074 = vcmask 654848
      %1075 = vst.msk [vmem:[#allocation3] sm:$0xff] %vm1074, %v979
      %1076 = vst.msk [vmem:[#allocation3 + $0x10] sm:$0xff] %vm1074, %v981
      %1077 = vst.msk [vmem:[#allocation3 + $0x20] sm:$0xff] %vm1074, %v983
      %1078 = vst.msk [vmem:[#allocation3 + $0x30] sm:$0xff] %vm1074, %v985
      %1079 = vst.msk [vmem:[#allocation3 + $0x40] sm:$0xff] %vm1074, %v987
      %1080 = vst.msk [vmem:[#allocation3 + $0x50] sm:$0xff] %vm1074, %v989
      %1081 = vst.msk [vmem:[#allocation3 + $0x60] sm:$0xff] %vm1074, %v991
      %1082 = vst.msk [vmem:[#allocation3 + $0x70] sm:$0xff] %vm1074, %v993
      %1083 = vst.msk [vmem:[#allocation3 + $0x80] sm:$0xff] %vm1074, %v995
      %1084 = vst.msk [vmem:[#allocation3 + $0x90] sm:$0xff] %vm1074, %v997
      %1085 = vst.msk [vmem:[#allocation3 + $0xa0] sm:$0xff] %vm1074, %v999
      %1086 = vst.msk [vmem:[#allocation3 + $0xb0] sm:$0xff] %vm1074, %v1001
      %1087 = vst.msk [vmem:[#allocation3 + $0xc0] sm:$0xff] %vm1074, %v1003
      %1088 = vst.msk [vmem:[#allocation3 + $0xd0] sm:$0xff] %vm1074, %v1005
      %1089 = vst.msk [vmem:[#allocation3 + $0xe0] sm:$0xff] %vm1074, %v1007
      %1090 = vst.msk [vmem:[#allocation3 + $0xf0] sm:$0xff] %vm1074, %v1009
      %1091 = vst.msk [vmem:[#allocation3 + $0x100] sm:$0xff] %vm1074, %v1011
      %1092 = vst.msk [vmem:[#allocation3 + $0x110] sm:$0xff] %vm1074, %v1013
      %1093 = vst.msk [vmem:[#allocation3 + $0x120] sm:$0xff] %vm1074, %v1015
      %1094 = vst.msk [vmem:[#allocation3 + $0x130] sm:$0xff] %vm1074, %v1017
      %1095 = vst.msk [vmem:[#allocation3 + $0x140] sm:$0xff] %vm1074, %v1019
      %1096 = vst.msk [vmem:[#allocation3 + $0x150] sm:$0xff] %vm1074, %v1021
      %1097 = vst.msk [vmem:[#allocation3 + $0x160] sm:$0xff] %vm1074, %v1023
      %1098 = vst.msk [vmem:[#allocation3 + $0x170] sm:$0xff] %vm1074, %v1025
      %1099 = vst.msk [vmem:[#allocation3 + $0x180] sm:$0xff] %vm1074, %v1027
      %1100 = vst.msk [vmem:[#allocation3 + $0x190] sm:$0xff] %vm1074, %v1029
      %1101 = vst.msk [vmem:[#allocation3 + $0x1a0] sm:$0xff] %vm1074, %v1031
      %1102 = vst.msk [vmem:[#allocation3 + $0x1b0] sm:$0xff] %vm1074, %v1033
      %1103 = vst.msk [vmem:[#allocation3 + $0x1c0] sm:$0xff] %vm1074, %v1035
      %1104 = vst.msk [vmem:[#allocation3 + $0x1d0] sm:$0xff] %vm1074, %v1037
      %1105 = vst.msk [vmem:[#allocation3 + $0x1e0] sm:$0xff] %vm1074, %v1039
      %1106 = vst.msk [vmem:[#allocation3 + $0x1f0] sm:$0xff] %vm1074, %v1041
      %1109 = vrot.lane.b32.xlu0 %v783, 112
      %v1110 = vpop.permute.xlu0 %1109
      %1111 = vrot.lane.b32.xlu0 %v784, 112
      %v1112 = vpop.permute.xlu0 %1111
      %1113 = vrot.lane.b32.xlu0 %v785, 112
      %v1114 = vpop.permute.xlu0 %1113
      %1115 = vrot.lane.b32.xlu0 %v786, 112
      %v1116 = vpop.permute.xlu0 %1115
      %1117 = vrot.lane.b32.xlu0 %v787, 112
      %v1118 = vpop.permute.xlu0 %1117
      %1119 = vrot.lane.b32.xlu0 %v788, 112
      %v1120 = vpop.permute.xlu0 %1119
      %1121 = vrot.lane.b32.xlu0 %v789, 112
      %v1122 = vpop.permute.xlu0 %1121
      %1123 = vrot.lane.b32.xlu0 %v790, 112
      %v1124 = vpop.permute.xlu0 %1123
      %1125 = vrot.lane.b32.xlu0 %v791, 112
      %v1126 = vpop.permute.xlu0 %1125
      %1127 = vrot.lane.b32.xlu0 %v792, 112
      %v1128 = vpop.permute.xlu0 %1127
      %1129 = vrot.lane.b32.xlu0 %v793, 112
      %v1130 = vpop.permute.xlu0 %1129
      %1131 = vrot.lane.b32.xlu0 %v794, 112
      %v1132 = vpop.permute.xlu0 %1131
      %1133 = vrot.lane.b32.xlu0 %v795, 112
      %v1134 = vpop.permute.xlu0 %1133
      %1135 = vrot.lane.b32.xlu0 %v796, 112
      %v1136 = vpop.permute.xlu0 %1135
      %1137 = vrot.lane.b32.xlu0 %v797, 112
      %v1138 = vpop.permute.xlu0 %1137
      %1139 = vrot.lane.b32.xlu0 %v798, 112
      %v1140 = vpop.permute.xlu0 %1139
      %1141 = vrot.lane.b32.xlu0 %v799, 112
      %v1142 = vpop.permute.xlu0 %1141
      %1143 = vrot.lane.b32.xlu0 %v800, 112
      %v1144 = vpop.permute.xlu0 %1143
      %1145 = vrot.lane.b32.xlu0 %v801, 112
      %v1146 = vpop.permute.xlu0 %1145
      %1147 = vrot.lane.b32.xlu0 %v802, 112
      %v1148 = vpop.permute.xlu0 %1147
      %1149 = vrot.lane.b32.xlu0 %v803, 112
      %v1150 = vpop.permute.xlu0 %1149
      %1151 = vrot.lane.b32.xlu0 %v804, 112
      %v1152 = vpop.permute.xlu0 %1151
      %1153 = vrot.lane.b32.xlu0 %v805, 112
      %v1154 = vpop.permute.xlu0 %1153
      %1155 = vrot.lane.b32.xlu0 %v806, 112
      %v1156 = vpop.permute.xlu0 %1155
      %1157 = vrot.lane.b32.xlu0 %v807, 112
      %v1158 = vpop.permute.xlu0 %1157
      %1159 = vrot.lane.b32.xlu0 %v808, 112
      %v1160 = vpop.permute.xlu0 %1159
      %1161 = vrot.lane.b32.xlu0 %v809, 112
      %v1162 = vpop.permute.xlu0 %1161
      %1163 = vrot.lane.b32.xlu0 %v810, 112
      %v1164 = vpop.permute.xlu0 %1163
      %1165 = vrot.lane.b32.xlu0 %v811, 112
      %v1166 = vpop.permute.xlu0 %1165
      %1167 = vrot.lane.b32.xlu0 %v812, 112
      %v1168 = vpop.permute.xlu0 %1167
      %1169 = vrot.lane.b32.xlu0 %v813, 112
      %v1170 = vpop.permute.xlu0 %1169
      %1171 = vrot.lane.b32.xlu0 %v814, 112
      %v1172 = vpop.permute.xlu0 %1171
      %vm1205 = vcmask 1048448
      %1206 = vst.msk [vmem:[#allocation3] sm:$0xff] %vm1205, %v1110
      %1207 = vst.msk [vmem:[#allocation3 + $0x10] sm:$0xff] %vm1205, %v1112
      %1208 = vst.msk [vmem:[#allocation3 + $0x20] sm:$0xff] %vm1205, %v1114
      %1209 = vst.msk [vmem:[#allocation3 + $0x30] sm:$0xff] %vm1205, %v1116
      %1210 = vst.msk [vmem:[#allocation3 + $0x40] sm:$0xff] %vm1205, %v1118
      %1211 = vst.msk [vmem:[#allocation3 + $0x50] sm:$0xff] %vm1205, %v1120
      %1212 = vst.msk [vmem:[#allocation3 + $0x60] sm:$0xff] %vm1205, %v1122
      %1213 = vst.msk [vmem:[#allocation3 + $0x70] sm:$0xff] %vm1205, %v1124
      %1214 = vst.msk [vmem:[#allocation3 + $0x80] sm:$0xff] %vm1205, %v1126
      %1215 = vst.msk [vmem:[#allocation3 + $0x90] sm:$0xff] %vm1205, %v1128
      %1216 = vst.msk [vmem:[#allocation3 + $0xa0] sm:$0xff] %vm1205, %v1130
      %1217 = vst.msk [vmem:[#allocation3 + $0xb0] sm:$0xff] %vm1205, %v1132
      %1218 = vst.msk [vmem:[#allocation3 + $0xc0] sm:$0xff] %vm1205, %v1134
      %1219 = vst.msk [vmem:[#allocation3 + $0xd0] sm:$0xff] %vm1205, %v1136
      %1220 = vst.msk [vmem:[#allocation3 + $0xe0] sm:$0xff] %vm1205, %v1138
      %1221 = vst.msk [vmem:[#allocation3 + $0xf0] sm:$0xff] %vm1205, %v1140
      %1222 = vst.msk [vmem:[#allocation3 + $0x100] sm:$0xff] %vm1205, %v1142
      %1223 = vst.msk [vmem:[#allocation3 + $0x110] sm:$0xff] %vm1205, %v1144
      %1224 = vst.msk [vmem:[#allocation3 + $0x120] sm:$0xff] %vm1205, %v1146
      %1225 = vst.msk [vmem:[#allocation3 + $0x130] sm:$0xff] %vm1205, %v1148
      %1226 = vst.msk [vmem:[#allocation3 + $0x140] sm:$0xff] %vm1205, %v1150
      %1227 = vst.msk [vmem:[#allocation3 + $0x150] sm:$0xff] %vm1205, %v1152
      %1228 = vst.msk [vmem:[#allocation3 + $0x160] sm:$0xff] %vm1205, %v1154
      %1229 = vst.msk [vmem:[#allocation3 + $0x170] sm:$0xff] %vm1205, %v1156
      %1230 = vst.msk [vmem:[#allocation3 + $0x180] sm:$0xff] %vm1205, %v1158
      %1231 = vst.msk [vmem:[#allocation3 + $0x190] sm:$0xff] %vm1205, %v1160
      %1232 = vst.msk [vmem:[#allocation3 + $0x1a0] sm:$0xff] %vm1205, %v1162
      %1233 = vst.msk [vmem:[#allocation3 + $0x1b0] sm:$0xff] %vm1205, %v1164
      %1234 = vst.msk [vmem:[#allocation3 + $0x1c0] sm:$0xff] %vm1205, %v1166
      %1235 = vst.msk [vmem:[#allocation3 + $0x1d0] sm:$0xff] %vm1205, %v1168
      %1236 = vst.msk [vmem:[#allocation3 + $0x1e0] sm:$0xff] %vm1205, %v1170
      %1237 = vst.msk [vmem:[#allocation3 + $0x1f0] sm:$0xff] %vm1205, %v1172
      %v1238 = vld [vmem:[#allocation2 + $0x2] sm:$0xff]
      %v1239 = vld [vmem:[#allocation2 + $0xa] sm:$0xff]
      %v1240 = vld [vmem:[#allocation2 + $0x1a] sm:$0xff]
      %v1241 = vld [vmem:[#allocation2 + $0x22] sm:$0xff]
      %v1242 = vld [vmem:[#allocation2 + $0x32] sm:$0xff]
      %v1243 = vld [vmem:[#allocation2 + $0x3a] sm:$0xff]
      %v1244 = vld [vmem:[#allocation2 + $0x4a] sm:$0xff]
      %v1245 = vld [vmem:[#allocation2 + $0x52] sm:$0xff]
      %v1246 = vld [vmem:[#allocation2 + $0x62] sm:$0xff]
      %v1247 = vld [vmem:[#allocation2 + $0x6a] sm:$0xff]
      %v1248 = vld [vmem:[#allocation2 + $0x7a] sm:$0xff]
      %v1249 = vld [vmem:[#allocation2 + $0x82] sm:$0xff]
      %v1250 = vld [vmem:[#allocation2 + $0x92] sm:$0xff]
      %v1251 = vld [vmem:[#allocation2 + $0x9a] sm:$0xff]
      %v1252 = vld [vmem:[#allocation2 + $0xaa] sm:$0xff]
      %v1253 = vld [vmem:[#allocation2 + $0xb2] sm:$0xff]
      %v1254 = vld [vmem:[#allocation2 + $0xc2] sm:$0xff]
      %v1255 = vld [vmem:[#allocation2 + $0xca] sm:$0xff]
      %v1256 = vld [vmem:[#allocation2 + $0xda] sm:$0xff]
      %v1257 = vld [vmem:[#allocation2 + $0xe2] sm:$0xff]
      %v1258 = vld [vmem:[#allocation2 + $0xf2] sm:$0xff]
      %v1259 = vld [vmem:[#allocation2 + $0xfa] sm:$0xff]
      %v1260 = vld [vmem:[#allocation2 + $0x10a] sm:$0xff]
      %v1261 = vld [vmem:[#allocation2 + $0x112] sm:$0xff]
      %v1262 = vld [vmem:[#allocation2 + $0x122] sm:$0xff]
      %v1263 = vld [vmem:[#allocation2 + $0x12a] sm:$0xff]
      %v1264 = vld [vmem:[#allocation2 + $0x13a] sm:$0xff]
      %v1265 = vld [vmem:[#allocation2 + $0x142] sm:$0xff]
      %v1266 = vld [vmem:[#allocation2 + $0x152] sm:$0xff]
      %v1267 = vld [vmem:[#allocation2 + $0x15a] sm:$0xff]
      %v1268 = vld [vmem:[#allocation2 + $0x16a] sm:$0xff]
      %v1269 = vld [vmem:[#allocation2 + $0x172] sm:$0xff]
      %v1270 = vld [vmem:[#allocation2 + $0x182] sm:$0xff]
      %v1271 = vld [vmem:[#allocation2 + $0x18a] sm:$0xff]
      %v1272 = vld [vmem:[#allocation2 + $0x19a] sm:$0xff]
      %v1273 = vld [vmem:[#allocation2 + $0x1a2] sm:$0xff]
      %1306 = vrot.lane.b32.xlu0 %v1238, 32
      %v1307 = vpop.permute.xlu0 %1306
      %1308 = vrot.lane.b32.xlu0 %v1239, 32
      %v1309 = vpop.permute.xlu0 %1308
      %1310 = vrot.lane.b32.xlu0 %v1240, 32
      %v1311 = vpop.permute.xlu0 %1310
      %1312 = vrot.lane.b32.xlu0 %v1241, 32
      %v1313 = vpop.permute.xlu0 %1312
      %1314 = vrot.lane.b32.xlu0 %v1242, 32
      %v1315 = vpop.permute.xlu0 %1314
      %1316 = vrot.lane.b32.xlu0 %v1243, 32
      %v1317 = vpop.permute.xlu0 %1316
      %1318 = vrot.lane.b32.xlu0 %v1244, 32
      %v1319 = vpop.permute.xlu0 %1318
      %1320 = vrot.lane.b32.xlu0 %v1245, 32
      %v1321 = vpop.permute.xlu0 %1320
      %1322 = vrot.lane.b32.xlu0 %v1246, 32
      %v1323 = vpop.permute.xlu0 %1322
      %1324 = vrot.lane.b32.xlu0 %v1247, 32
      %v1325 = vpop.permute.xlu0 %1324
      %1326 = vrot.lane.b32.xlu0 %v1248, 32
      %v1327 = vpop.permute.xlu0 %1326
      %1328 = vrot.lane.b32.xlu0 %v1249, 32
      %v1329 = vpop.permute.xlu0 %1328
      %1330 = vrot.lane.b32.xlu0 %v1250, 32
      %v1331 = vpop.permute.xlu0 %1330
      %1332 = vrot.lane.b32.xlu0 %v1251, 32
      %v1333 = vpop.permute.xlu0 %1332
      %1334 = vrot.lane.b32.xlu0 %v1252, 32
      %v1335 = vpop.permute.xlu0 %1334
      %1336 = vrot.lane.b32.xlu0 %v1253, 32
      %v1337 = vpop.permute.xlu0 %1336
      %1338 = vrot.lane.b32.xlu0 %v1254, 32
      %v1339 = vpop.permute.xlu0 %1338
      %1340 = vrot.lane.b32.xlu0 %v1255, 32
      %v1341 = vpop.permute.xlu0 %1340
      %1342 = vrot.lane.b32.xlu0 %v1256, 32
      %v1343 = vpop.permute.xlu0 %1342
      %1344 = vrot.lane.b32.xlu0 %v1257, 32
      %v1345 = vpop.permute.xlu0 %1344
      %1346 = vrot.lane.b32.xlu0 %v1258, 32
      %v1347 = vpop.permute.xlu0 %1346
      %1348 = vrot.lane.b32.xlu0 %v1259, 32
      %v1349 = vpop.permute.xlu0 %1348
      %1350 = vrot.lane.b32.xlu0 %v1260, 32
      %v1351 = vpop.permute.xlu0 %1350
      %1352 = vrot.lane.b32.xlu0 %v1261, 32
      %v1353 = vpop.permute.xlu0 %1352
      %1354 = vrot.lane.b32.xlu0 %v1262, 32
      %v1355 = vpop.permute.xlu0 %1354
      %1356 = vrot.lane.b32.xlu0 %v1263, 32
      %v1357 = vpop.permute.xlu0 %1356
      %1358 = vrot.lane.b32.xlu0 %v1264, 32
      %v1359 = vpop.permute.xlu0 %1358
      %1360 = vrot.lane.b32.xlu0 %v1265, 32
      %v1361 = vpop.permute.xlu0 %1360
      %1362 = vrot.lane.b32.xlu0 %v1266, 32
      %v1363 = vpop.permute.xlu0 %1362
      %1364 = vrot.lane.b32.xlu0 %v1267, 32
      %v1365 = vpop.permute.xlu0 %1364
      %1366 = vrot.lane.b32.xlu0 %v1268, 32
      %v1367 = vpop.permute.xlu0 %1366
      %1368 = vrot.lane.b32.xlu0 %v1269, 32
      %v1369 = vpop.permute.xlu0 %1368
      %vm1402 = vcmask 392448
      %1403 = vst.msk [vmem:[#allocation3] sm:$0xff] %vm1402, %v1307
      %1404 = vst.msk [vmem:[#allocation3 + $0x10] sm:$0xff] %vm1402, %v1309
      %1405 = vst.msk [vmem:[#allocation3 + $0x20] sm:$0xff] %vm1402, %v1311
      %1406 = vst.msk [vmem:[#allocation3 + $0x30] sm:$0xff] %vm1402, %v1313
      %1407 = vst.msk [vmem:[#allocation3 + $0x40] sm:$0xff] %vm1402, %v1315
      %1408 = vst.msk [vmem:[#allocation3 + $0x50] sm:$0xff] %vm1402, %v1317
      %1409 = vst.msk [vmem:[#allocation3 + $0x60] sm:$0xff] %vm1402, %v1319
      %1410 = vst.msk [vmem:[#allocation3 + $0x70] sm:$0xff] %vm1402, %v1321
      %1411 = vst.msk [vmem:[#allocation3 + $0x80] sm:$0xff] %vm1402, %v1323
      %1412 = vst.msk [vmem:[#allocation3 + $0x90] sm:$0xff] %vm1402, %v1325
      %1413 = vst.msk [vmem:[#allocation3 + $0xa0] sm:$0xff] %vm1402, %v1327
      %1414 = vst.msk [vmem:[#allocation3 + $0xb0] sm:$0xff] %vm1402, %v1329
      %1415 = vst.msk [vmem:[#allocation3 + $0xc0] sm:$0xff] %vm1402, %v1331
      %1416 = vst.msk [vmem:[#allocation3 + $0xd0] sm:$0xff] %vm1402, %v1333
      %1417 = vst.msk [vmem:[#allocation3 + $0xe0] sm:$0xff] %vm1402, %v1335
      %1418 = vst.msk [vmem:[#allocation3 + $0xf0] sm:$0xff] %vm1402, %v1337
      %1419 = vst.msk [vmem:[#allocation3 + $0x100] sm:$0xff] %vm1402, %v1339
      %1420 = vst.msk [vmem:[#allocation3 + $0x110] sm:$0xff] %vm1402, %v1341
      %1421 = vst.msk [vmem:[#allocation3 + $0x120] sm:$0xff] %vm1402, %v1343
      %1422 = vst.msk [vmem:[#allocation3 + $0x130] sm:$0xff] %vm1402, %v1345
      %1423 = vst.msk [vmem:[#allocation3 + $0x140] sm:$0xff] %vm1402, %v1347
      %1424 = vst.msk [vmem:[#allocation3 + $0x150] sm:$0xff] %vm1402, %v1349
      %1425 = vst.msk [vmem:[#allocation3 + $0x160] sm:$0xff] %vm1402, %v1351
      %1426 = vst.msk [vmem:[#allocation3 + $0x170] sm:$0xff] %vm1402, %v1353
      %1427 = vst.msk [vmem:[#allocation3 + $0x180] sm:$0xff] %vm1402, %v1355
      %1428 = vst.msk [vmem:[#allocation3 + $0x190] sm:$0xff] %vm1402, %v1357
      %1429 = vst.msk [vmem:[#allocation3 + $0x1a0] sm:$0xff] %vm1402, %v1359
      %1430 = vst.msk [vmem:[#allocation3 + $0x1b0] sm:$0xff] %vm1402, %v1361
      %1431 = vst.msk [vmem:[#allocation3 + $0x1c0] sm:$0xff] %vm1402, %v1363
      %1432 = vst.msk [vmem:[#allocation3 + $0x1d0] sm:$0xff] %vm1402, %v1365
      %1433 = vst.msk [vmem:[#allocation3 + $0x1e0] sm:$0xff] %vm1402, %v1367
      %1434 = vst.msk [vmem:[#allocation3 + $0x1f0] sm:$0xff] %vm1402, %v1369
      %1437 = vrot.lane.b32.xlu0 %v1240, 80
      %v1438 = vpop.permute.xlu0 %1437
      %1439 = vrot.lane.b32.xlu0 %v1241, 80
      %v1440 = vpop.permute.xlu0 %1439
      %1441 = vrot.lane.b32.xlu0 %v1242, 80
      %v1442 = vpop.permute.xlu0 %1441
      %1443 = vrot.lane.b32.xlu0 %v1243, 80
      %v1444 = vpop.permute.xlu0 %1443
      %1445 = vrot.lane.b32.xlu0 %v1244, 80
      %v1446 = vpop.permute.xlu0 %1445
      %1447 = vrot.lane.b32.xlu0 %v1245, 80
      %v1448 = vpop.permute.xlu0 %1447
      %1449 = vrot.lane.b32.xlu0 %v1246, 80
      %v1450 = vpop.permute.xlu0 %1449
      %1451 = vrot.lane.b32.xlu0 %v1247, 80
      %v1452 = vpop.permute.xlu0 %1451
      %1453 = vrot.lane.b32.xlu0 %v1248, 80
      %v1454 = vpop.permute.xlu0 %1453
      %1455 = vrot.lane.b32.xlu0 %v1249, 80
      %v1456 = vpop.permute.xlu0 %1455
      %1457 = vrot.lane.b32.xlu0 %v1250, 80
      %v1458 = vpop.permute.xlu0 %1457
      %1459 = vrot.lane.b32.xlu0 %v1251, 80
      %v1460 = vpop.permute.xlu0 %1459
      %1461 = vrot.lane.b32.xlu0 %v1252, 80
      %v1462 = vpop.permute.xlu0 %1461
      %1463 = vrot.lane.b32.xlu0 %v1253, 80
      %v1464 = vpop.permute.xlu0 %1463
      %1465 = vrot.lane.b32.xlu0 %v1254, 80
      %v1466 = vpop.permute.xlu0 %1465
      %1467 = vrot.lane.b32.xlu0 %v1255, 80
      %v1468 = vpop.permute.xlu0 %1467
      %1469 = vrot.lane.b32.xlu0 %v1256, 80
      %v1470 = vpop.permute.xlu0 %1469
      %1471 = vrot.lane.b32.xlu0 %v1257, 80
      %v1472 = vpop.permute.xlu0 %1471
      %1473 = vrot.lane.b32.xlu0 %v1258, 80
      %v1474 = vpop.permute.xlu0 %1473
      %1475 = vrot.lane.b32.xlu0 %v1259, 80
      %v1476 = vpop.permute.xlu0 %1475
      %1477 = vrot.lane.b32.xlu0 %v1260, 80
      %v1478 = vpop.permute.xlu0 %1477
      %1479 = vrot.lane.b32.xlu0 %v1261, 80
      %v1480 = vpop.permute.xlu0 %1479
      %1481 = vrot.lane.b32.xlu0 %v1262, 80
      %v1482 = vpop.permute.xlu0 %1481
      %1483 = vrot.lane.b32.xlu0 %v1263, 80
      %v1484 = vpop.permute.xlu0 %1483
      %1485 = vrot.lane.b32.xlu0 %v1264, 80
      %v1486 = vpop.permute.xlu0 %1485
      %1487 = vrot.lane.b32.xlu0 %v1265, 80
      %v1488 = vpop.permute.xlu0 %1487
      %1489 = vrot.lane.b32.xlu0 %v1266, 80
      %v1490 = vpop.permute.xlu0 %1489
      %1491 = vrot.lane.b32.xlu0 %v1267, 80
      %v1492 = vpop.permute.xlu0 %1491
      %1493 = vrot.lane.b32.xlu0 %v1268, 80
      %v1494 = vpop.permute.xlu0 %1493
      %1495 = vrot.lane.b32.xlu0 %v1269, 80
      %v1496 = vpop.permute.xlu0 %1495
      %1497 = vrot.lane.b32.xlu0 %v1270, 80
      %v1498 = vpop.permute.xlu0 %1497
      %1499 = vrot.lane.b32.xlu0 %v1271, 80
      %v1500 = vpop.permute.xlu0 %1499
      %vm1533 = vcmask 786048
      %1534 = vst.msk [vmem:[#allocation3] sm:$0xff] %vm1533, %v1438
      %1535 = vst.msk [vmem:[#allocation3 + $0x10] sm:$0xff] %vm1533, %v1440
      %1536 = vst.msk [vmem:[#allocation3 + $0x20] sm:$0xff] %vm1533, %v1442
      %1537 = vst.msk [vmem:[#allocation3 + $0x30] sm:$0xff] %vm1533, %v1444
      %1538 = vst.msk [vmem:[#allocation3 + $0x40] sm:$0xff] %vm1533, %v1446
      %1539 = vst.msk [vmem:[#allocation3 + $0x50] sm:$0xff] %vm1533, %v1448
      %1540 = vst.msk [vmem:[#allocation3 + $0x60] sm:$0xff] %vm1533, %v1450
      %1541 = vst.msk [vmem:[#allocation3 + $0x70] sm:$0xff] %vm1533, %v1452
      %1542 = vst.msk [vmem:[#allocation3 + $0x80] sm:$0xff] %vm1533, %v1454
      %1543 = vst.msk [vmem:[#allocation3 + $0x90] sm:$0xff] %vm1533, %v1456
      %1544 = vst.msk [vmem:[#allocation3 + $0xa0] sm:$0xff] %vm1533, %v1458
      %1545 = vst.msk [vmem:[#allocation3 + $0xb0] sm:$0xff] %vm1533, %v1460
      %1546 = vst.msk [vmem:[#allocation3 + $0xc0] sm:$0xff] %vm1533, %v1462
      %1547 = vst.msk [vmem:[#allocation3 + $0xd0] sm:$0xff] %vm1533, %v1464
      %1548 = vst.msk [vmem:[#allocation3 + $0xe0] sm:$0xff] %vm1533, %v1466
      %1549 = vst.msk [vmem:[#allocation3 + $0xf0] sm:$0xff] %vm1533, %v1468
      %1550 = vst.msk [vmem:[#allocation3 + $0x100] sm:$0xff] %vm1533, %v1470
      %1551 = vst.msk [vmem:[#allocation3 + $0x110] sm:$0xff] %vm1533, %v1472
      %1552 = vst.msk [vmem:[#allocation3 + $0x120] sm:$0xff] %vm1533, %v1474
      %1553 = vst.msk [vmem:[#allocation3 + $0x130] sm:$0xff] %vm1533, %v1476
      %1554 = vst.msk [vmem:[#allocation3 + $0x140] sm:$0xff] %vm1533, %v1478
      %1555 = vst.msk [vmem:[#allocation3 + $0x150] sm:$0xff] %vm1533, %v1480
      %1556 = vst.msk [vmem:[#allocation3 + $0x160] sm:$0xff] %vm1533, %v1482
      %1557 = vst.msk [vmem:[#allocation3 + $0x170] sm:$0xff] %vm1533, %v1484
      %1558 = vst.msk [vmem:[#allocation3 + $0x180] sm:$0xff] %vm1533, %v1486
      %1559 = vst.msk [vmem:[#allocation3 + $0x190] sm:$0xff] %vm1533, %v1488
      %1560 = vst.msk [vmem:[#allocation3 + $0x1a0] sm:$0xff] %vm1533, %v1490
      %1561 = vst.msk [vmem:[#allocation3 + $0x1b0] sm:$0xff] %vm1533, %v1492
      %1562 = vst.msk [vmem:[#allocation3 + $0x1c0] sm:$0xff] %vm1533, %v1494
      %1563 = vst.msk [vmem:[#allocation3 + $0x1d0] sm:$0xff] %vm1533, %v1496
      %1564 = vst.msk [vmem:[#allocation3 + $0x1e0] sm:$0xff] %vm1533, %v1498
      %1565 = vst.msk [vmem:[#allocation3 + $0x1f0] sm:$0xff] %vm1533, %v1500
      %1566 = vst.msk [vmem:[#allocation3 + $0x8] sm:$0xff] %vm198, %v1242
      %1567 = vst.msk [vmem:[#allocation3 + $0x18] sm:$0xff] %vm198, %v1243
      %1568 = vst.msk [vmem:[#allocation3 + $0x28] sm:$0xff] %vm198, %v1244
      %1569 = vst.msk [vmem:[#allocation3 + $0x38] sm:$0xff] %vm198, %v1245
      %1570 = vst.msk [vmem:[#allocation3 + $0x48] sm:$0xff] %vm198, %v1246
      %1571 = vst.msk [vmem:[#allocation3 + $0x58] sm:$0xff] %vm198, %v1247
      %1572 = vst.msk [vmem:[#allocation3 + $0x68] sm:$0xff] %vm198, %v1248
      %1573 = vst.msk [vmem:[#allocation3 + $0x78] sm:$0xff] %vm198, %v1249
      %1574 = vst.msk [vmem:[#allocation3 + $0x88] sm:$0xff] %vm198, %v1250
      %1575 = vst.msk [vmem:[#allocation3 + $0x98] sm:$0xff] %vm198, %v1251
      %1576 = vst.msk [vmem:[#allocation3 + $0xa8] sm:$0xff] %vm198, %v1252
      %1577 = vst.msk [vmem:[#allocation3 + $0xb8] sm:$0xff] %vm198, %v1253
      %1578 = vst.msk [vmem:[#allocation3 + $0xc8] sm:$0xff] %vm198, %v1254
      %1579 = vst.msk [vmem:[#allocation3 + $0xd8] sm:$0xff] %vm198, %v1255
      %1580 = vst.msk [vmem:[#allocation3 + $0xe8] sm:$0xff] %vm198, %v1256
      %1581 = vst.msk [vmem:[#allocation3 + $0xf8] sm:$0xff] %vm198, %v1257
      %1582 = vst.msk [vmem:[#allocation3 + $0x108] sm:$0xff] %vm198, %v1258
      %1583 = vst.msk [vmem:[#allocation3 + $0x118] sm:$0xff] %vm198, %v1259
      %1584 = vst.msk [vmem:[#allocation3 + $0x128] sm:$0xff] %vm198, %v1260
      %1585 = vst.msk [vmem:[#allocation3 + $0x138] sm:$0xff] %vm198, %v1261
      %1586 = vst.msk [vmem:[#allocation3 + $0x148] sm:$0xff] %vm198, %v1262
      %1587 = vst.msk [vmem:[#allocation3 + $0x158] sm:$0xff] %vm198, %v1263
      %1588 = vst.msk [vmem:[#allocation3 + $0x168] sm:$0xff] %vm198, %v1264
      %1589 = vst.msk [vmem:[#allocation3 + $0x178] sm:$0xff] %vm198, %v1265
      %1590 = vst.msk [vmem:[#allocation3 + $0x188] sm:$0xff] %vm198, %v1266
      %1591 = vst.msk [vmem:[#allocation3 + $0x198] sm:$0xff] %vm198, %v1267
      %1592 = vst.msk [vmem:[#allocation3 + $0x1a8] sm:$0xff] %vm198, %v1268
      %1593 = vst.msk [vmem:[#allocation3 + $0x1b8] sm:$0xff] %vm198, %v1269
      %1594 = vst.msk [vmem:[#allocation3 + $0x1c8] sm:$0xff] %vm198, %v1270
      %1595 = vst.msk [vmem:[#allocation3 + $0x1d8] sm:$0xff] %vm198, %v1271
      %1596 = vst.msk [vmem:[#allocation3 + $0x1e8] sm:$0xff] %vm198, %v1272
      %1597 = vst.msk [vmem:[#allocation3 + $0x1f8] sm:$0xff] %vm198, %v1273
      %v1598 = vld [vmem:[#allocation3] sm:$0xff]
      %v1599 = vld [vmem:[#allocation3 + $0x8] sm:$0xff]
      %v1600 = vld [vmem:[#allocation3 + $0x10] sm:$0xff]
      %v1601 = vld [vmem:[#allocation3 + $0x18] sm:$0xff]
      %v1602 = vld [vmem:[#allocation3 + $0x20] sm:$0xff]
      %v1603 = vld [vmem:[#allocation3 + $0x28] sm:$0xff]
      %v1604 = vld [vmem:[#allocation3 + $0x30] sm:$0xff]
      %v1605 = vld [vmem:[#allocation3 + $0x38] sm:$0xff]
      %v1606 = vld [vmem:[#allocation3 + $0x40] sm:$0xff]
      %v1607 = vld [vmem:[#allocation3 + $0x48] sm:$0xff]
      %v1608 = vld [vmem:[#allocation3 + $0x50] sm:$0xff]
      %v1609 = vld [vmem:[#allocation3 + $0x58] sm:$0xff]
      %v1610 = vld [vmem:[#allocation3 + $0x60] sm:$0xff]
      %v1611 = vld [vmem:[#allocation3 + $0x68] sm:$0xff]
      %v1612 = vld [vmem:[#allocation3 + $0x70] sm:$0xff]
      %v1613 = vld [vmem:[#allocation3 + $0x78] sm:$0xff]
      %v1614 = vld [vmem:[#allocation3 + $0x80] sm:$0xff]
      %v1615 = vld [vmem:[#allocation3 + $0x88] sm:$0xff]
      %v1616 = vld [vmem:[#allocation3 + $0x90] sm:$0xff]
      %v1617 = vld [vmem:[#allocation3 + $0x98] sm:$0xff]
      %v1618 = vld [vmem:[#allocation3 + $0xa0] sm:$0xff]
      %v1619 = vld [vmem:[#allocation3 + $0xa8] sm:$0xff]
      %v1620 = vld [vmem:[#allocation3 + $0xb0] sm:$0xff]
      %v1621 = vld [vmem:[#allocation3 + $0xb8] sm:$0xff]
      %v1622 = vld [vmem:[#allocation3 + $0xc0] sm:$0xff]
      %v1623 = vld [vmem:[#allocation3 + $0xc8] sm:$0xff]
      %v1624 = vld [vmem:[#allocation3 + $0xd0] sm:$0xff]
      %v1625 = vld [vmem:[#allocation3 + $0xd8] sm:$0xff]
      %v1626 = vld [vmem:[#allocation3 + $0xe0] sm:$0xff]
      %v1627 = vld [vmem:[#allocation3 + $0xe8] sm:$0xff]
      %v1628 = vld [vmem:[#allocation3 + $0xf0] sm:$0xff]
      %v1629 = vld [vmem:[#allocation3 + $0xf8] sm:$0xff]
      %v1630 = vld [vmem:[#allocation3 + $0x100] sm:$0xff]
      %v1631 = vld [vmem:[#allocation3 + $0x108] sm:$0xff]
      %v1632 = vld [vmem:[#allocation3 + $0x110] sm:$0xff]
      %v1633 = vld [vmem:[#allocation3 + $0x118] sm:$0xff]
      %v1634 = vld [vmem:[#allocation3 + $0x120] sm:$0xff]
      %v1635 = vld [vmem:[#allocation3 + $0x128] sm:$0xff]
      %v1636 = vld [vmem:[#allocation3 + $0x130] sm:$0xff]
      %v1637 = vld [vmem:[#allocation3 + $0x138] sm:$0xff]
      %v1638 = vld [vmem:[#allocation3 + $0x140] sm:$0xff]
      %v1639 = vld [vmem:[#allocation3 + $0x148] sm:$0xff]
      %v1640 = vld [vmem:[#allocation3 + $0x150] sm:$0xff]
      %v1641 = vld [vmem:[#allocation3 + $0x158] sm:$0xff]
      %v1642 = vld [vmem:[#allocation3 + $0x160] sm:$0xff]
      %v1643 = vld [vmem:[#allocation3 + $0x168] sm:$0xff]
      %v1644 = vld [vmem:[#allocation3 + $0x170] sm:$0xff]
      %v1645 = vld [vmem:[#allocation3 + $0x178] sm:$0xff]
      %v1646 = vld [vmem:[#allocation3 + $0x180] sm:$0xff]
      %v1647 = vld [vmem:[#allocation3 + $0x188] sm:$0xff]
      %v1648 = vld [vmem:[#allocation3 + $0x190] sm:$0xff]
      %v1649 = vld [vmem:[#allocation3 + $0x198] sm:$0xff]
      %v1650 = vld [vmem:[#allocation3 + $0x1a0] sm:$0xff]
      %v1651 = vld [vmem:[#allocation3 + $0x1a8] sm:$0xff]
      %v1652 = vld [vmem:[#allocation3 + $0x1b0] sm:$0xff]
      %v1653 = vld [vmem:[#allocation3 + $0x1b8] sm:$0xff]
      %v1654 = vld [vmem:[#allocation3 + $0x1c0] sm:$0xff]
      %v1655 = vld [vmem:[#allocation3 + $0x1c8] sm:$0xff]
      %v1656 = vld [vmem:[#allocation3 + $0x1d0] sm:$0xff]
      %v1657 = vld [vmem:[#allocation3 + $0x1d8] sm:$0xff]
      %v1658 = vld [vmem:[#allocation3 + $0x1e0] sm:$0xff]
      %v1659 = vld [vmem:[#allocation3 + $0x1e8] sm:$0xff]
      %v1660 = vld [vmem:[#allocation3 + $0x1f0] sm:$0xff]
      %v1661 = vld [vmem:[#allocation3 + $0x1f8] sm:$0xff]
      %v1662 = vld [vmem:[%s3] sm:$0xff]
      %v1663 = vld [vmem:[%s3 + $0x8] sm:$0xff]
      %v1664 = vld [vmem:[%s3 + $0x10] sm:$0xff]
      %v1665 = vld [vmem:[%s3 + $0x18] sm:$0xff]
      %v1666 = vld [vmem:[%s3 + $0x20] sm:$0xff]
      %v1667 = vld [vmem:[%s3 + $0x28] sm:$0xff]
      %v1668 = vld [vmem:[%s3 + $0x30] sm:$0xff]
      %v1669 = vld [vmem:[%s3 + $0x38] sm:$0xff]
      %v1670 = vld [vmem:[%s3 + $0x40] sm:$0xff]
      %v1671 = vld [vmem:[%s3 + $0x48] sm:$0xff]
      %v1672 = vld [vmem:[%s3 + $0x50] sm:$0xff]
      %v1673 = vld [vmem:[%s3 + $0x58] sm:$0xff]
      %v1674 = vld [vmem:[%s3 + $0x60] sm:$0xff]
      %v1675 = vld [vmem:[%s3 + $0x68] sm:$0xff]
      %v1676 = vld [vmem:[%s3 + $0x70] sm:$0xff]
      %v1677 = vld [vmem:[%s3 + $0x78] sm:$0xff]
      %v1678 = vld [vmem:[%s3 + $0x80] sm:$0xff]
      %v1679 = vld [vmem:[%s3 + $0x88] sm:$0xff]
      %v1681 = vsel %vm198, %v1599, 0
      %v1684 = vsel %vm198, %v1601, 0
      %v1687 = vsel %vm198, %v1603, 0
      %v1690 = vsel %vm198, %v1605, 0
      %v1693 = vsel %vm198, %v1607, 0
      %v1696 = vsel %vm198, %v1609, 0
      %v1699 = vsel %vm198, %v1611, 0
      %v1702 = vsel %vm198, %v1613, 0
      %v1705 = vsel %vm198, %v1615, 0
      %v1708 = vsel %vm198, %v1617, 0
      %v1711 = vsel %vm198, %v1619, 0
      %v1714 = vsel %vm198, %v1621, 0
      %v1717 = vsel %vm198, %v1623, 0
      %v1720 = vsel %vm198, %v1625, 0
      %v1723 = vsel %vm198, %v1627, 0
      %v1726 = vsel %vm198, %v1629, 0
      %v1729 = vsel %vm198, %v1631, 0
      %v1732 = vsel %vm198, %v1633, 0
      %v1735 = vsel %vm198, %v1635, 0
      %v1738 = vsel %vm198, %v1637, 0
      %v1741 = vsel %vm198, %v1639, 0
      %v1744 = vsel %vm198, %v1641, 0
      %v1747 = vsel %vm198, %v1643, 0
      %v1750 = vsel %vm198, %v1645, 0
      %v1753 = vsel %vm198, %v1647, 0
      %v1756 = vsel %vm198, %v1649, 0
      %v1759 = vsel %vm198, %v1651, 0
      %v1762 = vsel %vm198, %v1653, 0
      %v1765 = vsel %vm198, %v1655, 0
      %v1768 = vsel %vm198, %v1657, 0
      %v1771 = vsel %vm198, %v1659, 0
      %v1774 = vsel %vm198, %v1661, 0
      %1776 = vmatprep.subr.mxu0 0.0
      %1777 = vmatpush1.msra.mxu0 %v1662
      %1778 = vmatprep.subr.mxu0 0.0
      %1779 = vmatpush1.msra.mxu0 %v1663
      %1780 = vmatprep.subr.mxu0 0.0
      %1781 = vmatpush1.msra.mxu0 %v1664
      %1782 = vmatprep.subr.mxu0 0.0
      %1783 = vmatpush1.msra.mxu0 %v1665
      %1784 = vmatprep.subr.mxu0 0.0
      %1785 = vmatpush1.msra.mxu0 %v1666
      %1786 = vmatprep.subr.mxu0 0.0
      %1787 = vmatpush1.msra.mxu0 %v1667
      %1788 = vmatprep.subr.mxu0 0.0
      %1789 = vmatpush1.msra.mxu0 %v1668
      %1790 = vmatprep.subr.mxu0 0.0
      %1791 = vmatpush1.msra.mxu0 %v1669
      %1792 = vmatprep.subr.mxu0 0.0
      %1793 = vmatpush1.msra.mxu0 %v1670
      %1794 = vmatprep.subr.mxu0 0.0
      %1795 = vmatpush1.msra.mxu0 %v1671
      %1796 = vmatprep.subr.mxu0 0.0
      %1797 = vmatpush1.msra.mxu0 %v1672
      %1798 = vmatprep.subr.mxu0 0.0
      %1799 = vmatpush1.msra.mxu0 %v1673
      %1800 = vmatprep.subr.mxu0 0.0
      %1801 = vmatpush1.msra.mxu0 %v1674
      %1802 = vmatprep.subr.mxu0 0.0
      %1803 = vmatpush1.msra.mxu0 %v1675
      %1804 = vmatprep.subr.mxu0 0.0
      %1805 = vmatpush1.msra.mxu0 %v1676
      %1806 = vmatprep.subr.mxu0 0.0
      %1807 = vmatpush1.msra.mxu0 %v1677
      %1808 = vmatprep.subr.mxu0 0.0
      %1809 = vmatpush1.msra.mxu0 %v1678
      %1810 = vmatprep.subr.mxu0 0.0
      %1811 = vmatpush1.msra.mxu0 %v1679
      %1812 = vmatprep.subr.mxu0 0.0
      %1813 = vmatpush1.msra.mxu0 0.0
      %1814 = vmatprep.subr.mxu0 0.0
      %1815 = vmatpush1.msra.mxu0 0.0
      %1816 = vmatprep.subr.mxu0 0.0
      %1817 = vmatpush1.msra.mxu0 0.0
      %1818 = vmatprep.subr.mxu0 0.0
      %1819 = vmatpush1.msra.mxu0 0.0
      %1820 = vmatprep.subr.mxu0 0.0
      %1821 = vmatpush1.msra.mxu0 0.0
      %1822 = vmatprep.subr.mxu0 0.0
      %1823 = vmatpush1.msra.mxu0 0.0
      %1824 = vmatprep.subr.mxu0 0.0
      %1825 = vmatpush1.msra.mxu0 0.0
      %1826 = vmatprep.subr.mxu0 0.0
      %1827 = vmatpush1.msra.mxu0 0.0
      %1828 = vmatprep.subr.mxu0 0.0
      %1829 = vmatpush1.msra.mxu0 0.0
      %1830 = vmatprep.subr.mxu0 0.0
      %1831 = vmatpush1.msra.mxu0 0.0
      %1832 = vmatprep.subr.mxu0 0.0
      %1833 = vmatpush1.msra.mxu0 0.0
      %1834 = vmatprep.subr.mxu0 0.0
      %1835 = vmatpush1.msra.mxu0 0.0
      %1836 = vmatprep.subr.mxu0 0.0
      %1837 = vmatpush1.msra.mxu0 0.0
      %1838 = vmatprep.subr.mxu0 0.0
      %1839 = vmatpush1.msra.mxu0 0.0
      %1840 = vmatprep.mubr.f32.mxu0 %v1681
      %1841 = vmatmul.mubr.f32.gmra.mrb[0].mxu0 %v1598
      %v1842 = vpop.f32.mrb[0].mxu0
      %v1843 = vadd.f32 0.0, %v1842
      %v1844 = vpop.f32.mrb[0].mxu0
      %1845 = vmatprep.mubr.f32.mxu0 %v1684
      %1846 = vmatmul.mubr.f32.gmra.mrb[0].mxu0 %v1600
      %v1847 = vpop.f32.mrb[0].mxu0
      %v1848 = vadd.f32 0.0, %v1847
      %v1849 = vpop.f32.mrb[0].mxu0
      %1850 = vmatprep.mubr.f32.mxu0 %v1687
      %1851 = vmatmul.mubr.f32.gmra.mrb[0].mxu0 %v1602
      %v1852 = vpop.f32.mrb[0].mxu0
      %v1853 = vadd.f32 0.0, %v1852
      %v1854 = vpop.f32.mrb[0].mxu0
      %1855 = vmatprep.mubr.f32.mxu0 %v1690
      %1856 = vmatmul.mubr.f32.gmra.mrb[0].mxu0 %v1604
      %v1857 = vpop.f32.mrb[0].mxu0
      %v1858 = vadd.f32 0.0, %v1857
      %v1859 = vpop.f32.mrb[0].mxu0
      %1860 = vmatprep.mubr.f32.mxu0 %v1693
      %1861 = vmatmul.mubr.f32.gmra.mrb[0].mxu0 %v1606
      %v1862 = vpop.f32.mrb[0].mxu0
      %v1863 = vadd.f32 0.0, %v1862
      %v1864 = vpop.f32.mrb[0].mxu0
      %1865 = vmatprep.mubr.f32.mxu0 %v1696
      %1866 = vmatmul.mubr.f32.gmra.mrb[0].mxu0 %v1608
      %v1867 = vpop.f32.mrb[0].mxu0
      %v1868 = vadd.f32 0.0, %v1867
      %v1869 = vpop.f32.mrb[0].mxu0
      %1870 = vmatprep.mubr.f32.mxu0 %v1699
      %1871 = vmatmul.mubr.f32.gmra.mrb[0].mxu0 %v1610
      %v1872 = vpop.f32.mrb[0].mxu0
      %v1873 = vadd.f32 0.0, %v1872
      %v1874 = vpop.f32.mrb[0].mxu0
      %1875 = vmatprep.mubr.f32.mxu0 %v1702
      %1876 = vmatmul.mubr.f32.gmra.mrb[0].mxu0 %v1612
      %v1877 = vpop.f32.mrb[0].mxu0
      %v1878 = vadd.f32 0.0, %v1877
      %v1879 = vpop.f32.mrb[0].mxu0
      %1880 = vmatprep.mubr.f32.mxu0 %v1705
      %1881 = vmatmul.mubr.f32.gmra.mrb[0].mxu0 %v1614
      %v1882 = vpop.f32.mrb[0].mxu0
      %v1883 = vadd.f32 0.0, %v1882
      %v1884 = vpop.f32.mrb[0].mxu0
      %1885 = vmatprep.mubr.f32.mxu0 %v1708
      %1886 = vmatmul.mubr.f32.gmra.mrb[0].mxu0 %v1616
      %v1887 = vpop.f32.mrb[0].mxu0
      %v1888 = vadd.f32 0.0, %v1887
      %v1889 = vpop.f32.mrb[0].mxu0
      %1890 = vmatprep.mubr.f32.mxu0 %v1711
      %1891 = vmatmul.mubr.f32.gmra.mrb[0].mxu0 %v1618
      %v1892 = vpop.f32.mrb[0].mxu0
      %v1893 = vadd.f32 0.0, %v1892
      %v1894 = vpop.f32.mrb[0].mxu0
      %1895 = vmatprep.mubr.f32.mxu0 %v1714
      %1896 = vmatmul.mubr.f32.gmra.mrb[0].mxu0 %v1620
      %v1897 = vpop.f32.mrb[0].mxu0
      %v1898 = vadd.f32 0.0, %v1897
      %v1899 = vpop.f32.mrb[0].mxu0
      %1900 = vmatprep.mubr.f32.mxu0 %v1717
      %1901 = vmatmul.mubr.f32.gmra.mrb[0].mxu0 %v1622
      %v1902 = vpop.f32.mrb[0].mxu0
      %v1903 = vadd.f32 0.0, %v1902
      %v1904 = vpop.f32.mrb[0].mxu0
      %1905 = vmatprep.mubr.f32.mxu0 %v1720
      %1906 = vmatmul.mubr.f32.gmra.mrb[0].mxu0 %v1624
      %v1907 = vpop.f32.mrb[0].mxu0
      %v1908 = vadd.f32 0.0, %v1907
      %v1909 = vpop.f32.mrb[0].mxu0
      %1910 = vmatprep.mubr.f32.mxu0 %v1723
      %1911 = vmatmul.mubr.f32.gmra.mrb[0].mxu0 %v1626
      %v1912 = vpop.f32.mrb[0].mxu0
      %v1913 = vadd.f32 0.0, %v1912
      %v1914 = vpop.f32.mrb[0].mxu0
      %1915 = vmatprep.mubr.f32.mxu0 %v1726
      %1916 = vmatmul.mubr.f32.gmra.mrb[0].mxu0 %v1628
      %v1917 = vpop.f32.mrb[0].mxu0
      %v1918 = vadd.f32 0.0, %v1917
      %v1919 = vpop.f32.mrb[0].mxu0
      %1920 = vmatprep.mubr.f32.mxu0 %v1729
      %1921 = vmatmul.mubr.f32.gmra.mrb[0].mxu0 %v1630
      %v1922 = vpop.f32.mrb[0].mxu0
      %v1923 = vadd.f32 0.0, %v1922
      %v1924 = vpop.f32.mrb[0].mxu0
      %1925 = vmatprep.mubr.f32.mxu0 %v1732
      %1926 = vmatmul.mubr.f32.gmra.mrb[0].mxu0 %v1632
      %v1927 = vpop.f32.mrb[0].mxu0
      %v1928 = vadd.f32 0.0, %v1927
      %v1929 = vpop.f32.mrb[0].mxu0
      %1930 = vmatprep.mubr.f32.mxu0 %v1735
      %1931 = vmatmul.mubr.f32.gmra.mrb[0].mxu0 %v1634
      %v1932 = vpop.f32.mrb[0].mxu0
      %v1933 = vadd.f32 0.0, %v1932
      %v1934 = vpop.f32.mrb[0].mxu0
      %1935 = vmatprep.mubr.f32.mxu0 %v1738
      %1936 = vmatmul.mubr.f32.gmra.mrb[0].mxu0 %v1636
      %v1937 = vpop.f32.mrb[0].mxu0
      %v1938 = vadd.f32 0.0, %v1937
      %v1939 = vpop.f32.mrb[0].mxu0
      %1940 = vmatprep.mubr.f32.mxu0 %v1741
      %1941 = vmatmul.mubr.f32.gmra.mrb[0].mxu0 %v1638
      %v1942 = vpop.f32.mrb[0].mxu0
      %v1943 = vadd.f32 0.0, %v1942
      %v1944 = vpop.f32.mrb[0].mxu0
      %1945 = vmatprep.mubr.f32.mxu0 %v1744
      %1946 = vmatmul.mubr.f32.gmra.mrb[0].mxu0 %v1640
      %v1947 = vpop.f32.mrb[0].mxu0
      %v1948 = vadd.f32 0.0, %v1947
      %v1949 = vpop.f32.mrb[0].mxu0
      %1950 = vmatprep.mubr.f32.mxu0 %v1747
      %1951 = vmatmul.mubr.f32.gmra.mrb[0].mxu0 %v1642
      %v1952 = vpop.f32.mrb[0].mxu0
      %v1953 = vadd.f32 0.0, %v1952
      %v1954 = vpop.f32.mrb[0].mxu0
      %1955 = vmatprep.mubr.f32.mxu0 %v1750
      %1956 = vmatmul.mubr.f32.gmra.mrb[0].mxu0 %v1644
      %v1957 = vpop.f32.mrb[0].mxu0
      %v1958 = vadd.f32 0.0, %v1957
      %v1959 = vpop.f32.mrb[0].mxu0
      %1960 = vmatprep.mubr.f32.mxu0 %v1753
      %1961 = vmatmul.mubr.f32.gmra.mrb[0].mxu0 %v1646
      %v1962 = vpop.f32.mrb[0].mxu0
      %v1963 = vadd.f32 0.0, %v1962
      %v1964 = vpop.f32.mrb[0].mxu0
      %1965 = vmatprep.mubr.f32.mxu0 %v1756
      %1966 = vmatmul.mubr.f32.gmra.mrb[0].mxu0 %v1648
      %v1967 = vpop.f32.mrb[0].mxu0
      %v1968 = vadd.f32 0.0, %v1967
      %v1969 = vpop.f32.mrb[0].mxu0
      %1970 = vmatprep.mubr.f32.mxu0 %v1759
      %1971 = vmatmul.mubr.f32.gmra.mrb[0].mxu0 %v1650
      %v1972 = vpop.f32.mrb[0].mxu0
      %v1973 = vadd.f32 0.0, %v1972
      %v1974 = vpop.f32.mrb[0].mxu0
      %1975 = vmatprep.mubr.f32.mxu0 %v1762
      %1976 = vmatmul.mubr.f32.gmra.mrb[0].mxu0 %v1652
      %v1977 = vpop.f32.mrb[0].mxu0
      %v1978 = vadd.f32 0.0, %v1977
      %v1979 = vpop.f32.mrb[0].mxu0
      %1980 = vmatprep.mubr.f32.mxu0 %v1765
      %1981 = vmatmul.mubr.f32.gmra.mrb[0].mxu0 %v1654
      %v1982 = vpop.f32.mrb[0].mxu0
      %v1983 = vadd.f32 0.0, %v1982
      %v1984 = vpop.f32.mrb[0].mxu0
      %1985 = vmatprep.mubr.f32.mxu0 %v1768
      %1986 = vmatmul.mubr.f32.gmra.mrb[0].mxu0 %v1656
      %v1987 = vpop.f32.mrb[0].mxu0
      %v1988 = vadd.f32 0.0, %v1987
      %v1989 = vpop.f32.mrb[0].mxu0
      %1990 = vmatprep.mubr.f32.mxu0 %v1771
      %1991 = vmatmul.mubr.f32.gmra.mrb[0].mxu0 %v1658
      %v1992 = vpop.f32.mrb[0].mxu0
      %v1993 = vadd.f32 0.0, %v1992
      %v1994 = vpop.f32.mrb[0].mxu0
      %1995 = vmatprep.mubr.f32.mxu0 %v1774
      %1996 = vmatmul.mubr.f32.gmra.mrb[0].mxu0 %v1660
      %v1997 = vpop.f32.mrb[0].mxu0
      %v1998 = vadd.f32 0.0, %v1997
      %v1999 = vpop.f32.mrb[0].mxu0
      %2000 = vdwg.mxu0
      %2001 = vxpose.xlu0.b32.start [1/16] %v1843, 128
      %2002 = vxpose.xlu0.b32.cont [2/16] %v1848, 128
      %2003 = vxpose.xlu0.b32.cont [3/16] %v1853, 128
      %2004 = vxpose.xlu0.b32.cont [4/16] %v1858, 128
      %2005 = vxpose.xlu0.b32.cont [5/16] %v1863, 128
      %2006 = vxpose.xlu0.b32.cont [6/16] %v1868, 128
      %2007 = vxpose.xlu0.b32.cont [7/16] %v1873, 128
      %2008 = vxpose.xlu0.b32.cont [8/16] %v1878, 128
      %2009 = vxpose.xlu0.b32.cont [9/16] %v1883, 128
      %2010 = vxpose.xlu0.b32.cont [10/16] %v1888, 128
      %2011 = vxpose.xlu0.b32.cont [11/16] %v1893, 128
      %2012 = vxpose.xlu0.b32.cont [12/16] %v1898, 128
      %2013 = vxpose.xlu0.b32.cont [13/16] %v1903, 128
      %2014 = vxpose.xlu0.b32.cont [14/16] %v1908, 128
      %2015 = vxpose.xlu0.b32.cont [15/16] %v1913, 128
      %2016 = vxpose.xlu0.b32.end [16/16] %v1918, 128
      %v2017 = vpop.trf.xlu0
      %v2018 = vpop.trf.xlu0
      %v2019 = vpop.trf.xlu0
      %v2020 = vpop.trf.xlu0
      %v2021 = vpop.trf.xlu0
      %v2022 = vpop.trf.xlu0
      %v2023 = vpop.trf.xlu0
      %v2024 = vpop.trf.xlu0
      %v2025 = vpop.trf.xlu0
      %v2026 = vpop.trf.xlu0
      %v2027 = vpop.trf.xlu0
      %v2028 = vpop.trf.xlu0
      %v2029 = vpop.trf.xlu0
      %v2030 = vpop.trf.xlu0
      %v2031 = vpop.trf.xlu0
      %v2032 = vpop.trf.xlu0
      %2033 = vxpose.xlu0.b32.start [1/16] %v1923, 128
      %2034 = vxpose.xlu0.b32.cont [2/16] %v1928, 128
      %2035 = vxpose.xlu0.b32.cont [3/16] %v1933, 128
      %2036 = vxpose.xlu0.b32.cont [4/16] %v1938, 128
      %2037 = vxpose.xlu0.b32.cont [5/16] %v1943, 128
      %2038 = vxpose.xlu0.b32.cont [6/16] %v1948, 128
      %2039 = vxpose.xlu0.b32.cont [7/16] %v1953, 128
      %2040 = vxpose.xlu0.b32.cont [8/16] %v1958, 128
      %2041 = vxpose.xlu0.b32.cont [9/16] %v1963, 128
      %2042 = vxpose.xlu0.b32.cont [10/16] %v1968, 128
      %2043 = vxpose.xlu0.b32.cont [11/16] %v1973, 128
      %2044 = vxpose.xlu0.b32.cont [12/16] %v1978, 128
      %2045 = vxpose.xlu0.b32.cont [13/16] %v1983, 128
      %2046 = vxpose.xlu0.b32.cont [14/16] %v1988, 128
      %2047 = vxpose.xlu0.b32.cont [15/16] %v1993, 128
      %2048 = vxpose.xlu0.b32.end [16/16] %v1998, 128
      %v2049 = vpop.trf.xlu0
      %v2050 = vpop.trf.xlu0
      %v2051 = vpop.trf.xlu0
      %v2052 = vpop.trf.xlu0
      %v2053 = vpop.trf.xlu0
      %v2054 = vpop.trf.xlu0
      %v2055 = vpop.trf.xlu0
      %v2056 = vpop.trf.xlu0
      %v2057 = vpop.trf.xlu0
      %v2058 = vpop.trf.xlu0
      %v2059 = vpop.trf.xlu0
      %v2060 = vpop.trf.xlu0
      %v2061 = vpop.trf.xlu0
      %v2062 = vpop.trf.xlu0
      %v2063 = vpop.trf.xlu0
      %v2064 = vpop.trf.xlu0
      %v2067 = vcombine.low %v2017, %v2049
      %2069 = vst [vmem:[%s197] sm:$0xff] %v2067
      %p2070 = scmp.lt.s32.totalorder %s15, 1
      %s2071 = scalar_select %p2070, %s15, 1
      %s2072 = smul.addr %s2071, 2
      %s2073 = smul.addr %s2072, 4
      %s2074 = scalar_lea.vmem %s4, %s2073
      // Predicated region
      $region37: #{bottleneck_block_dense.3} parent=35 // pred_check
        %p2075 = pneg %p122
      $region38: #{bottleneck_block_dense.3} parent=35 // pred_check_branch
        %2077 = sbr.rel (%p2075) target = $region40
      $region39: #{bottleneck_block_dense.3} parent=35 // pred_region
        _
      $region40: #{bottleneck_block_dense.3} parent=35 // pred_fallthru
        _
    $region36: #{bottleneck_block_dense.3} parent=5 // pred_fallthru
      _
    %p2078 = scmp.le.s32.totalorder 2, %s10
    // Predicated region
    $region41: #{bottleneck_block_dense.3} parent=5 // pred_check
      %p2079 = pneg %p2078
    $region42: #{bottleneck_block_dense.3} parent=5 // pred_check_branch
      %2081 = sbr.rel (%p2079) target = $region44
    $region43: #{bottleneck_block_dense.3} parent=5 // pred_region
      %s2082 = ssub.s32 %s10, 2
      // Predicated region
      $region45: #{bottleneck_block_dense.3} parent=43 // pred_check
        %p2083 = pneg %p128
      $region46: #{bottleneck_block_dense.3} parent=43 // pred_check_branch
        %2085 = sbr.rel (%p2083) target = $region48
      $region47: #{bottleneck_block_dense.3} parent=43 // pred_region
        %p2086 = scmp.lt.s32.totalorder %s16, 1
        %s2087 = scalar_select %p2086, %s16, 1
        %s2088 = smul.addr %s2087, 2
        %s2089 = smul.addr %s2088, 4
        %s2090 = scalar_lea.vmem %s4, %s2089
      $region48: #{bottleneck_block_dense.3} parent=43 // pred_fallthru
        _
    $region44: #{bottleneck_block_dense.3} parent=5 // pred_fallthru
      _
  $region6: #{bottleneck_block_dense.3} parent=0 // loop_footer
    %s14 = sadd.s32 1, %s10
  $region7: #{bottleneck_block_dense.3} parent=0 // loop_footer_branch
    %9 = sbr.rel target = $region3
  $region8: #{bottleneck_block_dense.3} parent=0 // loop_exit
    _

</llo_original>
